<compile_context>
chip_gen: v7x
topology: tpu7x:2x2x1
jax: 0.10.0
libtpu: 0.0.40
codegen_flags: <defaults>
</compile_context>

<pallas_src>
import functools

import jax
import jax.numpy as jnp
from jax import lax
from jax.experimental import pallas as pl
from jax.experimental.pallas import tpu as pltpu

_SQRT2 = 1.4142135623730951
_BN_EPS = 1e-5
_N_HC = 64   # n_hidden_channels of the module


def _gelu(x):
    # exact GELU (PyTorch nn.GELU default, approximate='none')
    return 0.5 * x * (1.0 + lax.erf(x / _SQRT2))


# ----------------------------------------------------------------------------
# Fused kernel: one grid step == one block of B samples, everything in VMEM.
# ----------------------------------------------------------------------------
def _fused_kernel(B, HoWo, Wo, Hp, Wp, wstride,
                  patches_ref, h_ref,
                  w1_ref, b1_ref, w2_ref, b2_ref, w3_ref, b3_ref,
                  fc1a_ref, fc1b_ref, fb1_ref, fc2_ref, fb2_ref,
                  fc3_ref, fb3_ref,
                  o_ref,
                  y1_ref, vrow_ref, pad1_ref, pad2_ref, pooled_ref):
    f32 = jnp.float32
    bf16 = jnp.bfloat16
    C = b1_ref.shape[-1]
    nrows = Hp * wstride
    inv_hw = 1.0 / float(Hp * Wp)
    wo_aligned = (Wo % 8 == 0)

    # Zero padded scratch once per grid step (borders / junk columns stay zero
    # for every sample of the block; interiors are rewritten per sample).
    pad1_ref[...] = jnp.zeros_like(pad1_ref)
    pad2_ref[...] = jnp.zeros_like(pad2_ref)

    # valid-column mask for the padded-row layout, generated in-kernel.
    row = lax.broadcasted_iota(jnp.int32, (nrows, 1), 0)
    colmask = (row % wstride) < Wp                              # (nrows, 1)

    # ---- conv1 (7x7/s2/p3) for the WHOLE block in one im2col GEMM + ReLU ----
    y1 = jnp.dot(patches_ref[...], w1_ref[...], preferred_element_type=f32)
    y1_ref[...] = jnp.maximum(y1 + b1_ref[...], 0.0)            # (B*Ho*Wo, C)

    def per_sample(b, carry):
        base = b * HoWo

        def y1_row(off):
            start = base + off
            if wo_aligned:
                start = pl.multiple_of(start, 8)
            return y1_ref[pl.ds(start, Wo), :]

        # -- MaxPool2d(7, 2): vertical 7-tap max, then horizontal pool via
        #    stride-2 slices; one (Wp, C) store per output row.
        for oh in range(Hp):
            v = y1_row((2 * oh) * Wo)
            for t in range(1, 7):
                v = jnp.maximum(v, y1_row((2 * oh + t) * Wo))
            vrow_ref[...] = v                                   # (Wo, C)
            hmax = vrow_ref[pl.ds(0, Wp, stride=2), :]
            for t in range(1, 7):
                hmax = jnp.maximum(hmax, vrow_ref[pl.ds(t, Wp, stride=2), :])
            pad1_ref[pl.ds((1 + oh) * wstride + 1, Wp), :] = hmax

        # -- conv2 3x3/s1/p1 (+BN+ReLU): shifted-slab matmul accumulation -----
        acc = jnp.zeros((nrows, C), f32)
        for kh in range(3):
            for kw in range(3):
                slab = pad1_ref[pl.ds(kh * wstride + kw, nrows), :]
                acc = acc + jnp.dot(slab.astype(bf16), w2_ref[kh * 3 + kw],
                                    preferred_element_type=f32)
        y2 = jnp.where(colmask, jnp.maximum(acc + b2_ref[...], 0.0), 0.0)
        pad2_ref[pl.ds(wstride + 1, nrows), :] = y2             # junk cols -> 0

        # -- conv3 3x3/s1/p1 (+BN+ReLU) ----------------------------------------
        acc = jnp.zeros((nrows, C), f32)
        for kh in range(3):
            for kw in range(3):
                slab = pad2_ref[pl.ds(kh * wstride + kw, nrows), :]
                acc = acc + jnp.dot(slab.astype(bf16), w3_ref[kh * 3 + kw],
                                    preferred_element_type=f32)
        y3 = jnp.where(colmask, jnp.maximum(acc + b3_ref[...], 0.0), 0.0)

        # -- AdaptiveAvgPool2d((1,1)) over the Hp*Wp valid positions -----------
        pooled_ref[pl.ds(b, 1), :] = jnp.sum(y3, axis=0, keepdims=True) * inv_hw
        return carry

    lax.fori_loop(0, B, per_sample, 0)

    # ---- batched classifier: Linear -> GELU -> Linear -> GELU -> Linear -----
    z1 = (jnp.dot(pooled_ref[...], fc1a_ref[...], preferred_element_type=f32)
          + jnp.dot(h_ref[...], fc1b_ref[...], preferred_element_type=f32)
          + fb1_ref[...])
    a1 = _gelu(z1)
    z2 = jnp.dot(a1, fc2_ref[...], preferred_element_type=f32) + fb2_ref[...]
    a2 = _gelu(z2)
    o_ref[...] = jnp.dot(a2, fc3_ref[...], preferred_element_type=f32) + fb3_ref[...]


# ----------------------------------------------------------------------------
# Wrapper: minimal XLA glue (NCHW->NHWC, conv1 im2col, weight folding).
# ----------------------------------------------------------------------------
def _im2col_nhwc(x, k, s, p):
    N, H, W, C = x.shape
    xp = jnp.pad(x, ((0, 0), (p, p), (p, p), (0, 0)))
    Ho = (H + 2 * p - k) // s + 1
    Wo = (W + 2 * p - k) // s + 1
    i_idx = (jnp.arange(Ho) * s)[:, None] + jnp.arange(k)          # (Ho, k)
    j_idx = (jnp.arange(Wo) * s)[:, None] + jnp.arange(k)          # (Wo, k)
    t = xp[:, i_idx]                                               # (N, Ho, k, Wp, C)
    t = t[:, :, :, j_idx]                                          # (N, Ho, k, Wo, k, C)
    t = jnp.transpose(t, (0, 1, 3, 2, 4, 5))                       # (N, Ho, Wo, kh, kw, C)
    return t.reshape(N, Ho * Wo, k * k * C), Ho, Wo


def resnet_block_dyn(params, h, x_nchw):
    N, Cin, H, W = x_nchw.shape
    n_hidden = h.shape[-1]
    C = _N_HC
    bf16 = jnp.bfloat16

    x = jnp.transpose(x_nchw, (0, 2, 3, 1))                        # NCHW -> NHWC
    patches, Ho, Wo = _im2col_nhwc(x, k=7, s=2, p=3)
    HoWo = Ho * Wo
    Kp = patches.shape[-1]                                         # 49 * Cin

    Hp = (Ho - 7) // 2 + 1                                         # MaxPool2d(7, 2)
    Wp = (Wo - 7) // 2 + 1
    assert Hp >= 1 and Wp >= 1, "input too small for conv1 + maxpool(7,2)"
    wstride = ((Wp + 2 + 7) // 8) * 8        # padded row stride (multiple of 8)
    pad_rows = (Hp + 3) * wstride            # (Hp+2) padded rows + guard rows

    # ---- batch blocking: B samples per grid step -----------------------------
    B = N if N < 8 else 8
    Npad = ((N + B - 1) // B) * B
    patches_flat = patches.reshape(N * HoWo, Kp).astype(bf16)
    h2 = h.astype(jnp.float32)
    if Npad != N:
        patches_flat = jnp.pad(patches_flat, ((0, (Npad - N) * HoWo), (0, 0)))
        h2 = jnp.pad(h2, ((0, Npad - N), (0, 0)))

    # fold eval-mode BN scale into conv weights; bias stays a cheap epilogue add
    w1 = (jnp.transpose(params["conv1_w"], (2, 3, 1, 0)).reshape(Kp, C)
          * params["bn1_scale"][None, :]).astype(bf16)
    w2 = (jnp.transpose(params["conv2_w"], (2, 3, 1, 0))
          * params["bn2_scale"]).reshape(9, C, C).astype(bf16)
    w3 = (jnp.transpose(params["conv3_w"], (2, 3, 1, 0))
          * params["bn3_scale"]).reshape(9, C, C).astype(bf16)
    b1 = params["bn1_bias"].reshape(1, C)
    b2 = params["bn2_bias"].reshape(1, C)
    b3 = params["bn3_bias"].reshape(1, C)

    weights = (w1, b1, w2, b2, w3, b3,
               params["fc1_wa"], params["fc1_wb"], params["fc1_b"],
               params["fc2_w"], params["fc2_b"],
               params["fc3_w"], params["fc3_b"])

    def _full_spec(a):
        nd = a.ndim
        return pl.BlockSpec(a.shape, lambda i, _nd=nd: (0,) * _nd)

    in_specs = ([pl.BlockSpec((B * HoWo, Kp), lambda i: (i, 0)),
                 pl.BlockSpec((B, n_hidden), lambda i: (i, 0))]
                + [_full_spec(a) for a in weights])

    # cost / VMEM accounting
    weights_bytes = sum(int(a.size) * a.dtype.itemsize for a in weights)
    flops = 2 * Npad * (HoWo * Kp * C + 2 * 9 * Hp * Wp * C * C
                        + (C + n_hidden) * 128 + 128 * 128 + 128 * n_hidden)
    bytes_accessed = int(patches_flat.size * patches_flat.dtype.itemsize
                         + h2.size * 4 + weights_bytes + Npad * n_hidden * 4)
    scratch_bytes = 4 * (B * HoWo * C + Wo * C + 2 * pad_rows * C + B * C)
    step_bytes = (2 * (B * HoWo * Kp * 2 + B * n_hidden * 4 + B * n_hidden * 4)
                  + 2 * weights_bytes + scratch_bytes)
    vmem_limit = int(min(60 * 2 ** 20, max(4 * 2 ** 20, 2 * step_bytes)))

    kernel = functools.partial(_fused_kernel, B, HoWo, Wo, Hp, Wp, wstride)
    out = pl.pallas_call(
        kernel,
        grid=(Npad // B,),
        in_specs=in_specs,
        out_specs=pl.BlockSpec((B, n_hidden), lambda i: (i, 0)),
        out_shape=jax.ShapeDtypeStruct((Npad, n_hidden), jnp.float32),
        scratch_shapes=[pltpu.VMEM((B * HoWo, C), jnp.float32),    # conv1 output
                        pltpu.VMEM((Wo, C), jnp.float32),          # vertical-max row
                        pltpu.VMEM((pad_rows, C), jnp.float32),    # padded maxpool out
                        pltpu.VMEM((pad_rows, C), jnp.float32),    # padded conv2 out
                        pltpu.VMEM((B, C), jnp.float32)],          # pooled features
        compiler_params=pltpu.CompilerParams(
            dimension_semantics=("parallel",),        # shard blocks over TCs on v7x
            vmem_limit_bytes=vmem_limit),
        cost_estimate=pl.CostEstimate(flops=int(flops),
                                      transcendentals=int(2 * Npad * 128),
                                      bytes_accessed=bytes_accessed),
    )(patches_flat, h2, *weights)
    return out[:N]


# ----------------------------------------------------------------------------
# Deterministic parameter initialization (matches the module's __init__ shapes)
# ----------------------------------------------------------------------------
def init_params(key, n_in_channels=1, n_hidden=10):
    n_hc = _N_HC
    k_c1, k_c2, k_c3, k_f1, k_f2, k_f3 = jax.random.split(key, 6)

    def kaiming_conv(k, shape):                    # kaiming_normal_, relu, fan_in
        fan_in = shape[1] * shape[2] * shape[3]
        std = (2.0 / fan_in) ** 0.5
        return jax.random.normal(k, shape, jnp.float32) * std

    def xavier_linear(k, fan_in, fan_out):         # xavier_normal_, gain=sqrt(2)
        std = (2.0 ** 0.5) * (2.0 / (fan_in + fan_out)) ** 0.5
        return jax.random.normal(k, (fan_in, fan_out), jnp.float32) * std

    bn_scale = jnp.full((n_hc,), 1.0 / (1.0 + _BN_EPS) ** 0.5, jnp.float32)
    bn_bias = jnp.zeros((n_hc,), jnp.float32)

    fc1_w = xavier_linear(k_f1, n_hc + n_hidden, 128)
    params = {
        "conv1_w": kaiming_conv(k_c1, (n_hc, n_in_channels, 7, 7)),
        "conv2_w": kaiming_conv(k_c2, (n_hc, n_hc, 3, 3)),
        "conv3_w": kaiming_conv(k_c3, (n_hc, n_hc, 3, 3)),
        "bn1_scale": bn_scale, "bn1_bias": bn_bias,
        "bn2_scale": bn_scale, "bn2_bias": bn_bias,
        "bn3_scale": bn_scale, "bn3_bias": bn_bias,
        "fc1_wa": fc1_w[:n_hc],                    # acts on pooled conv features
        "fc1_wb": fc1_w[n_hc:],                    # acts on h
        "fc1_b": jnp.zeros((1, 128), jnp.float32),
        "fc2_w": xavier_linear(k_f2, 128, 128),
        "fc2_b": jnp.zeros((1, 128), jnp.float32),
        "fc3_w": xavier_linear(k_f3, 128, n_hidden),
        "fc3_b": jnp.zeros((1, n_hidden), jnp.float32),
    }
    return params


if __name__ == "__main__":
    key = jax.random.PRNGKey(0)
    kp, kx, kh = jax.random.split(key, 3)
    n_in_channels, n_hidden = 1, 10
    params = init_params(kp, n_in_channels, n_hidden)

    # x: NCHW like PyTorch; 32x32 so conv1(s=2) -> 16x16, maxpool(7,2) -> 5x5
    x = jax.random.normal(kx, (2, n_in_channels, 32, 32), jnp.float32)
    h = jax.random.normal(kh, (2, n_hidden), jnp.float32)

    fwd = jax.jit(resnet_block_dyn)
    out = jax.block_until_ready(fwd(params, h, x))
    assert out.shape == (2, n_hidden)
    assert bool(jnp.all(jnp.isfinite(out)))
    print("KERNEL_OK")
</pallas_src>

<mosaic_0001>
module attributes {stable_mosaic.version = 11 : i64} {
  func.func @_fused_kernel(%arg0: i32, %arg1: memref<512x49xbf16, #tpu.memory_space<vmem>>, %arg2: memref<2x10xf32, #tpu.memory_space<vmem>>, %arg3: memref<49x64xbf16, #tpu.memory_space<vmem>>, %arg4: memref<1x64xf32, #tpu.memory_space<vmem>>, %arg5: memref<9x64x64xbf16, #tpu.memory_space<vmem>>, %arg6: memref<1x64xf32, #tpu.memory_space<vmem>>, %arg7: memref<9x64x64xbf16, #tpu.memory_space<vmem>>, %arg8: memref<1x64xf32, #tpu.memory_space<vmem>>, %arg9: memref<64x128xf32, #tpu.memory_space<vmem>>, %arg10: memref<10x128xf32, #tpu.memory_space<vmem>>, %arg11: memref<1x128xf32, #tpu.memory_space<vmem>>, %arg12: memref<128x128xf32, #tpu.memory_space<vmem>>, %arg13: memref<1x128xf32, #tpu.memory_space<vmem>>, %arg14: memref<128x10xf32, #tpu.memory_space<vmem>>, %arg15: memref<1x10xf32, #tpu.memory_space<vmem>>, %arg16: memref<2x10xf32, #tpu.memory_space<vmem>>, %arg17: memref<512x64xf32, #tpu.memory_space<vmem>>, %arg18: memref<16x64xf32, #tpu.memory_space<vmem>>, %arg19: memref<64x64xf32, #tpu.memory_space<vmem>>, %arg20: memref<64x64xf32, #tpu.memory_space<vmem>>, %arg21: memref<2x64xf32, #tpu.memory_space<vmem>>) attributes {dimension_semantics = [#tpu.dimension_semantics<parallel>], iteration_bounds = array<i64: 1>, scalar_prefetch = 0 : i64, scratch_operands = 5 : i64, tpu.core_type = #tpu.core_type<tc>, window_params = [{transform_indices = @transform_0, window_bounds = array<i64: 512, 49>}, {transform_indices = @transform_1, window_bounds = array<i64: 2, 10>}, {pipeline_mode = #tpu.pipeline_mode<synchronous>, transform_indices = @transform_2, window_bounds = array<i64: 49, 64>}, {pipeline_mode = #tpu.pipeline_mode<synchronous>, transform_indices = @transform_3, window_bounds = array<i64: 1, 64>}, {pipeline_mode = #tpu.pipeline_mode<synchronous>, transform_indices = @transform_4, window_bounds = array<i64: 9, 64, 64>}, {pipeline_mode = #tpu.pipeline_mode<synchronous>, transform_indices = @transform_5, window_bounds = array<i64: 1, 64>}, {pipeline_mode = #tpu.pipeline_mode<synchronous>, transform_indices = @transform_6, window_bounds = array<i64: 9, 64, 64>}, {pipeline_mode = #tpu.pipeline_mode<synchronous>, transform_indices = @transform_7, window_bounds = array<i64: 1, 64>}, {pipeline_mode = #tpu.pipeline_mode<synchronous>, transform_indices = @transform_8, window_bounds = array<i64: 64, 128>}, {pipeline_mode = #tpu.pipeline_mode<synchronous>, transform_indices = @transform_9, window_bounds = array<i64: 10, 128>}, {pipeline_mode = #tpu.pipeline_mode<synchronous>, transform_indices = @transform_10, window_bounds = array<i64: 1, 128>}, {pipeline_mode = #tpu.pipeline_mode<synchronous>, transform_indices = @transform_11, window_bounds = array<i64: 128, 128>}, {pipeline_mode = #tpu.pipeline_mode<synchronous>, transform_indices = @transform_12, window_bounds = array<i64: 1, 128>}, {pipeline_mode = #tpu.pipeline_mode<synchronous>, transform_indices = @transform_13, window_bounds = array<i64: 128, 10>}, {pipeline_mode = #tpu.pipeline_mode<synchronous>, transform_indices = @transform_14, window_bounds = array<i64: 1, 10>}, {transform_indices = @transform_15, window_bounds = array<i64: 2, 10>}]} {
    %cst = arith.constant 0.000000e+00 : f32
    %0 = vector.broadcast %cst : f32 to vector<64x64xf32>
    %c0 = arith.constant 0 : index
    %c0_0 = arith.constant 0 : index
    %1 = vector.load %arg19[%c0, %c0_0] : memref<64x64xf32, #tpu.memory_space<vmem>>, vector<64x64xf32>
    tpu.vector_store %arg19[%c0, %c0_0], %0 {strides = array<i32>} : memref<64x64xf32, #tpu.memory_space<vmem>>, vector<64x64xf32>,
    %cst_1 = arith.constant 0.000000e+00 : f32
    %2 = vector.broadcast %cst_1 : f32 to vector<64x64xf32>
    %c0_2 = arith.constant 0 : index
    %c0_3 = arith.constant 0 : index
    %3 = vector.load %arg20[%c0_2, %c0_3] : memref<64x64xf32, #tpu.memory_space<vmem>>, vector<64x64xf32>
    tpu.vector_store %arg20[%c0_2, %c0_3], %2 {strides = array<i32>} : memref<64x64xf32, #tpu.memory_space<vmem>>, vector<64x64xf32>,
    %4 = tpu.iota {dimensions = array<i32: 0>} : vector<40x1xi32>
    %c8_i32 = arith.constant 8 : i32
    %c0_i32 = arith.constant 0 : i32
    %5 = arith.cmpi eq, %c8_i32, %c0_i32 : i32
    %c1_i32 = arith.constant 1 : i32
    %6 = arith.select %5, %c1_i32, %c8_i32 : i32
    %7 = vector.broadcast %6 : i32 to vector<40x1xi32>
    %8 = arith.remsi %4, %7 : vector<40x1xi32>
    %c0_i32_4 = arith.constant 0 : i32
    %9 = vector.broadcast %c0_i32_4 : i32 to vector<40x1xi32>
    %10 = arith.cmpi ne, %8, %9 : vector<40x1xi32>
    %c0_i32_5 = arith.constant 0 : i32
    %11 = vector.broadcast %c0_i32_5 : i32 to vector<40x1xi32>
    %12 = arith.cmpi slt, %8, %11 : vector<40x1xi32>
    %c0_i32_6 = arith.constant 0 : i32
    %13 = arith.cmpi slt, %6, %c0_i32_6 : i32
    %14 = vector.broadcast %13 : i1 to vector<40x1xi1>
    %15 = vector.broadcast %14 : vector<40x1xi1> to vector<40x1xi1>
    %16 = arith.xori %12, %15 : vector<40x1xi1>
    %17 = arith.andi %16, %10 : vector<40x1xi1>
    %18 = vector.broadcast %6 : i32 to vector<40x1xi32>
    %19 = arith.addi %8, %18 : vector<40x1xi32>
    %20 = arith.select %17, %19, %8 : vector<40x1xi1>, vector<40x1xi32>
    %c5_i32 = arith.constant 5 : i32
    %21 = vector.broadcast %c5_i32 : i32 to vector<40x1xi32>
    %22 = arith.cmpi slt, %20, %21 : vector<40x1xi32>
    %c0_7 = arith.constant 0 : index
    %c0_8 = arith.constant 0 : index
    %23 = vector.load %arg1[%c0_7, %c0_8] : memref<512x49xbf16, #tpu.memory_space<vmem>>, vector<512x49xbf16>
    %c0_9 = arith.constant 0 : index
    %c0_10 = arith.constant 0 : index
    %24 = vector.load %arg3[%c0_9, %c0_10] : memref<49x64xbf16, #tpu.memory_space<vmem>>, vector<49x64xbf16>
    %cst_11 = arith.constant dense<0.000000e+00> : vector<512x64xf32>
    %25 = tpu.matmul %23, %24, %cst_11 {dimension_numbers = #tpu.dot_dimension_numbers<[1], [0], [0], [1], [0, 0, 1, 1], [], []>} : vector<512x49xbf16>, vector<49x64xbf16>, vector<512x64xf32> -> vector<512x64xf32>
    %c0_12 = arith.constant 0 : index
    %c0_13 = arith.constant 0 : index
    %26 = vector.load %arg4[%c0_12, %c0_13] : memref<1x64xf32, #tpu.memory_space<vmem>>, vector<1x64xf32>
    %27 = vector.broadcast %26 : vector<1x64xf32> to vector<512x64xf32>
    %28 = arith.addf %25, %27 : vector<512x64xf32>
    %cst_14 = arith.constant 0.000000e+00 : f32
    %29 = vector.broadcast %cst_14 : f32 to vector<512x64xf32>
    %30 = arith.maximumf %28, %29 : vector<512x64xf32>
    %c0_15 = arith.constant 0 : index
    %c0_16 = arith.constant 0 : index
    %31 = vector.load %arg17[%c0_15, %c0_16] : memref<512x64xf32, #tpu.memory_space<vmem>>, vector<512x64xf32>
    tpu.vector_store %arg17[%c0_15, %c0_16], %30 {strides = array<i32>} : memref<512x64xf32, #tpu.memory_space<vmem>>, vector<512x64xf32>,
    %c0_i32_17 = arith.constant 0 : i32
    %c2_i32 = arith.constant 2 : i32
    %32 = arith.addi %c0_i32_17, %c2_i32 : i32
    %c1_i32_18 = arith.constant 1 : i32
    scf.for %arg22 = %c0_i32_17 to %32 step %c1_i32_18  : i32 {
      %c256_i32 = arith.constant 256 : i32
      %70 = arith.muli %arg22, %c256_i32 : i32
      %c0_i32_50 = arith.constant 0 : i32
      %71 = arith.addi %70, %c0_i32_50 : i32
      %72 = tpu.assume_multiple %71, 8 : i32
      %73 = arith.index_cast %72 : i32 to index
      %c0_51 = arith.constant 0 : index
      %74 = vector.load %arg17[%73, %c0_51] : memref<512x64xf32, #tpu.memory_space<vmem>>, vector<16x64xf32>
      %c16_i32 = arith.constant 16 : i32
      %75 = arith.addi %70, %c16_i32 : i32
      %76 = tpu.assume_multiple %75, 8 : i32
      %77 = arith.index_cast %76 : i32 to index
      %c0_52 = arith.constant 0 : index
      %78 = vector.load %arg17[%77, %c0_52] : memref<512x64xf32, #tpu.memory_space<vmem>>, vector<16x64xf32>
      %79 = arith.maximumf %74, %78 : vector<16x64xf32>
      %c32_i32 = arith.constant 32 : i32
      %80 = arith.addi %70, %c32_i32 : i32
      %81 = tpu.assume_multiple %80, 8 : i32
      %82 = arith.index_cast %81 : i32 to index
      %c0_53 = arith.constant 0 : index
      %83 = vector.load %arg17[%82, %c0_53] : memref<512x64xf32, #tpu.memory_space<vmem>>, vector<16x64xf32>
      %84 = arith.maximumf %79, %83 : vector<16x64xf32>
      %c48_i32 = arith.constant 48 : i32
      %85 = arith.addi %70, %c48_i32 : i32
      %86 = tpu.assume_multiple %85, 8 : i32
      %87 = arith.index_cast %86 : i32 to index
      %c0_54 = arith.constant 0 : index
      %88 = vector.load %arg17[%87, %c0_54] : memref<512x64xf32, #tpu.memory_space<vmem>>, vector<16x64xf32>
      %89 = arith.maximumf %84, %88 : vector<16x64xf32>
      %c64_i32 = arith.constant 64 : i32
      %90 = arith.addi %70, %c64_i32 : i32
      %91 = tpu.assume_multiple %90, 8 : i32
      %92 = arith.index_cast %91 : i32 to index
      %c0_55 = arith.constant 0 : index
      %93 = vector.load %arg17[%92, %c0_55] : memref<512x64xf32, #tpu.memory_space<vmem>>, vector<16x64xf32>
      %94 = arith.maximumf %89, %93 : vector<16x64xf32>
      %c80_i32 = arith.constant 80 : i32
      %95 = arith.addi %70, %c80_i32 : i32
      %96 = tpu.assume_multiple %95, 8 : i32
      %97 = arith.index_cast %96 : i32 to index
      %c0_56 = arith.constant 0 : index
      %98 = vector.load %arg17[%97, %c0_56] : memref<512x64xf32, #tpu.memory_space<vmem>>, vector<16x64xf32>
      %99 = arith.maximumf %94, %98 : vector<16x64xf32>
      %c96_i32 = arith.constant 96 : i32
      %100 = arith.addi %70, %c96_i32 : i32
      %101 = tpu.assume_multiple %100, 8 : i32
      %102 = arith.index_cast %101 : i32 to index
      %c0_57 = arith.constant 0 : index
      %103 = vector.load %arg17[%102, %c0_57] : memref<512x64xf32, #tpu.memory_space<vmem>>, vector<16x64xf32>
      %104 = arith.maximumf %99, %103 : vector<16x64xf32>
      %c0_58 = arith.constant 0 : index
      %c0_59 = arith.constant 0 : index
      %105 = vector.load %arg18[%c0_58, %c0_59] : memref<16x64xf32, #tpu.memory_space<vmem>>, vector<16x64xf32>
      tpu.vector_store %arg18[%c0_58, %c0_59], %104 {strides = array<i32>} : memref<16x64xf32, #tpu.memory_space<vmem>>, vector<16x64xf32>,
      %c0_60 = arith.constant 0 : index
      %c0_61 = arith.constant 0 : index
      %106 = tpu.strided_load %arg18[%c0_60, %c0_61] {strides = array<i32: 2, 1>} : memref<16x64xf32, #tpu.memory_space<vmem>>, vector<5x64xf32>
      %c1 = arith.constant 1 : index
      %c0_62 = arith.constant 0 : index
      %107 = tpu.strided_load %arg18[%c1, %c0_62] {strides = array<i32: 2, 1>} : memref<16x64xf32, #tpu.memory_space<vmem>>, vector<5x64xf32>
      %108 = arith.maximumf %106, %107 : vector<5x64xf32>
      %c2 = arith.constant 2 : index
      %c0_63 = arith.constant 0 : index
      %109 = tpu.strided_load %arg18[%c2, %c0_63] {strides = array<i32: 2, 1>} : memref<16x64xf32, #tpu.memory_space<vmem>>, vector<5x64xf32>
      %110 = arith.maximumf %108, %109 : vector<5x64xf32>
      %c3 = arith.constant 3 : index
      %c0_64 = arith.constant 0 : index
      %111 = tpu.strided_load %arg18[%c3, %c0_64] {strides = array<i32: 2, 1>} : memref<16x64xf32, #tpu.memory_space<vmem>>, vector<5x64xf32>
      %112 = arith.maximumf %110, %111 : vector<5x64xf32>
      %c4 = arith.constant 4 : index
      %c0_65 = arith.constant 0 : index
      %113 = tpu.strided_load %arg18[%c4, %c0_65] {strides = array<i32: 2, 1>} : memref<16x64xf32, #tpu.memory_space<vmem>>, vector<5x64xf32>
      %114 = arith.maximumf %112, %113 : vector<5x64xf32>
      %c5 = arith.constant 5 : index
      %c0_66 = arith.constant 0 : index
      %115 = tpu.strided_load %arg18[%c5, %c0_66] {strides = array<i32: 2, 1>} : memref<16x64xf32, #tpu.memory_space<vmem>>, vector<5x64xf32>
      %116 = arith.maximumf %114, %115 : vector<5x64xf32>
      %c6 = arith.constant 6 : index
      %c0_67 = arith.constant 0 : index
      %117 = tpu.strided_load %arg18[%c6, %c0_67] {strides = array<i32: 2, 1>} : memref<16x64xf32, #tpu.memory_space<vmem>>, vector<5x64xf32>
      %118 = arith.maximumf %116, %117 : vector<5x64xf32>
      %c9 = arith.constant 9 : index
      %c0_68 = arith.constant 0 : index
      %119 = vector.load %arg19[%c9, %c0_68] : memref<64x64xf32, #tpu.memory_space<vmem>>, vector<5x64xf32>
      tpu.vector_store %arg19[%c9, %c0_68], %118 {strides = array<i32>} : memref<64x64xf32, #tpu.memory_space<vmem>>, vector<5x64xf32>,
      %c32_i32_69 = arith.constant 32 : i32
      %120 = arith.addi %70, %c32_i32_69 : i32
      %121 = tpu.assume_multiple %120, 8 : i32
      %122 = arith.index_cast %121 : i32 to index
      %c0_70 = arith.constant 0 : index
      %123 = vector.load %arg17[%122, %c0_70] : memref<512x64xf32, #tpu.memory_space<vmem>>, vector<16x64xf32>
      %c48_i32_71 = arith.constant 48 : i32
      %124 = arith.addi %70, %c48_i32_71 : i32
      %125 = tpu.assume_multiple %124, 8 : i32
      %126 = arith.index_cast %125 : i32 to index
      %c0_72 = arith.constant 0 : index
      %127 = vector.load %arg17[%126, %c0_72] : memref<512x64xf32, #tpu.memory_space<vmem>>, vector<16x64xf32>
      %128 = arith.maximumf %123, %127 : vector<16x64xf32>
      %c64_i32_73 = arith.constant 64 : i32
      %129 = arith.addi %70, %c64_i32_73 : i32
      %130 = tpu.assume_multiple %129, 8 : i32
      %131 = arith.index_cast %130 : i32 to index
      %c0_74 = arith.constant 0 : index
      %132 = vector.load %arg17[%131, %c0_74] : memref<512x64xf32, #tpu.memory_space<vmem>>, vector<16x64xf32>
      %133 = arith.maximumf %128, %132 : vector<16x64xf32>
      %c80_i32_75 = arith.constant 80 : i32
      %134 = arith.addi %70, %c80_i32_75 : i32
      %135 = tpu.assume_multiple %134, 8 : i32
      %136 = arith.index_cast %135 : i32 to index
      %c0_76 = arith.constant 0 : index
      %137 = vector.load %arg17[%136, %c0_76] : memref<512x64xf32, #tpu.memory_space<vmem>>, vector<16x64xf32>
      %138 = arith.maximumf %133, %137 : vector<16x64xf32>
      %c96_i32_77 = arith.constant 96 : i32
      %139 = arith.addi %70, %c96_i32_77 : i32
      %140 = tpu.assume_multiple %139, 8 : i32
      %141 = arith.index_cast %140 : i32 to index
      %c0_78 = arith.constant 0 : index
      %142 = vector.load %arg17[%141, %c0_78] : memref<512x64xf32, #tpu.memory_space<vmem>>, vector<16x64xf32>
      %143 = arith.maximumf %138, %142 : vector<16x64xf32>
      %c112_i32 = arith.constant 112 : i32
      %144 = arith.addi %70, %c112_i32 : i32
      %145 = tpu.assume_multiple %144, 8 : i32
      %146 = arith.index_cast %145 : i32 to index
      %c0_79 = arith.constant 0 : index
      %147 = vector.load %arg17[%146, %c0_79] : memref<512x64xf32, #tpu.memory_space<vmem>>, vector<16x64xf32>
      %148 = arith.maximumf %143, %147 : vector<16x64xf32>
      %c128_i32 = arith.constant 128 : i32
      %149 = arith.addi %70, %c128_i32 : i32
      %150 = tpu.assume_multiple %149, 8 : i32
      %151 = arith.index_cast %150 : i32 to index
      %c0_80 = arith.constant 0 : index
      %152 = vector.load %arg17[%151, %c0_80] : memref<512x64xf32, #tpu.memory_space<vmem>>, vector<16x64xf32>
      %153 = arith.maximumf %148, %152 : vector<16x64xf32>
      %c0_81 = arith.constant 0 : index
      %c0_82 = arith.constant 0 : index
      %154 = vector.load %arg18[%c0_81, %c0_82] : memref<16x64xf32, #tpu.memory_space<vmem>>, vector<16x64xf32>
      tpu.vector_store %arg18[%c0_81, %c0_82], %153 {strides = array<i32>} : memref<16x64xf32, #tpu.memory_space<vmem>>, vector<16x64xf32>,
      %c0_83 = arith.constant 0 : index
      %c0_84 = arith.constant 0 : index
      %155 = tpu.strided_load %arg18[%c0_83, %c0_84] {strides = array<i32: 2, 1>} : memref<16x64xf32, #tpu.memory_space<vmem>>, vector<5x64xf32>
      %c1_85 = arith.constant 1 : index
      %c0_86 = arith.constant 0 : index
      %156 = tpu.strided_load %arg18[%c1_85, %c0_86] {strides = array<i32: 2, 1>} : memref<16x64xf32, #tpu.memory_space<vmem>>, vector<5x64xf32>
      %157 = arith.maximumf %155, %156 : vector<5x64xf32>
      %c2_87 = arith.constant 2 : index
      %c0_88 = arith.constant 0 : index
      %158 = tpu.strided_load %arg18[%c2_87, %c0_88] {strides = array<i32: 2, 1>} : memref<16x64xf32, #tpu.memory_space<vmem>>, vector<5x64xf32>
      %159 = arith.maximumf %157, %158 : vector<5x64xf32>
      %c3_89 = arith.constant 3 : index
      %c0_90 = arith.constant 0 : index
      %160 = tpu.strided_load %arg18[%c3_89, %c0_90] {strides = array<i32: 2, 1>} : memref<16x64xf32, #tpu.memory_space<vmem>>, vector<5x64xf32>
      %161 = arith.maximumf %159, %160 : vector<5x64xf32>
      %c4_91 = arith.constant 4 : index
      %c0_92 = arith.constant 0 : index
      %162 = tpu.strided_load %arg18[%c4_91, %c0_92] {strides = array<i32: 2, 1>} : memref<16x64xf32, #tpu.memory_space<vmem>>, vector<5x64xf32>
      %163 = arith.maximumf %161, %162 : vector<5x64xf32>
      %c5_93 = arith.constant 5 : index
      %c0_94 = arith.constant 0 : index
      %164 = tpu.strided_load %arg18[%c5_93, %c0_94] {strides = array<i32: 2, 1>} : memref<16x64xf32, #tpu.memory_space<vmem>>, vector<5x64xf32>
      %165 = arith.maximumf %163, %164 : vector<5x64xf32>
      %c6_95 = arith.constant 6 : index
      %c0_96 = arith.constant 0 : index
      %166 = tpu.strided_load %arg18[%c6_95, %c0_96] {strides = array<i32: 2, 1>} : memref<16x64xf32, #tpu.memory_space<vmem>>, vector<5x64xf32>
      %167 = arith.maximumf %165, %166 : vector<5x64xf32>
      %c17 = arith.constant 17 : index
      %c0_97 = arith.constant 0 : index
      %168 = vector.load %arg19[%c17, %c0_97] : memref<64x64xf32, #tpu.memory_space<vmem>>, vector<5x64xf32>
      tpu.vector_store %arg19[%c17, %c0_97], %167 {strides = array<i32>} : memref<64x64xf32, #tpu.memory_space<vmem>>, vector<5x64xf32>,
      %c64_i32_98 = arith.constant 64 : i32
      %169 = arith.addi %70, %c64_i32_98 : i32
      %170 = tpu.assume_multiple %169, 8 : i32
      %171 = arith.index_cast %170 : i32 to index
      %c0_99 = arith.constant 0 : index
      %172 = vector.load %arg17[%171, %c0_99] : memref<512x64xf32, #tpu.memory_space<vmem>>, vector<16x64xf32>
      %c80_i32_100 = arith.constant 80 : i32
      %173 = arith.addi %70, %c80_i32_100 : i32
      %174 = tpu.assume_multiple %173, 8 : i32
      %175 = arith.index_cast %174 : i32 to index
      %c0_101 = arith.constant 0 : index
      %176 = vector.load %arg17[%175, %c0_101] : memref<512x64xf32, #tpu.memory_space<vmem>>, vector<16x64xf32>
      %177 = arith.maximumf %172, %176 : vector<16x64xf32>
      %c96_i32_102 = arith.constant 96 : i32
      %178 = arith.addi %70, %c96_i32_102 : i32
      %179 = tpu.assume_multiple %178, 8 : i32
      %180 = arith.index_cast %179 : i32 to index
      %c0_103 = arith.constant 0 : index
      %181 = vector.load %arg17[%180, %c0_103] : memref<512x64xf32, #tpu.memory_space<vmem>>, vector<16x64xf32>
      %182 = arith.maximumf %177, %181 : vector<16x64xf32>
      %c112_i32_104 = arith.constant 112 : i32
      %183 = arith.addi %70, %c112_i32_104 : i32
      %184 = tpu.assume_multiple %183, 8 : i32
      %185 = arith.index_cast %184 : i32 to index
      %c0_105 = arith.constant 0 : index
      %186 = vector.load %arg17[%185, %c0_105] : memref<512x64xf32, #tpu.memory_space<vmem>>, vector<16x64xf32>
      %187 = arith.maximumf %182, %186 : vector<16x64xf32>
      %c128_i32_106 = arith.constant 128 : i32
      %188 = arith.addi %70, %c128_i32_106 : i32
      %189 = tpu.assume_multiple %188, 8 : i32
      %190 = arith.index_cast %189 : i32 to index
      %c0_107 = arith.constant 0 : index
      %191 = vector.load %arg17[%190, %c0_107] : memref<512x64xf32, #tpu.memory_space<vmem>>, vector<16x64xf32>
      %192 = arith.maximumf %187, %191 : vector<16x64xf32>
      %c144_i32 = arith.constant 144 : i32
      %193 = arith.addi %70, %c144_i32 : i32
      %194 = tpu.assume_multiple %193, 8 : i32
      %195 = arith.index_cast %194 : i32 to index
      %c0_108 = arith.constant 0 : index
      %196 = vector.load %arg17[%195, %c0_108] : memref<512x64xf32, #tpu.memory_space<vmem>>, vector<16x64xf32>
      %197 = arith.maximumf %192, %196 : vector<16x64xf32>
      %c160_i32 = arith.constant 160 : i32
      %198 = arith.addi %70, %c160_i32 : i32
      %199 = tpu.assume_multiple %198, 8 : i32
      %200 = arith.index_cast %199 : i32 to index
      %c0_109 = arith.constant 0 : index
      %201 = vector.load %arg17[%200, %c0_109] : memref<512x64xf32, #tpu.memory_space<vmem>>, vector<16x64xf32>
      %202 = arith.maximumf %197, %201 : vector<16x64xf32>
      %c0_110 = arith.constant 0 : index
      %c0_111 = arith.constant 0 : index
      %203 = vector.load %arg18[%c0_110, %c0_111] : memref<16x64xf32, #tpu.memory_space<vmem>>, vector<16x64xf32>
      tpu.vector_store %arg18[%c0_110, %c0_111], %202 {strides = array<i32>} : memref<16x64xf32, #tpu.memory_space<vmem>>, vector<16x64xf32>,
      %c0_112 = arith.constant 0 : index
      %c0_113 = arith.constant 0 : index
      %204 = tpu.strided_load %arg18[%c0_112, %c0_113] {strides = array<i32: 2, 1>} : memref<16x64xf32, #tpu.memory_space<vmem>>, vector<5x64xf32>
      %c1_114 = arith.constant 1 : index
      %c0_115 = arith.constant 0 : index
      %205 = tpu.strided_load %arg18[%c1_114, %c0_115] {strides = array<i32: 2, 1>} : memref<16x64xf32, #tpu.memory_space<vmem>>, vector<5x64xf32>
      %206 = arith.maximumf %204, %205 : vector<5x64xf32>
      %c2_116 = arith.constant 2 : index
      %c0_117 = arith.constant 0 : index
      %207 = tpu.strided_load %arg18[%c2_116, %c0_117] {strides = array<i32: 2, 1>} : memref<16x64xf32, #tpu.memory_space<vmem>>, vector<5x64xf32>
      %208 = arith.maximumf %206, %207 : vector<5x64xf32>
      %c3_118 = arith.constant 3 : index
      %c0_119 = arith.constant 0 : index
      %209 = tpu.strided_load %arg18[%c3_118, %c0_119] {strides = array<i32: 2, 1>} : memref<16x64xf32, #tpu.memory_space<vmem>>, vector<5x64xf32>
      %210 = arith.maximumf %208, %209 : vector<5x64xf32>
      %c4_120 = arith.constant 4 : index
      %c0_121 = arith.constant 0 : index
      %211 = tpu.strided_load %arg18[%c4_120, %c0_121] {strides = array<i32: 2, 1>} : memref<16x64xf32, #tpu.memory_space<vmem>>, vector<5x64xf32>
      %212 = arith.maximumf %210, %211 : vector<5x64xf32>
      %c5_122 = arith.constant 5 : index
      %c0_123 = arith.constant 0 : index
      %213 = tpu.strided_load %arg18[%c5_122, %c0_123] {strides = array<i32: 2, 1>} : memref<16x64xf32, #tpu.memory_space<vmem>>, vector<5x64xf32>
      %214 = arith.maximumf %212, %213 : vector<5x64xf32>
      %c6_124 = arith.constant 6 : index
      %c0_125 = arith.constant 0 : index
      %215 = tpu.strided_load %arg18[%c6_124, %c0_125] {strides = array<i32: 2, 1>} : memref<16x64xf32, #tpu.memory_space<vmem>>, vector<5x64xf32>
      %216 = arith.maximumf %214, %215 : vector<5x64xf32>
      %c25 = arith.constant 25 : index
      %c0_126 = arith.constant 0 : index
      %217 = vector.load %arg19[%c25, %c0_126] : memref<64x64xf32, #tpu.memory_space<vmem>>, vector<5x64xf32>
      tpu.vector_store %arg19[%c25, %c0_126], %216 {strides = array<i32>} : memref<64x64xf32, #tpu.memory_space<vmem>>, vector<5x64xf32>,
      %c96_i32_127 = arith.constant 96 : i32
      %218 = arith.addi %70, %c96_i32_127 : i32
      %219 = tpu.assume_multiple %218, 8 : i32
      %220 = arith.index_cast %219 : i32 to index
      %c0_128 = arith.constant 0 : index
      %221 = vector.load %arg17[%220, %c0_128] : memref<512x64xf32, #tpu.memory_space<vmem>>, vector<16x64xf32>
      %c112_i32_129 = arith.constant 112 : i32
      %222 = arith.addi %70, %c112_i32_129 : i32
      %223 = tpu.assume_multiple %222, 8 : i32
      %224 = arith.index_cast %223 : i32 to index
      %c0_130 = arith.constant 0 : index
      %225 = vector.load %arg17[%224, %c0_130] : memref<512x64xf32, #tpu.memory_space<vmem>>, vector<16x64xf32>
      %226 = arith.maximumf %221, %225 : vector<16x64xf32>
      %c128_i32_131 = arith.constant 128 : i32
      %227 = arith.addi %70, %c128_i32_131 : i32
      %228 = tpu.assume_multiple %227, 8 : i32
      %229 = arith.index_cast %228 : i32 to index
      %c0_132 = arith.constant 0 : index
      %230 = vector.load %arg17[%229, %c0_132] : memref<512x64xf32, #tpu.memory_space<vmem>>, vector<16x64xf32>
      %231 = arith.maximumf %226, %230 : vector<16x64xf32>
      %c144_i32_133 = arith.constant 144 : i32
      %232 = arith.addi %70, %c144_i32_133 : i32
      %233 = tpu.assume_multiple %232, 8 : i32
      %234 = arith.index_cast %233 : i32 to index
      %c0_134 = arith.constant 0 : index
      %235 = vector.load %arg17[%234, %c0_134] : memref<512x64xf32, #tpu.memory_space<vmem>>, vector<16x64xf32>
      %236 = arith.maximumf %231, %235 : vector<16x64xf32>
      %c160_i32_135 = arith.constant 160 : i32
      %237 = arith.addi %70, %c160_i32_135 : i32
      %238 = tpu.assume_multiple %237, 8 : i32
      %239 = arith.index_cast %238 : i32 to index
      %c0_136 = arith.constant 0 : index
      %240 = vector.load %arg17[%239, %c0_136] : memref<512x64xf32, #tpu.memory_space<vmem>>, vector<16x64xf32>
      %241 = arith.maximumf %236, %240 : vector<16x64xf32>
      %c176_i32 = arith.constant 176 : i32
      %242 = arith.addi %70, %c176_i32 : i32
      %243 = tpu.assume_multiple %242, 8 : i32
      %244 = arith.index_cast %243 : i32 to index
      %c0_137 = arith.constant 0 : index
      %245 = vector.load %arg17[%244, %c0_137] : memref<512x64xf32, #tpu.memory_space<vmem>>, vector<16x64xf32>
      %246 = arith.maximumf %241, %245 : vector<16x64xf32>
      %c192_i32 = arith.constant 192 : i32
      %247 = arith.addi %70, %c192_i32 : i32
      %248 = tpu.assume_multiple %247, 8 : i32
      %249 = arith.index_cast %248 : i32 to index
      %c0_138 = arith.constant 0 : index
      %250 = vector.load %arg17[%249, %c0_138] : memref<512x64xf32, #tpu.memory_space<vmem>>, vector<16x64xf32>
      %251 = arith.maximumf %246, %250 : vector<16x64xf32>
      %c0_139 = arith.constant 0 : index
      %c0_140 = arith.constant 0 : index
      %252 = vector.load %arg18[%c0_139, %c0_140] : memref<16x64xf32, #tpu.memory_space<vmem>>, vector<16x64xf32>
      tpu.vector_store %arg18[%c0_139, %c0_140], %251 {strides = array<i32>} : memref<16x64xf32, #tpu.memory_space<vmem>>, vector<16x64xf32>,
      %c0_141 = arith.constant 0 : index
      %c0_142 = arith.constant 0 : index
      %253 = tpu.strided_load %arg18[%c0_141, %c0_142] {strides = array<i32: 2, 1>} : memref<16x64xf32, #tpu.memory_space<vmem>>, vector<5x64xf32>
      %c1_143 = arith.constant 1 : index
      %c0_144 = arith.constant 0 : index
      %254 = tpu.strided_load %arg18[%c1_143, %c0_144] {strides = array<i32: 2, 1>} : memref<16x64xf32, #tpu.memory_space<vmem>>, vector<5x64xf32>
      %255 = arith.maximumf %253, %254 : vector<5x64xf32>
      %c2_145 = arith.constant 2 : index
      %c0_146 = arith.constant 0 : index
      %256 = tpu.strided_load %arg18[%c2_145, %c0_146] {strides = array<i32: 2, 1>} : memref<16x64xf32, #tpu.memory_space<vmem>>, vector<5x64xf32>
      %257 = arith.maximumf %255, %256 : vector<5x64xf32>
      %c3_147 = arith.constant 3 : index
      %c0_148 = arith.constant 0 : index
      %258 = tpu.strided_load %arg18[%c3_147, %c0_148] {strides = array<i32: 2, 1>} : memref<16x64xf32, #tpu.memory_space<vmem>>, vector<5x64xf32>
      %259 = arith.maximumf %257, %258 : vector<5x64xf32>
      %c4_149 = arith.constant 4 : index
      %c0_150 = arith.constant 0 : index
      %260 = tpu.strided_load %arg18[%c4_149, %c0_150] {strides = array<i32: 2, 1>} : memref<16x64xf32, #tpu.memory_space<vmem>>, vector<5x64xf32>
      %261 = arith.maximumf %259, %260 : vector<5x64xf32>
      %c5_151 = arith.constant 5 : index
      %c0_152 = arith.constant 0 : index
      %262 = tpu.strided_load %arg18[%c5_151, %c0_152] {strides = array<i32: 2, 1>} : memref<16x64xf32, #tpu.memory_space<vmem>>, vector<5x64xf32>
      %263 = arith.maximumf %261, %262 : vector<5x64xf32>
      %c6_153 = arith.constant 6 : index
      %c0_154 = arith.constant 0 : index
      %264 = tpu.strided_load %arg18[%c6_153, %c0_154] {strides = array<i32: 2, 1>} : memref<16x64xf32, #tpu.memory_space<vmem>>, vector<5x64xf32>
      %265 = arith.maximumf %263, %264 : vector<5x64xf32>
      %c33 = arith.constant 33 : index
      %c0_155 = arith.constant 0 : index
      %266 = vector.load %arg19[%c33, %c0_155] : memref<64x64xf32, #tpu.memory_space<vmem>>, vector<5x64xf32>
      tpu.vector_store %arg19[%c33, %c0_155], %265 {strides = array<i32>} : memref<64x64xf32, #tpu.memory_space<vmem>>, vector<5x64xf32>,
      %c128_i32_156 = arith.constant 128 : i32
      %267 = arith.addi %70, %c128_i32_156 : i32
      %268 = tpu.assume_multiple %267, 8 : i32
      %269 = arith.index_cast %268 : i32 to index
      %c0_157 = arith.constant 0 : index
      %270 = vector.load %arg17[%269, %c0_157] : memref<512x64xf32, #tpu.memory_space<vmem>>, vector<16x64xf32>
      %c144_i32_158 = arith.constant 144 : i32
      %271 = arith.addi %70, %c144_i32_158 : i32
      %272 = tpu.assume_multiple %271, 8 : i32
      %273 = arith.index_cast %272 : i32 to index
      %c0_159 = arith.constant 0 : index
      %274 = vector.load %arg17[%273, %c0_159] : memref<512x64xf32, #tpu.memory_space<vmem>>, vector<16x64xf32>
      %275 = arith.maximumf %270, %274 : vector<16x64xf32>
      %c160_i32_160 = arith.constant 160 : i32
      %276 = arith.addi %70, %c160_i32_160 : i32
      %277 = tpu.assume_multiple %276, 8 : i32
      %278 = arith.index_cast %277 : i32 to index
      %c0_161 = arith.constant 0 : index
      %279 = vector.load %arg17[%278, %c0_161] : memref<512x64xf32, #tpu.memory_space<vmem>>, vector<16x64xf32>
      %280 = arith.maximumf %275, %279 : vector<16x64xf32>
      %c176_i32_162 = arith.constant 176 : i32
      %281 = arith.addi %70, %c176_i32_162 : i32
      %282 = tpu.assume_multiple %281, 8 : i32
      %283 = arith.index_cast %282 : i32 to index
      %c0_163 = arith.constant 0 : index
      %284 = vector.load %arg17[%283, %c0_163] : memref<512x64xf32, #tpu.memory_space<vmem>>, vector<16x64xf32>
      %285 = arith.maximumf %280, %284 : vector<16x64xf32>
      %c192_i32_164 = arith.constant 192 : i32
      %286 = arith.addi %70, %c192_i32_164 : i32
      %287 = tpu.assume_multiple %286, 8 : i32
      %288 = arith.index_cast %287 : i32 to index
      %c0_165 = arith.constant 0 : index
      %289 = vector.load %arg17[%288, %c0_165] : memref<512x64xf32, #tpu.memory_space<vmem>>, vector<16x64xf32>
      %290 = arith.maximumf %285, %289 : vector<16x64xf32>
      %c208_i32 = arith.constant 208 : i32
      %291 = arith.addi %70, %c208_i32 : i32
      %292 = tpu.assume_multiple %291, 8 : i32
      %293 = arith.index_cast %292 : i32 to index
      %c0_166 = arith.constant 0 : index
      %294 = vector.load %arg17[%293, %c0_166] : memref<512x64xf32, #tpu.memory_space<vmem>>, vector<16x64xf32>
      %295 = arith.maximumf %290, %294 : vector<16x64xf32>
      %c224_i32 = arith.constant 224 : i32
      %296 = arith.addi %70, %c224_i32 : i32
      %297 = tpu.assume_multiple %296, 8 : i32
      %298 = arith.index_cast %297 : i32 to index
      %c0_167 = arith.constant 0 : index
      %299 = vector.load %arg17[%298, %c0_167] : memref<512x64xf32, #tpu.memory_space<vmem>>, vector<16x64xf32>
      %300 = arith.maximumf %295, %299 : vector<16x64xf32>
      %c0_168 = arith.constant 0 : index
      %c0_169 = arith.constant 0 : index
      %301 = vector.load %arg18[%c0_168, %c0_169] : memref<16x64xf32, #tpu.memory_space<vmem>>, vector<16x64xf32>
      tpu.vector_store %arg18[%c0_168, %c0_169], %300 {strides = array<i32>} : memref<16x64xf32, #tpu.memory_space<vmem>>, vector<16x64xf32>,
      %c0_170 = arith.constant 0 : index
      %c0_171 = arith.constant 0 : index
      %302 = tpu.strided_load %arg18[%c0_170, %c0_171] {strides = array<i32: 2, 1>} : memref<16x64xf32, #tpu.memory_space<vmem>>, vector<5x64xf32>
      %c1_172 = arith.constant 1 : index
      %c0_173 = arith.constant 0 : index
      %303 = tpu.strided_load %arg18[%c1_172, %c0_173] {strides = array<i32: 2, 1>} : memref<16x64xf32, #tpu.memory_space<vmem>>, vector<5x64xf32>
      %304 = arith.maximumf %302, %303 : vector<5x64xf32>
      %c2_174 = arith.constant 2 : index
      %c0_175 = arith.constant 0 : index
      %305 = tpu.strided_load %arg18[%c2_174, %c0_175] {strides = array<i32: 2, 1>} : memref<16x64xf32, #tpu.memory_space<vmem>>, vector<5x64xf32>
      %306 = arith.maximumf %304, %305 : vector<5x64xf32>
      %c3_176 = arith.constant 3 : index
      %c0_177 = arith.constant 0 : index
      %307 = tpu.strided_load %arg18[%c3_176, %c0_177] {strides = array<i32: 2, 1>} : memref<16x64xf32, #tpu.memory_space<vmem>>, vector<5x64xf32>
      %308 = arith.maximumf %306, %307 : vector<5x64xf32>
      %c4_178 = arith.constant 4 : index
      %c0_179 = arith.constant 0 : index
      %309 = tpu.strided_load %arg18[%c4_178, %c0_179] {strides = array<i32: 2, 1>} : memref<16x64xf32, #tpu.memory_space<vmem>>, vector<5x64xf32>
      %310 = arith.maximumf %308, %309 : vector<5x64xf32>
      %c5_180 = arith.constant 5 : index
      %c0_181 = arith.constant 0 : index
      %311 = tpu.strided_load %arg18[%c5_180, %c0_181] {strides = array<i32: 2, 1>} : memref<16x64xf32, #tpu.memory_space<vmem>>, vector<5x64xf32>
      %312 = arith.maximumf %310, %311 : vector<5x64xf32>
      %c6_182 = arith.constant 6 : index
      %c0_183 = arith.constant 0 : index
      %313 = tpu.strided_load %arg18[%c6_182, %c0_183] {strides = array<i32: 2, 1>} : memref<16x64xf32, #tpu.memory_space<vmem>>, vector<5x64xf32>
      %314 = arith.maximumf %312, %313 : vector<5x64xf32>
      %c41 = arith.constant 41 : index
      %c0_184 = arith.constant 0 : index
      %315 = vector.load %arg19[%c41, %c0_184] : memref<64x64xf32, #tpu.memory_space<vmem>>, vector<5x64xf32>
      tpu.vector_store %arg19[%c41, %c0_184], %314 {strides = array<i32>} : memref<64x64xf32, #tpu.memory_space<vmem>>, vector<5x64xf32>,
      %cst_185 = arith.constant 0.000000e+00 : f32
      %316 = vector.broadcast %cst_185 : f32 to vector<40x64xf32>
      %c0_186 = arith.constant 0 : index
      %c0_187 = arith.constant 0 : index
      %317 = vector.load %arg19[%c0_186, %c0_187] : memref<64x64xf32, #tpu.memory_space<vmem>>, vector<40x64xf32>
      %318 = arith.truncf %317 : vector<40x64xf32> to vector<40x64xbf16>
      %c0_188 = arith.constant 0 : index
      %c0_189 = arith.constant 0 : index
      %c0_190 = arith.constant 0 : index
      %319 = vector.load %arg5[%c0_188, %c0_189, %c0_190] : memref<9x64x64xbf16, #tpu.memory_space<vmem>>, vector<1x64x64xbf16>
      %320 = vector.shape_cast %319 : vector<1x64x64xbf16> to vector<64x64xbf16>
      %cst_191 = arith.constant dense<0.000000e+00> : vector<40x64xf32>
      %321 = tpu.matmul %318, %320, %cst_191 {dimension_numbers = #tpu.dot_dimension_numbers<[1], [0], [0], [1], [0, 0, 1, 1], [], []>} : vector<40x64xbf16>, vector<64x64xbf16>, vector<40x64xf32> -> vector<40x64xf32>
      %322 = arith.addf %316, %321 : vector<40x64xf32>
      %c1_192 = arith.constant 1 : index
      %c0_193 = arith.constant 0 : index
      %323 = vector.load %arg19[%c1_192, %c0_193] : memref<64x64xf32, #tpu.memory_space<vmem>>, vector<40x64xf32>
      %324 = arith.truncf %323 : vector<40x64xf32> to vector<40x64xbf16>
      %c1_194 = arith.constant 1 : index
      %c0_195 = arith.constant 0 : index
      %c0_196 = arith.constant 0 : index
      %325 = vector.load %arg5[%c1_194, %c0_195, %c0_196] : memref<9x64x64xbf16, #tpu.memory_space<vmem>>, vector<1x64x64xbf16>
      %326 = vector.shape_cast %325 : vector<1x64x64xbf16> to vector<64x64xbf16>
      %cst_197 = arith.constant dense<0.000000e+00> : vector<40x64xf32>
      %327 = tpu.matmul %324, %326, %cst_197 {dimension_numbers = #tpu.dot_dimension_numbers<[1], [0], [0], [1], [0, 0, 1, 1], [], []>} : vector<40x64xbf16>, vector<64x64xbf16>, vector<40x64xf32> -> vector<40x64xf32>
      %328 = arith.addf %322, %327 : vector<40x64xf32>
      %c2_198 = arith.constant 2 : index
      %c0_199 = arith.constant 0 : index
      %329 = vector.load %arg19[%c2_198, %c0_199] : memref<64x64xf32, #tpu.memory_space<vmem>>, vector<40x64xf32>
      %330 = arith.truncf %329 : vector<40x64xf32> to vector<40x64xbf16>
      %c2_200 = arith.constant 2 : index
      %c0_201 = arith.constant 0 : index
      %c0_202 = arith.constant 0 : index
      %331 = vector.load %arg5[%c2_200, %c0_201, %c0_202] : memref<9x64x64xbf16, #tpu.memory_space<vmem>>, vector<1x64x64xbf16>
      %332 = vector.shape_cast %331 : vector<1x64x64xbf16> to vector<64x64xbf16>
      %cst_203 = arith.constant dense<0.000000e+00> : vector<40x64xf32>
      %333 = tpu.matmul %330, %332, %cst_203 {dimension_numbers = #tpu.dot_dimension_numbers<[1], [0], [0], [1], [0, 0, 1, 1], [], []>} : vector<40x64xbf16>, vector<64x64xbf16>, vector<40x64xf32> -> vector<40x64xf32>
      %334 = arith.addf %328, %333 : vector<40x64xf32>
      %c8 = arith.constant 8 : index
      %c0_204 = arith.constant 0 : index
      %335 = vector.load %arg19[%c8, %c0_204] : memref<64x64xf32, #tpu.memory_space<vmem>>, vector<40x64xf32>
      %336 = arith.truncf %335 : vector<40x64xf32> to vector<40x64xbf16>
      %c3_205 = arith.constant 3 : index
      %c0_206 = arith.constant 0 : index
      %c0_207 = arith.constant 0 : index
      %337 = vector.load %arg5[%c3_205, %c0_206, %c0_207] : memref<9x64x64xbf16, #tpu.memory_space<vmem>>, vector<1x64x64xbf16>
      %338 = vector.shape_cast %337 : vector<1x64x64xbf16> to vector<64x64xbf16>
      %cst_208 = arith.constant dense<0.000000e+00> : vector<40x64xf32>
      %339 = tpu.matmul %336, %338, %cst_208 {dimension_numbers = #tpu.dot_dimension_numbers<[1], [0], [0], [1], [0, 0, 1, 1], [], []>} : vector<40x64xbf16>, vector<64x64xbf16>, vector<40x64xf32> -> vector<40x64xf32>
      %340 = arith.addf %334, %339 : vector<40x64xf32>
      %c9_209 = arith.constant 9 : index
      %c0_210 = arith.constant 0 : index
      %341 = vector.load %arg19[%c9_209, %c0_210] : memref<64x64xf32, #tpu.memory_space<vmem>>, vector<40x64xf32>
      %342 = arith.truncf %341 : vector<40x64xf32> to vector<40x64xbf16>
      %c4_211 = arith.constant 4 : index
      %c0_212 = arith.constant 0 : index
      %c0_213 = arith.constant 0 : index
      %343 = vector.load %arg5[%c4_211, %c0_212, %c0_213] : memref<9x64x64xbf16, #tpu.memory_space<vmem>>, vector<1x64x64xbf16>
      %344 = vector.shape_cast %343 : vector<1x64x64xbf16> to vector<64x64xbf16>
      %cst_214 = arith.constant dense<0.000000e+00> : vector<40x64xf32>
      %345 = tpu.matmul %342, %344, %cst_214 {dimension_numbers = #tpu.dot_dimension_numbers<[1], [0], [0], [1], [0, 0, 1, 1], [], []>} : vector<40x64xbf16>, vector<64x64xbf16>, vector<40x64xf32> -> vector<40x64xf32>
      %346 = arith.addf %340, %345 : vector<40x64xf32>
      %c10 = arith.constant 10 : index
      %c0_215 = arith.constant 0 : index
      %347 = vector.load %arg19[%c10, %c0_215] : memref<64x64xf32, #tpu.memory_space<vmem>>, vector<40x64xf32>
      %348 = arith.truncf %347 : vector<40x64xf32> to vector<40x64xbf16>
      %c5_216 = arith.constant 5 : index
      %c0_217 = arith.constant 0 : index
      %c0_218 = arith.constant 0 : index
      %349 = vector.load %arg5[%c5_216, %c0_217, %c0_218] : memref<9x64x64xbf16, #tpu.memory_space<vmem>>, vector<1x64x64xbf16>
      %350 = vector.shape_cast %349 : vector<1x64x64xbf16> to vector<64x64xbf16>
      %cst_219 = arith.constant dense<0.000000e+00> : vector<40x64xf32>
      %351 = tpu.matmul %348, %350, %cst_219 {dimension_numbers = #tpu.dot_dimension_numbers<[1], [0], [0], [1], [0, 0, 1, 1], [], []>} : vector<40x64xbf16>, vector<64x64xbf16>, vector<40x64xf32> -> vector<40x64xf32>
      %352 = arith.addf %346, %351 : vector<40x64xf32>
      %c16 = arith.constant 16 : index
      %c0_220 = arith.constant 0 : index
      %353 = vector.load %arg19[%c16, %c0_220] : memref<64x64xf32, #tpu.memory_space<vmem>>, vector<40x64xf32>
      %354 = arith.truncf %353 : vector<40x64xf32> to vector<40x64xbf16>
      %c6_221 = arith.constant 6 : index
      %c0_222 = arith.constant 0 : index
      %c0_223 = arith.constant 0 : index
      %355 = vector.load %arg5[%c6_221, %c0_222, %c0_223] : memref<9x64x64xbf16, #tpu.memory_space<vmem>>, vector<1x64x64xbf16>
      %356 = vector.shape_cast %355 : vector<1x64x64xbf16> to vector<64x64xbf16>
      %cst_224 = arith.constant dense<0.000000e+00> : vector<40x64xf32>
      %357 = tpu.matmul %354, %356, %cst_224 {dimension_numbers = #tpu.dot_dimension_numbers<[1], [0], [0], [1], [0, 0, 1, 1], [], []>} : vector<40x64xbf16>, vector<64x64xbf16>, vector<40x64xf32> -> vector<40x64xf32>
      %358 = arith.addf %352, %357 : vector<40x64xf32>
      %c17_225 = arith.constant 17 : index
      %c0_226 = arith.constant 0 : index
      %359 = vector.load %arg19[%c17_225, %c0_226] : memref<64x64xf32, #tpu.memory_space<vmem>>, vector<40x64xf32>
      %360 = arith.truncf %359 : vector<40x64xf32> to vector<40x64xbf16>
      %c7 = arith.constant 7 : index
      %c0_227 = arith.constant 0 : index
      %c0_228 = arith.constant 0 : index
      %361 = vector.load %arg5[%c7, %c0_227, %c0_228] : memref<9x64x64xbf16, #tpu.memory_space<vmem>>, vector<1x64x64xbf16>
      %362 = vector.shape_cast %361 : vector<1x64x64xbf16> to vector<64x64xbf16>
      %cst_229 = arith.constant dense<0.000000e+00> : vector<40x64xf32>
      %363 = tpu.matmul %360, %362, %cst_229 {dimension_numbers = #tpu.dot_dimension_numbers<[1], [0], [0], [1], [0, 0, 1, 1], [], []>} : vector<40x64xbf16>, vector<64x64xbf16>, vector<40x64xf32> -> vector<40x64xf32>
      %364 = arith.addf %358, %363 : vector<40x64xf32>
      %c18 = arith.constant 18 : index
      %c0_230 = arith.constant 0 : index
      %365 = vector.load %arg19[%c18, %c0_230] : memref<64x64xf32, #tpu.memory_space<vmem>>, vector<40x64xf32>
      %366 = arith.truncf %365 : vector<40x64xf32> to vector<40x64xbf16>
      %c8_231 = arith.constant 8 : index
      %c0_232 = arith.constant 0 : index
      %c0_233 = arith.constant 0 : index
      %367 = vector.load %arg5[%c8_231, %c0_232, %c0_233] : memref<9x64x64xbf16, #tpu.memory_space<vmem>>, vector<1x64x64xbf16>
      %368 = vector.shape_cast %367 : vector<1x64x64xbf16> to vector<64x64xbf16>
      %cst_234 = arith.constant dense<0.000000e+00> : vector<40x64xf32>
      %369 = tpu.matmul %366, %368, %cst_234 {dimension_numbers = #tpu.dot_dimension_numbers<[1], [0], [0], [1], [0, 0, 1, 1], [], []>} : vector<40x64xbf16>, vector<64x64xbf16>, vector<40x64xf32> -> vector<40x64xf32>
      %370 = arith.addf %364, %369 : vector<40x64xf32>
      %c0_235 = arith.constant 0 : index
      %c0_236 = arith.constant 0 : index
      %371 = vector.load %arg6[%c0_235, %c0_236] : memref<1x64xf32, #tpu.memory_space<vmem>>, vector<1x64xf32>
      %372 = vector.broadcast %371 : vector<1x64xf32> to vector<40x64xf32>
      %373 = arith.addf %370, %372 : vector<40x64xf32>
      %cst_237 = arith.constant 0.000000e+00 : f32
      %374 = vector.broadcast %cst_237 : f32 to vector<40x64xf32>
      %375 = arith.maximumf %373, %374 : vector<40x64xf32>
      %cst_238 = arith.constant 0.000000e+00 : f32
      %376 = vector.shape_cast %22 : vector<40x1xi1> to vector<40x1xi1>
      %377 = vector.broadcast %376 : vector<40x1xi1> to vector<40x64xi1>
      %378 = vector.broadcast %cst_238 : f32 to vector<40x64xf32>
      %379 = arith.select %377, %375, %378 : vector<40x64xi1>, vector<40x64xf32>
      %c9_239 = arith.constant 9 : index
      %c0_240 = arith.constant 0 : index
      %380 = vector.load %arg20[%c9_239, %c0_240] : memref<64x64xf32, #tpu.memory_space<vmem>>, vector<40x64xf32>
      tpu.vector_store %arg20[%c9_239, %c0_240], %379 {strides = array<i32>} : memref<64x64xf32, #tpu.memory_space<vmem>>, vector<40x64xf32>,
      %cst_241 = arith.constant 0.000000e+00 : f32
      %381 = vector.broadcast %cst_241 : f32 to vector<40x64xf32>
      %c0_242 = arith.constant 0 : index
      %c0_243 = arith.constant 0 : index
      %382 = vector.load %arg20[%c0_242, %c0_243] : memref<64x64xf32, #tpu.memory_space<vmem>>, vector<40x64xf32>
      %383 = arith.truncf %382 : vector<40x64xf32> to vector<40x64xbf16>
      %c0_244 = arith.constant 0 : index
      %c0_245 = arith.constant 0 : index
      %c0_246 = arith.constant 0 : index
      %384 = vector.load %arg7[%c0_244, %c0_245, %c0_246] : memref<9x64x64xbf16, #tpu.memory_space<vmem>>, vector<1x64x64xbf16>
      %385 = vector.shape_cast %384 : vector<1x64x64xbf16> to vector<64x64xbf16>
      %cst_247 = arith.constant dense<0.000000e+00> : vector<40x64xf32>
      %386 = tpu.matmul %383, %385, %cst_247 {dimension_numbers = #tpu.dot_dimension_numbers<[1], [0], [0], [1], [0, 0, 1, 1], [], []>} : vector<40x64xbf16>, vector<64x64xbf16>, vector<40x64xf32> -> vector<40x64xf32>
      %387 = arith.addf %381, %386 : vector<40x64xf32>
      %c1_248 = arith.constant 1 : index
      %c0_249 = arith.constant 0 : index
      %388 = vector.load %arg20[%c1_248, %c0_249] : memref<64x64xf32, #tpu.memory_space<vmem>>, vector<40x64xf32>
      %389 = arith.truncf %388 : vector<40x64xf32> to vector<40x64xbf16>
      %c1_250 = arith.constant 1 : index
      %c0_251 = arith.constant 0 : index
      %c0_252 = arith.constant 0 : index
      %390 = vector.load %arg7[%c1_250, %c0_251, %c0_252] : memref<9x64x64xbf16, #tpu.memory_space<vmem>>, vector<1x64x64xbf16>
      %391 = vector.shape_cast %390 : vector<1x64x64xbf16> to vector<64x64xbf16>
      %cst_253 = arith.constant dense<0.000000e+00> : vector<40x64xf32>
      %392 = tpu.matmul %389, %391, %cst_253 {dimension_numbers = #tpu.dot_dimension_numbers<[1], [0], [0], [1], [0, 0, 1, 1], [], []>} : vector<40x64xbf16>, vector<64x64xbf16>, vector<40x64xf32> -> vector<40x64xf32>
      %393 = arith.addf %387, %392 : vector<40x64xf32>
      %c2_254 = arith.constant 2 : index
      %c0_255 = arith.constant 0 : index
      %394 = vector.load %arg20[%c2_254, %c0_255] : memref<64x64xf32, #tpu.memory_space<vmem>>, vector<40x64xf32>
      %395 = arith.truncf %394 : vector<40x64xf32> to vector<40x64xbf16>
      %c2_256 = arith.constant 2 : index
      %c0_257 = arith.constant 0 : index
      %c0_258 = arith.constant 0 : index
      %396 = vector.load %arg7[%c2_256, %c0_257, %c0_258] : memref<9x64x64xbf16, #tpu.memory_space<vmem>>, vector<1x64x64xbf16>
      %397 = vector.shape_cast %396 : vector<1x64x64xbf16> to vector<64x64xbf16>
      %cst_259 = arith.constant dense<0.000000e+00> : vector<40x64xf32>
      %398 = tpu.matmul %395, %397, %cst_259 {dimension_numbers = #tpu.dot_dimension_numbers<[1], [0], [0], [1], [0, 0, 1, 1], [], []>} : vector<40x64xbf16>, vector<64x64xbf16>, vector<40x64xf32> -> vector<40x64xf32>
      %399 = arith.addf %393, %398 : vector<40x64xf32>
      %c8_260 = arith.constant 8 : index
      %c0_261 = arith.constant 0 : index
      %400 = vector.load %arg20[%c8_260, %c0_261] : memref<64x64xf32, #tpu.memory_space<vmem>>, vector<40x64xf32>
      %401 = arith.truncf %400 : vector<40x64xf32> to vector<40x64xbf16>
      %c3_262 = arith.constant 3 : index
      %c0_263 = arith.constant 0 : index
      %c0_264 = arith.constant 0 : index
      %402 = vector.load %arg7[%c3_262, %c0_263, %c0_264] : memref<9x64x64xbf16, #tpu.memory_space<vmem>>, vector<1x64x64xbf16>
      %403 = vector.shape_cast %402 : vector<1x64x64xbf16> to vector<64x64xbf16>
      %cst_265 = arith.constant dense<0.000000e+00> : vector<40x64xf32>
      %404 = tpu.matmul %401, %403, %cst_265 {dimension_numbers = #tpu.dot_dimension_numbers<[1], [0], [0], [1], [0, 0, 1, 1], [], []>} : vector<40x64xbf16>, vector<64x64xbf16>, vector<40x64xf32> -> vector<40x64xf32>
      %405 = arith.addf %399, %404 : vector<40x64xf32>
      %c9_266 = arith.constant 9 : index
      %c0_267 = arith.constant 0 : index
      %406 = vector.load %arg20[%c9_266, %c0_267] : memref<64x64xf32, #tpu.memory_space<vmem>>, vector<40x64xf32>
      %407 = arith.truncf %406 : vector<40x64xf32> to vector<40x64xbf16>
      %c4_268 = arith.constant 4 : index
      %c0_269 = arith.constant 0 : index
      %c0_270 = arith.constant 0 : index
      %408 = vector.load %arg7[%c4_268, %c0_269, %c0_270] : memref<9x64x64xbf16, #tpu.memory_space<vmem>>, vector<1x64x64xbf16>
      %409 = vector.shape_cast %408 : vector<1x64x64xbf16> to vector<64x64xbf16>
      %cst_271 = arith.constant dense<0.000000e+00> : vector<40x64xf32>
      %410 = tpu.matmul %407, %409, %cst_271 {dimension_numbers = #tpu.dot_dimension_numbers<[1], [0], [0], [1], [0, 0, 1, 1], [], []>} : vector<40x64xbf16>, vector<64x64xbf16>, vector<40x64xf32> -> vector<40x64xf32>
      %411 = arith.addf %405, %410 : vector<40x64xf32>
      %c10_272 = arith.constant 10 : index
      %c0_273 = arith.constant 0 : index
      %412 = vector.load %arg20[%c10_272, %c0_273] : memref<64x64xf32, #tpu.memory_space<vmem>>, vector<40x64xf32>
      %413 = arith.truncf %412 : vector<40x64xf32> to vector<40x64xbf16>
      %c5_274 = arith.constant 5 : index
      %c0_275 = arith.constant 0 : index
      %c0_276 = arith.constant 0 : index
      %414 = vector.load %arg7[%c5_274, %c0_275, %c0_276] : memref<9x64x64xbf16, #tpu.memory_space<vmem>>, vector<1x64x64xbf16>
      %415 = vector.shape_cast %414 : vector<1x64x64xbf16> to vector<64x64xbf16>
      %cst_277 = arith.constant dense<0.000000e+00> : vector<40x64xf32>
      %416 = tpu.matmul %413, %415, %cst_277 {dimension_numbers = #tpu.dot_dimension_numbers<[1], [0], [0], [1], [0, 0, 1, 1], [], []>} : vector<40x64xbf16>, vector<64x64xbf16>, vector<40x64xf32> -> vector<40x64xf32>
      %417 = arith.addf %411, %416 : vector<40x64xf32>
      %c16_278 = arith.constant 16 : index
      %c0_279 = arith.constant 0 : index
      %418 = vector.load %arg20[%c16_278, %c0_279] : memref<64x64xf32, #tpu.memory_space<vmem>>, vector<40x64xf32>
      %419 = arith.truncf %418 : vector<40x64xf32> to vector<40x64xbf16>
      %c6_280 = arith.constant 6 : index
      %c0_281 = arith.constant 0 : index
      %c0_282 = arith.constant 0 : index
      %420 = vector.load %arg7[%c6_280, %c0_281, %c0_282] : memref<9x64x64xbf16, #tpu.memory_space<vmem>>, vector<1x64x64xbf16>
      %421 = vector.shape_cast %420 : vector<1x64x64xbf16> to vector<64x64xbf16>
      %cst_283 = arith.constant dense<0.000000e+00> : vector<40x64xf32>
      %422 = tpu.matmul %419, %421, %cst_283 {dimension_numbers = #tpu.dot_dimension_numbers<[1], [0], [0], [1], [0, 0, 1, 1], [], []>} : vector<40x64xbf16>, vector<64x64xbf16>, vector<40x64xf32> -> vector<40x64xf32>
      %423 = arith.addf %417, %422 : vector<40x64xf32>
      %c17_284 = arith.constant 17 : index
      %c0_285 = arith.constant 0 : index
      %424 = vector.load %arg20[%c17_284, %c0_285] : memref<64x64xf32, #tpu.memory_space<vmem>>, vector<40x64xf32>
      %425 = arith.truncf %424 : vector<40x64xf32> to vector<40x64xbf16>
      %c7_286 = arith.constant 7 : index
      %c0_287 = arith.constant 0 : index
      %c0_288 = arith.constant 0 : index
      %426 = vector.load %arg7[%c7_286, %c0_287, %c0_288] : memref<9x64x64xbf16, #tpu.memory_space<vmem>>, vector<1x64x64xbf16>
      %427 = vector.shape_cast %426 : vector<1x64x64xbf16> to vector<64x64xbf16>
      %cst_289 = arith.constant dense<0.000000e+00> : vector<40x64xf32>
      %428 = tpu.matmul %425, %427, %cst_289 {dimension_numbers = #tpu.dot_dimension_numbers<[1], [0], [0], [1], [0, 0, 1, 1], [], []>} : vector<40x64xbf16>, vector<64x64xbf16>, vector<40x64xf32> -> vector<40x64xf32>
      %429 = arith.addf %423, %428 : vector<40x64xf32>
      %c18_290 = arith.constant 18 : index
      %c0_291 = arith.constant 0 : index
      %430 = vector.load %arg20[%c18_290, %c0_291] : memref<64x64xf32, #tpu.memory_space<vmem>>, vector<40x64xf32>
      %431 = arith.truncf %430 : vector<40x64xf32> to vector<40x64xbf16>
      %c8_292 = arith.constant 8 : index
      %c0_293 = arith.constant 0 : index
      %c0_294 = arith.constant 0 : index
      %432 = vector.load %arg7[%c8_292, %c0_293, %c0_294] : memref<9x64x64xbf16, #tpu.memory_space<vmem>>, vector<1x64x64xbf16>
      %433 = vector.shape_cast %432 : vector<1x64x64xbf16> to vector<64x64xbf16>
      %cst_295 = arith.constant dense<0.000000e+00> : vector<40x64xf32>
      %434 = tpu.matmul %431, %433, %cst_295 {dimension_numbers = #tpu.dot_dimension_numbers<[1], [0], [0], [1], [0, 0, 1, 1], [], []>} : vector<40x64xbf16>, vector<64x64xbf16>, vector<40x64xf32> -> vector<40x64xf32>
      %435 = arith.addf %429, %434 : vector<40x64xf32>
      %c0_296 = arith.constant 0 : index
      %c0_297 = arith.constant 0 : index
      %436 = vector.load %arg8[%c0_296, %c0_297] : memref<1x64xf32, #tpu.memory_space<vmem>>, vector<1x64xf32>
      %437 = vector.broadcast %436 : vector<1x64xf32> to vector<40x64xf32>
      %438 = arith.addf %435, %437 : vector<40x64xf32>
      %cst_298 = arith.constant 0.000000e+00 : f32
      %439 = vector.broadcast %cst_298 : f32 to vector<40x64xf32>
      %440 = arith.maximumf %438, %439 : vector<40x64xf32>
      %cst_299 = arith.constant 0.000000e+00 : f32
      %441 = vector.shape_cast %22 : vector<40x1xi1> to vector<40x1xi1>
      %442 = vector.broadcast %441 : vector<40x1xi1> to vector<40x64xi1>
      %443 = vector.broadcast %cst_299 : f32 to vector<40x64xf32>
      %444 = arith.select %442, %440, %443 : vector<40x64xi1>, vector<40x64xf32>
      %cst_300 = arith.constant dense<0.000000e+00> : vector<64xf32>
      %445 = vector.multi_reduction <add>, %444, %cst_300 [0] : vector<40x64xf32> to vector<64xf32>
      %446 = vector.shape_cast %445 : vector<64xf32> to vector<1x64xf32>
      %cst_301 = arith.constant 4.000000e-02 : f32
      %447 = vector.broadcast %cst_301 : f32 to vector<1x64xf32>
      %448 = arith.mulf %446, %447 : vector<1x64xf32>
      %449 = arith.index_cast %arg22 : i32 to index
      %c0_302 = arith.constant 0 : index
      %450 = vector.load %arg21[%449, %c0_302] : memref<2x64xf32, #tpu.memory_space<vmem>>, vector<1x64xf32>
      tpu.vector_store %arg21[%449, %c0_302], %448 {strides = array<i32>} : memref<2x64xf32, #tpu.memory_space<vmem>>, vector<1x64xf32>,
    }
    %c2_i32_19 = arith.constant 2 : i32
    %c0_20 = arith.constant 0 : index
    %c0_21 = arith.constant 0 : index
    %33 = vector.load %arg21[%c0_20, %c0_21] : memref<2x64xf32, #tpu.memory_space<vmem>>, vector<2x64xf32>
    %c0_22 = arith.constant 0 : index
    %c0_23 = arith.constant 0 : index
    %34 = vector.load %arg9[%c0_22, %c0_23] : memref<64x128xf32, #tpu.memory_space<vmem>>, vector<64x128xf32>
    %cst_24 = arith.constant dense<0.000000e+00> : vector<2x128xf32>
    %35 = tpu.matmul %33, %34, %cst_24 {dimension_numbers = #tpu.dot_dimension_numbers<[1], [0], [0], [1], [0, 0, 1, 1], [], []>} : vector<2x64xf32>, vector<64x128xf32>, vector<2x128xf32> -> vector<2x128xf32>
    %c0_25 = arith.constant 0 : index
    %c0_26 = arith.constant 0 : index
    %36 = vector.load %arg2[%c0_25, %c0_26] : memref<2x10xf32, #tpu.memory_space<vmem>>, vector<2x10xf32>
    %c0_27 = arith.constant 0 : index
    %c0_28 = arith.constant 0 : index
    %37 = vector.load %arg10[%c0_27, %c0_28] : memref<10x128xf32, #tpu.memory_space<vmem>>, vector<10x128xf32>
    %cst_29 = arith.constant dense<0.000000e+00> : vector<2x128xf32>
    %38 = tpu.matmul %36, %37, %cst_29 {dimension_numbers = #tpu.dot_dimension_numbers<[1], [0], [0], [1], [0, 0, 1, 1], [], []>} : vector<2x10xf32>, vector<10x128xf32>, vector<2x128xf32> -> vector<2x128xf32>
    %39 = arith.addf %35, %38 : vector<2x128xf32>
    %c0_30 = arith.constant 0 : index
    %c0_31 = arith.constant 0 : index
    %40 = vector.load %arg11[%c0_30, %c0_31] : memref<1x128xf32, #tpu.memory_space<vmem>>, vector<1x128xf32>
    %41 = vector.broadcast %40 : vector<1x128xf32> to vector<2x128xf32>
    %42 = arith.addf %39, %41 : vector<2x128xf32>
    %cst_32 = arith.constant 5.000000e-01 : f32
    %43 = vector.broadcast %cst_32 : f32 to vector<2x128xf32>
    %44 = arith.mulf %43, %42 : vector<2x128xf32>
    %cst_33 = arith.constant 1.41421354 : f32
    %45 = vector.broadcast %cst_33 : f32 to vector<2x128xf32>
    %46 = arith.divf %42, %45 : vector<2x128xf32>
    %47 = math.erf %46 : vector<2x128xf32>
    %cst_34 = arith.constant 1.000000e+00 : f32
    %48 = vector.broadcast %cst_34 : f32 to vector<2x128xf32>
    %49 = arith.addf %48, %47 : vector<2x128xf32>
    %50 = arith.mulf %44, %49 : vector<2x128xf32>
    %c0_35 = arith.constant 0 : index
    %c0_36 = arith.constant 0 : index
    %51 = vector.load %arg12[%c0_35, %c0_36] : memref<128x128xf32, #tpu.memory_space<vmem>>, vector<128x128xf32>
    %cst_37 = arith.constant dense<0.000000e+00> : vector<2x128xf32>
    %52 = tpu.matmul %50, %51, %cst_37 {dimension_numbers = #tpu.dot_dimension_numbers<[1], [0], [0], [1], [0, 0, 1, 1], [], []>} : vector<2x128xf32>, vector<128x128xf32>, vector<2x128xf32> -> vector<2x128xf32>
    %c0_38 = arith.constant 0 : index
    %c0_39 = arith.constant 0 : index
    %53 = vector.load %arg13[%c0_38, %c0_39] : memref<1x128xf32, #tpu.memory_space<vmem>>, vector<1x128xf32>
    %54 = vector.broadcast %53 : vector<1x128xf32> to vector<2x128xf32>
    %55 = arith.addf %52, %54 : vector<2x128xf32>
    %cst_40 = arith.constant 5.000000e-01 : f32
    %56 = vector.broadcast %cst_40 : f32 to vector<2x128xf32>
    %57 = arith.mulf %56, %55 : vector<2x128xf32>
    %cst_41 = arith.constant 1.41421354 : f32
    %58 = vector.broadcast %cst_41 : f32 to vector<2x128xf32>
    %59 = arith.divf %55, %58 : vector<2x128xf32>
    %60 = math.erf %59 : vector<2x128xf32>
    %cst_42 = arith.constant 1.000000e+00 : f32
    %61 = vector.broadcast %cst_42 : f32 to vector<2x128xf32>
    %62 = arith.addf %61, %60 : vector<2x128xf32>
    %63 = arith.mulf %57, %62 : vector<2x128xf32>
    %c0_43 = arith.constant 0 : index
    %c0_44 = arith.constant 0 : index
    %64 = vector.load %arg14[%c0_43, %c0_44] : memref<128x10xf32, #tpu.memory_space<vmem>>, vector<128x10xf32>
    %cst_45 = arith.constant dense<0.000000e+00> : vector<2x10xf32>
    %65 = tpu.matmul %63, %64, %cst_45 {dimension_numbers = #tpu.dot_dimension_numbers<[1], [0], [0], [1], [0, 0, 1, 1], [], []>} : vector<2x128xf32>, vector<128x10xf32>, vector<2x10xf32> -> vector<2x10xf32>
    %c0_46 = arith.constant 0 : index
    %c0_47 = arith.constant 0 : index
    %66 = vector.load %arg15[%c0_46, %c0_47] : memref<1x10xf32, #tpu.memory_space<vmem>>, vector<1x10xf32>
    %67 = vector.broadcast %66 : vector<1x10xf32> to vector<2x10xf32>
    %68 = arith.addf %65, %67 : vector<2x10xf32>
    %c0_48 = arith.constant 0 : index
    %c0_49 = arith.constant 0 : index
    %69 = vector.load %arg16[%c0_48, %c0_49] : memref<2x10xf32, #tpu.memory_space<vmem>>, vector<2x10xf32>
    tpu.vector_store %arg16[%c0_48, %c0_49], %68 {strides = array<i32>} : memref<2x10xf32, #tpu.memory_space<vmem>>, vector<2x10xf32>,
    return
  }
  func.func @transform_0(%arg0: i32) -> (i32, i32) {
    %c0_i32 = arith.constant 0 : i32
    %c0_i32_0 = arith.constant 0 : i32
    return %arg0, %c0_i32 : i32, i32
  }
  func.func @transform_1(%arg0: i32) -> (i32, i32) {
    %c0_i32 = arith.constant 0 : i32
    %c0_i32_0 = arith.constant 0 : i32
    return %arg0, %c0_i32 : i32, i32
  }
  func.func @transform_2(%arg0: i32) -> (i32, i32) {
    %c0_i32 = arith.constant 0 : i32
    %c0_i32_0 = arith.constant 0 : i32
    %c0_i32_1 = arith.constant 0 : i32
    return %c0_i32, %c0_i32_0 : i32, i32
  }
  func.func @transform_3(%arg0: i32) -> (i32, i32) {
    %c0_i32 = arith.constant 0 : i32
    %c0_i32_0 = arith.constant 0 : i32
    %c0_i32_1 = arith.constant 0 : i32
    return %c0_i32, %c0_i32_0 : i32, i32
  }
  func.func @transform_4(%arg0: i32) -> (i32, i32, i32) {
    %c0_i32 = arith.constant 0 : i32
    %c0_i32_0 = arith.constant 0 : i32
    %c0_i32_1 = arith.constant 0 : i32
    %c0_i32_2 = arith.constant 0 : i32
    return %c0_i32, %c0_i32_0, %c0_i32_1 : i32, i32, i32
  }
  func.func @transform_5(%arg0: i32) -> (i32, i32) {
    %c0_i32 = arith.constant 0 : i32
    %c0_i32_0 = arith.constant 0 : i32
    %c0_i32_1 = arith.constant 0 : i32
    return %c0_i32, %c0_i32_0 : i32, i32
  }
  func.func @transform_6(%arg0: i32) -> (i32, i32, i32) {
    %c0_i32 = arith.constant 0 : i32
    %c0_i32_0 = arith.constant 0 : i32
    %c0_i32_1 = arith.constant 0 : i32
    %c0_i32_2 = arith.constant 0 : i32
    return %c0_i32, %c0_i32_0, %c0_i32_1 : i32, i32, i32
  }
  func.func @transform_7(%arg0: i32) -> (i32, i32) {
    %c0_i32 = arith.constant 0 : i32
    %c0_i32_0 = arith.constant 0 : i32
    %c0_i32_1 = arith.constant 0 : i32
    return %c0_i32, %c0_i32_0 : i32, i32
  }
  func.func @transform_8(%arg0: i32) -> (i32, i32) {
    %c0_i32 = arith.constant 0 : i32
    %c0_i32_0 = arith.constant 0 : i32
    %c0_i32_1 = arith.constant 0 : i32
    return %c0_i32, %c0_i32_0 : i32, i32
  }
  func.func @transform_9(%arg0: i32) -> (i32, i32) {
    %c0_i32 = arith.constant 0 : i32
    %c0_i32_0 = arith.constant 0 : i32
    %c0_i32_1 = arith.constant 0 : i32
    return %c0_i32, %c0_i32_0 : i32, i32
  }
  func.func @transform_10(%arg0: i32) -> (i32, i32) {
    %c0_i32 = arith.constant 0 : i32
    %c0_i32_0 = arith.constant 0 : i32
    %c0_i32_1 = arith.constant 0 : i32
    return %c0_i32, %c0_i32_0 : i32, i32
  }
  func.func @transform_11(%arg0: i32) -> (i32, i32) {
    %c0_i32 = arith.constant 0 : i32
    %c0_i32_0 = arith.constant 0 : i32
    %c0_i32_1 = arith.constant 0 : i32
    return %c0_i32, %c0_i32_0 : i32, i32
  }
  func.func @transform_12(%arg0: i32) -> (i32, i32) {
    %c0_i32 = arith.constant 0 : i32
    %c0_i32_0 = arith.constant 0 : i32
    %c0_i32_1 = arith.constant 0 : i32
    return %c0_i32, %c0_i32_0 : i32, i32
  }
  func.func @transform_13(%arg0: i32) -> (i32, i32) {
    %c0_i32 = arith.constant 0 : i32
    %c0_i32_0 = arith.constant 0 : i32
    %c0_i32_1 = arith.constant 0 : i32
    return %c0_i32, %c0_i32_0 : i32, i32
  }
  func.func @transform_14(%arg0: i32) -> (i32, i32) {
    %c0_i32 = arith.constant 0 : i32
    %c0_i32_0 = arith.constant 0 : i32
    %c0_i32_1 = arith.constant 0 : i32
    return %c0_i32, %c0_i32_0 : i32, i32
  }
  func.func @transform_15(%arg0: i32) -> (i32, i32) {
    %c0_i32 = arith.constant 0 : i32
    %c0_i32_0 = arith.constant 0 : i32
    return %arg0, %c0_i32 : i32, i32
  }
}

</mosaic_0001>

<llo_original>
// kernel: resnet_block_dyn.1
$region0: #{resnet_block_dyn.1}
  #allocation0 [shape = 'u32[]', space=smem, size = 0x4, offset = 0x4, fixed_abs, tag = 'smem constant byte address 0x4 - core index']
  #allocation1 [shape = 'u32[144,128]{1,0:T(1,128)}', space=vmem, size = 0x12000, scoped, tag = 'internal scratch']
  #allocation2 [shape = 'f32[512,64]{1,0:T(8,128)}', space=vmem, size = 0x40000, scoped, tag = 'scratch operand']
  #allocation3 [shape = 'f32[16,64]{1,0:T(8,128)}', space=vmem, size = 0x2000, scoped, tag = 'scratch operand']
  #allocation4 [shape = 'f32[64,64]{1,0:T(8,128)}', space=vmem, size = 0x8000, scoped, tag = 'scratch operand']
  #allocation5 [shape = 'f32[64,64]{1,0:T(8,128)}', space=vmem, size = 0x8000, scoped, tag = 'scratch operand']
  #allocation6 [shape = 'f32[2,64]{1,0:T(2,128)}', space=vmem, size = 0x400, scoped, tag = 'scratch operand']
  %s0 = inlined_call_operand.vmem [shape: bf16[512,49], index: 0, kind: input, shape index: {}]
  %s1 = inlined_call_operand.vmem [shape: f32[2,10], index: 1, kind: input, shape index: {}]
  %s2 = inlined_call_operand.vmem [shape: bf16[49,64], index: 2, kind: input, shape index: {}]
  %s3 = inlined_call_operand.vmem [shape: f32[1,64], index: 3, kind: input, shape index: {}]
  %s4 = inlined_call_operand.vmem [shape: bf16[9,64,64], index: 4, kind: input, shape index: {}]
  %s5 = inlined_call_operand.vmem [shape: f32[1,64], index: 5, kind: input, shape index: {}]
  %s6 = inlined_call_operand.vmem [shape: bf16[9,64,64], index: 6, kind: input, shape index: {}]
  %s7 = inlined_call_operand.vmem [shape: f32[1,64], index: 7, kind: input, shape index: {}]
  %s8 = inlined_call_operand.vmem [shape: f32[64,128], index: 8, kind: input, shape index: {}]
  %s9 = inlined_call_operand.vmem [shape: f32[10,128], index: 9, kind: input, shape index: {}]
  %s10 = inlined_call_operand.vmem [shape: f32[1,128], index: 10, kind: input, shape index: {}]
  %s11 = inlined_call_operand.vmem [shape: f32[128,128], index: 11, kind: input, shape index: {}]
  %s12 = inlined_call_operand.vmem [shape: f32[1,128], index: 12, kind: input, shape index: {}]
  %s13 = inlined_call_operand.vmem [shape: f32[128,10], index: 13, kind: input, shape index: {}]
  %s14 = inlined_call_operand.vmem [shape: f32[1,10], index: 14, kind: input, shape index: {}]
  %s15 = inlined_call_operand.hbm [shape: f32[2,10], index: 15, kind: output, shape index: {}]
  %s16 = sld [smem:[#allocation0]]
  $region77: #{resnet_block_dyn.1} parent=0
    _
  %s18 = ssub.s32 1, %s16
  %s19 = scalar_select 0, %s18, %s16
  $region1: #{resnet_block_dyn.1} parent=0
    #allocation7 [shape = 'u8[1024]{0}', space=vmem, size = 0x400, scoped, tag = 'output window, operand 0, single buffered']
    #allocation8 [shape = 's32[1]{0}', space=sflag, size = 0x4, scoped, tag = 'scoped memory for resnet_block_dyn.1']
    %20 = vsyncpa [#allocation8], 0
    // Predicated region
    $region2: #{resnet_block_dyn.1} parent=1 // pred_check
      _
    $region3: #{resnet_block_dyn.1} parent=1 // pred_check_branch
      %22 = sbr.rel (0) target = $region5
    $region4: #{resnet_block_dyn.1} parent=1 // pred_region
      _
    $region5: #{resnet_block_dyn.1} parent=1 // pred_fallthru
      _
    // Predicated region
    $region6: #{resnet_block_dyn.1} parent=1 // pred_check
      _
    $region7: #{resnet_block_dyn.1} parent=1 // pred_check_branch
      %24 = sbr.rel (0) target = $region9
    $region8: #{resnet_block_dyn.1} parent=1 // pred_region
      _
    $region9: #{resnet_block_dyn.1} parent=1 // pred_fallthru
      _
    // Predicated region
    $region10: #{resnet_block_dyn.1} parent=1 // pred_check
      _
    $region11: #{resnet_block_dyn.1} parent=1 // pred_check_branch
      %26 = sbr.rel (0) target = $region13
    $region12: #{resnet_block_dyn.1} parent=1 // pred_region
      _
    $region13: #{resnet_block_dyn.1} parent=1 // pred_fallthru
      _
    // Predicated region
    $region14: #{resnet_block_dyn.1} parent=1 // pred_check
      _
    $region15: #{resnet_block_dyn.1} parent=1 // pred_check_branch
      %28 = sbr.rel (0) target = $region17
    $region16: #{resnet_block_dyn.1} parent=1 // pred_region
      _
    $region17: #{resnet_block_dyn.1} parent=1 // pred_fallthru
      _
    // Predicated region
    $region18: #{resnet_block_dyn.1} parent=1 // pred_check
      _
    $region19: #{resnet_block_dyn.1} parent=1 // pred_check_branch
      %30 = sbr.rel (0) target = $region21
    $region20: #{resnet_block_dyn.1} parent=1 // pred_region
      _
    $region21: #{resnet_block_dyn.1} parent=1 // pred_fallthru
      _
    // Predicated region
    $region22: #{resnet_block_dyn.1} parent=1 // pred_check
      _
    $region23: #{resnet_block_dyn.1} parent=1 // pred_check_branch
      %32 = sbr.rel (0) target = $region25
    $region24: #{resnet_block_dyn.1} parent=1 // pred_region
      _
    $region25: #{resnet_block_dyn.1} parent=1 // pred_fallthru
      _
    // Predicated region
    $region26: #{resnet_block_dyn.1} parent=1 // pred_check
      _
    $region27: #{resnet_block_dyn.1} parent=1 // pred_check_branch
      %34 = sbr.rel (0) target = $region29
    $region28: #{resnet_block_dyn.1} parent=1 // pred_region
      _
    $region29: #{resnet_block_dyn.1} parent=1 // pred_fallthru
      _
    // Predicated region
    $region30: #{resnet_block_dyn.1} parent=1 // pred_check
      _
    $region31: #{resnet_block_dyn.1} parent=1 // pred_check_branch
      %36 = sbr.rel (0) target = $region33
    $region32: #{resnet_block_dyn.1} parent=1 // pred_region
      _
    $region33: #{resnet_block_dyn.1} parent=1 // pred_fallthru
      _
    // Predicated region
    $region34: #{resnet_block_dyn.1} parent=1 // pred_check
      _
    $region35: #{resnet_block_dyn.1} parent=1 // pred_check_branch
      %38 = sbr.rel (0) target = $region37
    $region36: #{resnet_block_dyn.1} parent=1 // pred_region
      _
    $region37: #{resnet_block_dyn.1} parent=1 // pred_fallthru
      _
    // Predicated region
    $region38: #{resnet_block_dyn.1} parent=1 // pred_check
      _
    $region39: #{resnet_block_dyn.1} parent=1 // pred_check_branch
      %40 = sbr.rel (0) target = $region41
    $region40: #{resnet_block_dyn.1} parent=1 // pred_region
      _
    $region41: #{resnet_block_dyn.1} parent=1 // pred_fallthru
      _
    // Predicated region
    $region42: #{resnet_block_dyn.1} parent=1 // pred_check
      _
    $region43: #{resnet_block_dyn.1} parent=1 // pred_check_branch
      %42 = sbr.rel (0) target = $region45
    $region44: #{resnet_block_dyn.1} parent=1 // pred_region
      _
    $region45: #{resnet_block_dyn.1} parent=1 // pred_fallthru
      _
    // Predicated region
    $region46: #{resnet_block_dyn.1} parent=1 // pred_check
      _
    $region47: #{resnet_block_dyn.1} parent=1 // pred_check_branch
      %44 = sbr.rel (0) target = $region49
    $region48: #{resnet_block_dyn.1} parent=1 // pred_region
      _
    $region49: #{resnet_block_dyn.1} parent=1 // pred_fallthru
      _
    // Predicated region
    $region50: #{resnet_block_dyn.1} parent=1 // pred_check
      _
    $region51: #{resnet_block_dyn.1} parent=1 // pred_check_branch
      %46 = sbr.rel (0) target = $region53
    $region52: #{resnet_block_dyn.1} parent=1 // pred_region
      _
    $region53: #{resnet_block_dyn.1} parent=1 // pred_fallthru
      _
    // Predicated region
    $region54: #{resnet_block_dyn.1} parent=1 // pred_check
      _
    $region55: #{resnet_block_dyn.1} parent=1 // pred_check_branch
      %48 = sbr.rel (0) target = $region57
    $region56: #{resnet_block_dyn.1} parent=1 // pred_region
      _
    $region57: #{resnet_block_dyn.1} parent=1 // pred_fallthru
      _
    // Predicated region
    $region58: #{resnet_block_dyn.1} parent=1 // pred_check
      _
    $region59: #{resnet_block_dyn.1} parent=1 // pred_check_branch
      %50 = sbr.rel (0) target = $region61
    $region60: #{resnet_block_dyn.1} parent=1 // pred_region
      _
    $region61: #{resnet_block_dyn.1} parent=1 // pred_fallthru
      _
    %vm52 = vcmask 523264
    %53 = vst.msk [vmem:[#allocation4] sm:$0xff] %vm52, 0.0
    %54 = vst.msk [vmem:[#allocation4 + $0x8] sm:$0xff] %vm52, 0.0
    %55 = vst.msk [vmem:[#allocation4 + $0x10] sm:$0xff] %vm52, 0.0
    %56 = vst.msk [vmem:[#allocation4 + $0x18] sm:$0xff] %vm52, 0.0
    %57 = vst.msk [vmem:[#allocation4 + $0x20] sm:$0xff] %vm52, 0.0
    %58 = vst.msk [vmem:[#allocation4 + $0x28] sm:$0xff] %vm52, 0.0
    %59 = vst.msk [vmem:[#allocation4 + $0x30] sm:$0xff] %vm52, 0.0
    %60 = vst.msk [vmem:[#allocation4 + $0x38] sm:$0xff] %vm52, 0.0
    %61 = vst.msk [vmem:[#allocation5] sm:$0xff] %vm52, 0.0
    %62 = vst.msk [vmem:[#allocation5 + $0x8] sm:$0xff] %vm52, 0.0
    %63 = vst.msk [vmem:[#allocation5 + $0x10] sm:$0xff] %vm52, 0.0
    %64 = vst.msk [vmem:[#allocation5 + $0x18] sm:$0xff] %vm52, 0.0
    %65 = vst.msk [vmem:[#allocation5 + $0x20] sm:$0xff] %vm52, 0.0
    %66 = vst.msk [vmem:[#allocation5 + $0x28] sm:$0xff] %vm52, 0.0
    %67 = vst.msk [vmem:[#allocation5 + $0x30] sm:$0xff] %vm52, 0.0
    %68 = vst.msk [vmem:[#allocation5 + $0x38] sm:$0xff] %vm52, 0.0
    %v69 = vlaneseq
    %v70 = vshrl.u32 %v69, 7
    %v71 = vadd.s32 %v70, 8
    %v72 = vadd.s32 %v70, 16
    %v73 = vadd.s32 %v70, 24
    %v74 = vadd.s32 %v70, 32
    %vm75 = vcmp.lt.s32.totalorder %v70, 0
    %v76 = vsub.s32 0, %v70
    %v77 = vsel %vm75, %v76, %v70
    %v78 = vshrl.u32 %v77, 3
    %v79 = vand.u32 %v77, 7
    %v80 = vsub.s32 0, %v79
    %v81 = vsel %vm75, %v80, %v79
    %vm82 = vcmp.lt.s32.totalorder %v71, 0
    %v83 = vsub.s32 0, %v71
    %v84 = vsel %vm82, %v83, %v71
    %v85 = vshrl.u32 %v84, 3
    %v86 = vand.u32 %v84, 7
    %v87 = vsub.s32 0, %v86
    %v88 = vsel %vm82, %v87, %v86
    %vm89 = vcmp.lt.s32.totalorder %v72, 0
    %v90 = vsub.s32 0, %v72
    %v91 = vsel %vm89, %v90, %v72
    %v92 = vshrl.u32 %v91, 3
    %v93 = vand.u32 %v91, 7
    %v94 = vsub.s32 0, %v93
    %v95 = vsel %vm89, %v94, %v93
    %vm96 = vcmp.lt.s32.totalorder %v73, 0
    %v97 = vsub.s32 0, %v73
    %v98 = vsel %vm96, %v97, %v73
    %v99 = vshrl.u32 %v98, 3
    %v100 = vand.u32 %v98, 7
    %v101 = vsub.s32 0, %v100
    %v102 = vsel %vm96, %v101, %v100
    %vm103 = vcmp.lt.s32.totalorder %v74, 0
    %v104 = vsub.s32 0, %v74
    %v105 = vsel %vm103, %v104, %v74
    %v106 = vshrl.u32 %v105, 3
    %v107 = vand.u32 %v105, 7
    %v108 = vsub.s32 0, %v107
    %v109 = vsel %vm103, %v108, %v107
    %vm110 = vcmp.ne.s32.totalorder %v81, 0
    %vm111 = vcmp.ne.s32.totalorder %v88, 0
    %vm112 = vcmp.ne.s32.totalorder %v95, 0
    %vm113 = vcmp.ne.s32.totalorder %v102, 0
    %vm114 = vcmp.ne.s32.totalorder %v109, 0
    %vm115 = vcmp.lt.s32.totalorder %v81, 0
    %vm116 = vcmp.lt.s32.totalorder %v88, 0
    %vm117 = vcmp.lt.s32.totalorder %v95, 0
    %vm118 = vcmp.lt.s32.totalorder %v102, 0
    %vm119 = vcmp.lt.s32.totalorder %v109, 0
    %vm120 = vmand %vm115, %vm110
    %vm121 = vmand %vm116, %vm111
    %vm122 = vmand %vm117, %vm112
    %vm123 = vmand %vm118, %vm113
    %vm124 = vmand %vm119, %vm114
    %v125 = vadd.s32 %v81, 8
    %v126 = vadd.s32 %v88, 8
    %v127 = vadd.s32 %v95, 8
    %v128 = vadd.s32 %v102, 8
    %v129 = vadd.s32 %v109, 8
    %v130 = vsel %vm120, %v125, %v81
    %v131 = vsel %vm121, %v126, %v88
    %v132 = vsel %vm122, %v127, %v95
    %v133 = vsel %vm123, %v128, %v102
    %v134 = vsel %vm124, %v129, %v109
    %vm135 = vcmp.lt.s32.totalorder %v130, 5
    %vm136 = vcmp.lt.s32.totalorder %v131, 5
    %vm137 = vcmp.lt.s32.totalorder %v132, 5
    %vm138 = vcmp.lt.s32.totalorder %v133, 5
    %vm139 = vcmp.lt.s32.totalorder %v134, 5
    %v140 = vld [vmem:[%s0] sm:$0xf]
    %v141 = vld [vmem:[%s0 + $0x4] sm:$0xf]
    %v142 = vld [vmem:[%s0 + $0x8] sm:$0xf]
    %v143 = vld [vmem:[%s0 + $0xc] sm:$0xf]
    %v144 = vld [vmem:[%s0 + $0x10] sm:$0xf]
    %v145 = vld [vmem:[%s0 + $0x14] sm:$0xf]
    %v146 = vld [vmem:[%s0 + $0x18] sm:$0xf]
    %v147 = vld [vmem:[%s0 + $0x1c] sm:$0xf]
    %v148 = vld [vmem:[%s0 + $0x20] sm:$0xf]
    %v149 = vld [vmem:[%s0 + $0x24] sm:$0xf]
    %v150 = vld [vmem:[%s0 + $0x28] sm:$0xf]
    %v151 = vld [vmem:[%s0 + $0x2c] sm:$0xf]
    %v152 = vld [vmem:[%s0 + $0x30] sm:$0xf]
    %v153 = vld [vmem:[%s0 + $0x34] sm:$0xf]
    %v154 = vld [vmem:[%s0 + $0x38] sm:$0xf]
    %v155 = vld [vmem:[%s0 + $0x3c] sm:$0xf]
    %v156 = vld [vmem:[%s0 + $0x40] sm:$0xf]
    %v157 = vld [vmem:[%s0 + $0x44] sm:$0xf]
    %v158 = vld [vmem:[%s0 + $0x48] sm:$0xf]
    %v159 = vld [vmem:[%s0 + $0x4c] sm:$0xf]
    %v160 = vld [vmem:[%s0 + $0x50] sm:$0xf]
    %v161 = vld [vmem:[%s0 + $0x54] sm:$0xf]
    %v162 = vld [vmem:[%s0 + $0x58] sm:$0xf]
    %v163 = vld [vmem:[%s0 + $0x5c] sm:$0xf]
    %v164 = vld [vmem:[%s0 + $0x60] sm:$0xf]
    %v165 = vld [vmem:[%s0 + $0x64] sm:$0xf]
    %v166 = vld [vmem:[%s0 + $0x68] sm:$0xf]
    %v167 = vld [vmem:[%s0 + $0x6c] sm:$0xf]
    %v168 = vld [vmem:[%s0 + $0x70] sm:$0xf]
    %v169 = vld [vmem:[%s0 + $0x74] sm:$0xf]
    %v170 = vld [vmem:[%s0 + $0x78] sm:$0xf]
    %v171 = vld [vmem:[%s0 + $0x7c] sm:$0xf]
    %v172 = vld [vmem:[%s0 + $0x80] sm:$0xf]
    %v173 = vld [vmem:[%s0 + $0x84] sm:$0xf]
    %v174 = vld [vmem:[%s0 + $0x88] sm:$0xf]
    %v175 = vld [vmem:[%s0 + $0x8c] sm:$0xf]
    %v176 = vld [vmem:[%s0 + $0x90] sm:$0xf]
    %v177 = vld [vmem:[%s0 + $0x94] sm:$0xf]
    %v178 = vld [vmem:[%s0 + $0x98] sm:$0xf]
    %v179 = vld [vmem:[%s0 + $0x9c] sm:$0xf]
    %v180 = vld [vmem:[%s0 + $0xa0] sm:$0xf]
    %v181 = vld [vmem:[%s0 + $0xa4] sm:$0xf]
    %v182 = vld [vmem:[%s0 + $0xa8] sm:$0xf]
    %v183 = vld [vmem:[%s0 + $0xac] sm:$0xf]
    %v184 = vld [vmem:[%s0 + $0xb0] sm:$0xf]
    %v185 = vld [vmem:[%s0 + $0xb4] sm:$0xf]
    %v186 = vld [vmem:[%s0 + $0xb8] sm:$0xf]
    %v187 = vld [vmem:[%s0 + $0xbc] sm:$0xf]
    %v188 = vld [vmem:[%s0 + $0xc0] sm:$0xf]
    %v189 = vld [vmem:[%s0 + $0xc4] sm:$0xf]
    %v190 = vld [vmem:[%s0 + $0xc8] sm:$0xf]
    %v191 = vld [vmem:[%s0 + $0xcc] sm:$0xf]
    %v192 = vld [vmem:[%s0 + $0xd0] sm:$0xf]
    %v193 = vld [vmem:[%s0 + $0xd4] sm:$0xf]
    %v194 = vld [vmem:[%s0 + $0xd8] sm:$0xf]
    %v195 = vld [vmem:[%s0 + $0xdc] sm:$0xf]
    %v196 = vld [vmem:[%s0 + $0xe0] sm:$0xf]
    %v197 = vld [vmem:[%s0 + $0xe4] sm:$0xf]
    %v198 = vld [vmem:[%s0 + $0xe8] sm:$0xf]
    %v199 = vld [vmem:[%s0 + $0xec] sm:$0xf]
    %v200 = vld [vmem:[%s0 + $0xf0] sm:$0xf]
    %v201 = vld [vmem:[%s0 + $0xf4] sm:$0xf]
    %v202 = vld [vmem:[%s0 + $0xf8] sm:$0xf]
    %v203 = vld [vmem:[%s0 + $0xfc] sm:$0xf]
    %v204 = vld [vmem:[%s2] sm:$0xf]
    %v205 = vld [vmem:[%s2 + $0x4] sm:$0xf]
    %v206 = vld [vmem:[%s2 + $0x8] sm:$0xf]
    %v207 = vld [vmem:[%s2 + $0xc] sm:$0xf]
    %v208 = vld [vmem:[%s2 + $0x10] sm:$0xf]
    %v209 = vld [vmem:[%s2 + $0x14] sm:$0xf]
    %v210 = vld [vmem:[%s2 + $0x18] sm:$0x1]
    %v211 = vld [vmem:[%s3] sm:$0x1]
    %v213 = vlaneseq
    %v214 = vshrl.u32 %v213, 7
    %v215 = vsub.s32 0, %v214
    %v216 = vrot.slane %v211, %v215
    %v282 = vunpack.c.l.b16 %v140
    %v283 = vunpack.c.l.b16 %v141
    %v284 = vunpack.c.l.b16 %v142
    %v285 = vunpack.c.l.b16 %v143
    %v286 = vunpack.c.l.b16 %v144
    %v287 = vunpack.c.l.b16 %v145
    %v288 = vunpack.c.l.b16 %v146
    %v289 = vunpack.c.l.b16 %v147
    %v290 = vunpack.c.l.b16 %v148
    %v291 = vunpack.c.l.b16 %v149
    %v292 = vunpack.c.l.b16 %v150
    %v293 = vunpack.c.l.b16 %v151
    %v294 = vunpack.c.l.b16 %v152
    %v295 = vunpack.c.l.b16 %v153
    %v296 = vunpack.c.l.b16 %v154
    %v297 = vunpack.c.l.b16 %v155
    %v298 = vunpack.c.l.b16 %v156
    %v299 = vunpack.c.l.b16 %v157
    %v300 = vunpack.c.l.b16 %v158
    %v301 = vunpack.c.l.b16 %v159
    %v302 = vunpack.c.l.b16 %v160
    %v303 = vunpack.c.l.b16 %v161
    %v304 = vunpack.c.l.b16 %v162
    %v305 = vunpack.c.l.b16 %v163
    %v306 = vunpack.c.l.b16 %v164
    %v307 = vunpack.c.l.b16 %v165
    %v308 = vunpack.c.l.b16 %v166
    %v309 = vunpack.c.l.b16 %v167
    %v310 = vunpack.c.l.b16 %v168
    %v311 = vunpack.c.l.b16 %v169
    %v312 = vunpack.c.l.b16 %v170
    %v313 = vunpack.c.l.b16 %v171
    %v314 = vunpack.c.l.b16 %v172
    %v315 = vunpack.c.l.b16 %v173
    %v316 = vunpack.c.l.b16 %v174
    %v317 = vunpack.c.l.b16 %v175
    %v318 = vunpack.c.l.b16 %v176
    %v319 = vunpack.c.l.b16 %v177
    %v320 = vunpack.c.l.b16 %v178
    %v321 = vunpack.c.l.b16 %v179
    %v322 = vunpack.c.l.b16 %v180
    %v323 = vunpack.c.l.b16 %v181
    %v324 = vunpack.c.l.b16 %v182
    %v325 = vunpack.c.l.b16 %v183
    %v326 = vunpack.c.l.b16 %v184
    %v327 = vunpack.c.l.b16 %v185
    %v328 = vunpack.c.l.b16 %v186
    %v329 = vunpack.c.l.b16 %v187
    %v330 = vunpack.c.l.b16 %v188
    %v331 = vunpack.c.l.b16 %v189
    %v332 = vunpack.c.l.b16 %v190
    %v333 = vunpack.c.l.b16 %v191
    %v334 = vunpack.c.l.b16 %v192
    %v335 = vunpack.c.l.b16 %v193
    %v336 = vunpack.c.l.b16 %v194
    %v337 = vunpack.c.l.b16 %v195
    %v338 = vunpack.c.l.b16 %v196
    %v339 = vunpack.c.l.b16 %v197
    %v340 = vunpack.c.l.b16 %v198
    %v341 = vunpack.c.l.b16 %v199
    %v342 = vunpack.c.l.b16 %v200
    %v343 = vunpack.c.l.b16 %v201
    %v344 = vunpack.c.l.b16 %v202
    %v345 = vunpack.c.l.b16 %v203
    %v346 = vpack.c.b16 %v283, %v282
    %v347 = vpack.c.b16 %v285, %v284
    %v348 = vpack.c.b16 %v287, %v286
    %v349 = vpack.c.b16 %v289, %v288
    %v350 = vpack.c.b16 %v291, %v290
    %v351 = vpack.c.b16 %v293, %v292
    %v352 = vpack.c.b16 %v295, %v294
    %v353 = vpack.c.b16 %v297, %v296
    %v354 = vpack.c.b16 %v299, %v298
    %v355 = vpack.c.b16 %v301, %v300
    %v356 = vpack.c.b16 %v303, %v302
    %v357 = vpack.c.b16 %v305, %v304
    %v358 = vpack.c.b16 %v307, %v306
    %v359 = vpack.c.b16 %v309, %v308
    %v360 = vpack.c.b16 %v311, %v310
    %v361 = vpack.c.b16 %v313, %v312
    %v362 = vpack.c.b16 %v315, %v314
    %v363 = vpack.c.b16 %v317, %v316
    %v364 = vpack.c.b16 %v319, %v318
    %v365 = vpack.c.b16 %v321, %v320
    %v366 = vpack.c.b16 %v323, %v322
    %v367 = vpack.c.b16 %v325, %v324
    %v368 = vpack.c.b16 %v327, %v326
    %v369 = vpack.c.b16 %v329, %v328
    %v370 = vpack.c.b16 %v331, %v330
    %v371 = vpack.c.b16 %v333, %v332
    %v372 = vpack.c.b16 %v335, %v334
    %v373 = vpack.c.b16 %v337, %v336
    %v374 = vpack.c.b16 %v339, %v338
    %v375 = vpack.c.b16 %v341, %v340
    %v376 = vpack.c.b16 %v343, %v342
    %v377 = vpack.c.b16 %v345, %v344
    %v385 = vunpack.c.l.b16 %v204
    %v386 = vunpack.c.l.b16 %v205
    %v387 = vunpack.c.l.b16 %v206
    %v388 = vunpack.c.l.b16 %v207
    %v389 = vunpack.c.l.b16 %v208
    %v390 = vunpack.c.l.b16 %v209
    %v391 = vunpack.c.l.b16 %v210
    %v392 = vpack.c.b16 %v386, %v385
    %v393 = vpack.c.b16 %v388, %v387
    %v394 = vpack.c.b16 %v390, %v389
    %v395 = vpack.c.b16 %v391, %v391
    %vm399 = vcmask 400384
    %v401 = vsel %vm399, %v346, 0
    %v404 = vsel %vm399, %v347, 0
    %v407 = vsel %vm399, %v348, 0
    %v410 = vsel %vm399, %v349, 0
    %v413 = vsel %vm399, %v350, 0
    %v416 = vsel %vm399, %v351, 0
    %v419 = vsel %vm399, %v352, 0
    %v422 = vsel %vm399, %v353, 0
    %v425 = vsel %vm399, %v354, 0
    %v428 = vsel %vm399, %v355, 0
    %v431 = vsel %vm399, %v356, 0
    %v434 = vsel %vm399, %v357, 0
    %v437 = vsel %vm399, %v358, 0
    %v440 = vsel %vm399, %v359, 0
    %v443 = vsel %vm399, %v360, 0
    %v446 = vsel %vm399, %v361, 0
    %v449 = vsel %vm399, %v362, 0
    %v452 = vsel %vm399, %v363, 0
    %v455 = vsel %vm399, %v364, 0
    %v458 = vsel %vm399, %v365, 0
    %v461 = vsel %vm399, %v366, 0
    %v464 = vsel %vm399, %v367, 0
    %v467 = vsel %vm399, %v368, 0
    %v470 = vsel %vm399, %v369, 0
    %v473 = vsel %vm399, %v370, 0
    %v476 = vsel %vm399, %v371, 0
    %v479 = vsel %vm399, %v372, 0
    %v482 = vsel %vm399, %v373, 0
    %v485 = vsel %vm399, %v374, 0
    %v488 = vsel %vm399, %v375, 0
    %v491 = vsel %vm399, %v376, 0
    %v494 = vsel %vm399, %v377, 0
    %vm496 = vcmask 1040384
    %v497 = vsel 0, 4294967295, 65535
    %v498 = vsel %vm496, %v497, 0
    %v500 = vand.u32 %v395, %v498
    %502 = vmatprep.subr.bf16.mxu0 0
    %503 = vmatpush1.bf16.msra.mxu0 %v392
    %504 = vmatprep.subr.bf16.mxu0 0
    %505 = vmatpush1.bf16.msra.mxu0 %v393
    %506 = vmatprep.subr.bf16.mxu0 0
    %507 = vmatpush1.bf16.msra.mxu0 %v394
    %508 = vmatprep.subr.bf16.mxu0 0
    %509 = vmatpush1.bf16.msra.mxu0 %v500
    %510 = vmatprep.subr.bf16.mxu0 0
    %511 = vmatpush1.bf16.msra.mxu0 0
    %512 = vmatprep.subr.bf16.mxu0 0
    %513 = vmatpush1.bf16.msra.mxu0 0
    %514 = vmatprep.subr.bf16.mxu0 0
    %515 = vmatpush1.bf16.msra.mxu0 0
    %516 = vmatprep.subr.bf16.mxu0 0
    %517 = vmatpush1.bf16.msra.mxu0 0
    %518 = vmatprep.subr.bf16.mxu0 0
    %519 = vmatpush1.bf16.msra.mxu0 0
    %520 = vmatprep.subr.bf16.mxu0 0
    %521 = vmatpush1.bf16.msra.mxu0 0
    %522 = vmatprep.subr.bf16.mxu0 0
    %523 = vmatpush1.bf16.msra.mxu0 0
    %524 = vmatprep.subr.bf16.mxu0 0
    %525 = vmatpush1.bf16.msra.mxu0 0
    %526 = vmatprep.subr.bf16.mxu0 0
    %527 = vmatpush1.bf16.msra.mxu0 0
    %528 = vmatprep.subr.bf16.mxu0 0
    %529 = vmatpush1.bf16.msra.mxu0 0
    %530 = vmatprep.subr.bf16.mxu0 0
    %531 = vmatpush1.bf16.msra.mxu0 0
    %532 = vmatprep.subr.bf16.mxu0 0
    %533 = vmatpush1.bf16.msra.mxu0 0
    %534 = vmatprep.mubr.bf16.mxu0 0
    %535 = vmatmul.mubr.bf16.gmra.mrb[0].mxu0 %v401
    %v536 = vpop.f32.mrb[0].mxu0
    %v537 = vadd.f32 %v216, %v536
    %v538 = vpop.f32.mrb[0].mxu0
    %v539 = vpop.f32.mrb[0].mxu0
    %v540 = vadd.f32 %v216, %v539
    %v541 = vpop.f32.mrb[0].mxu0
    %542 = vmatprep.mubr.bf16.mxu0 0
    %543 = vmatmul.mubr.bf16.gmra.mrb[0].mxu0 %v404
    %v544 = vpop.f32.mrb[0].mxu0
    %v545 = vadd.f32 %v216, %v544
    %v546 = vpop.f32.mrb[0].mxu0
    %v547 = vpop.f32.mrb[0].mxu0
    %v548 = vadd.f32 %v216, %v547
    %v549 = vpop.f32.mrb[0].mxu0
    %550 = vmatprep.mubr.bf16.mxu0 0
    %551 = vmatmul.mubr.bf16.gmra.mrb[0].mxu0 %v407
    %v552 = vpop.f32.mrb[0].mxu0
    %v553 = vadd.f32 %v216, %v552
    %v554 = vpop.f32.mrb[0].mxu0
    %v555 = vpop.f32.mrb[0].mxu0
    %v556 = vadd.f32 %v216, %v555
    %v557 = vpop.f32.mrb[0].mxu0
    %558 = vmatprep.mubr.bf16.mxu0 0
    %559 = vmatmul.mubr.bf16.gmra.mrb[0].mxu0 %v410
    %v560 = vpop.f32.mrb[0].mxu0
    %v561 = vadd.f32 %v216, %v560
    %v562 = vpop.f32.mrb[0].mxu0
    %v563 = vpop.f32.mrb[0].mxu0
    %v564 = vadd.f32 %v216, %v563
    %v565 = vpop.f32.mrb[0].mxu0
    %566 = vmatprep.mubr.bf16.mxu0 0
    %567 = vmatmul.mubr.bf16.gmra.mrb[0].mxu0 %v413
    %v568 = vpop.f32.mrb[0].mxu0
    %v569 = vadd.f32 %v216, %v568
    %v570 = vpop.f32.mrb[0].mxu0
    %v571 = vpop.f32.mrb[0].mxu0
    %v572 = vadd.f32 %v216, %v571
    %v573 = vpop.f32.mrb[0].mxu0
    %574 = vmatprep.mubr.bf16.mxu0 0
    %575 = vmatmul.mubr.bf16.gmra.mrb[0].mxu0 %v416
    %v576 = vpop.f32.mrb[0].mxu0
    %v577 = vadd.f32 %v216, %v576
    %v578 = vpop.f32.mrb[0].mxu0
    %v579 = vpop.f32.mrb[0].mxu0
    %v580 = vadd.f32 %v216, %v579
    %v581 = vpop.f32.mrb[0].mxu0
    %582 = vmatprep.mubr.bf16.mxu0 0
    %583 = vmatmul.mubr.bf16.gmra.mrb[0].mxu0 %v419
    %v584 = vpop.f32.mrb[0].mxu0
    %v585 = vadd.f32 %v216, %v584
    %v586 = vpop.f32.mrb[0].mxu0
    %v587 = vpop.f32.mrb[0].mxu0
    %v588 = vadd.f32 %v216, %v587
    %v589 = vpop.f32.mrb[0].mxu0
    %590 = vmatprep.mubr.bf16.mxu0 0
    %591 = vmatmul.mubr.bf16.gmra.mrb[0].mxu0 %v422
    %v592 = vpop.f32.mrb[0].mxu0
    %v593 = vadd.f32 %v216, %v592
    %v594 = vpop.f32.mrb[0].mxu0
    %v595 = vpop.f32.mrb[0].mxu0
    %v596 = vadd.f32 %v216, %v595
    %v597 = vpop.f32.mrb[0].mxu0
    %598 = vmatprep.mubr.bf16.mxu0 0
    %599 = vmatmul.mubr.bf16.gmra.mrb[0].mxu0 %v425
    %v600 = vpop.f32.mrb[0].mxu0
    %v601 = vadd.f32 %v216, %v600
    %v602 = vpop.f32.mrb[0].mxu0
    %v603 = vpop.f32.mrb[0].mxu0
    %v604 = vadd.f32 %v216, %v603
    %v605 = vpop.f32.mrb[0].mxu0
    %606 = vmatprep.mubr.bf16.mxu0 0
    %607 = vmatmul.mubr.bf16.gmra.mrb[0].mxu0 %v428
    %v608 = vpop.f32.mrb[0].mxu0
    %v609 = vadd.f32 %v216, %v608
    %v610 = vpop.f32.mrb[0].mxu0
    %v611 = vpop.f32.mrb[0].mxu0
    %v612 = vadd.f32 %v216, %v611
    %v613 = vpop.f32.mrb[0].mxu0
    %614 = vmatprep.mubr.bf16.mxu0 0
    %615 = vmatmul.mubr.bf16.gmra.mrb[0].mxu0 %v431
    %v616 = vpop.f32.mrb[0].mxu0
    %v617 = vadd.f32 %v216, %v616
    %v618 = vpop.f32.mrb[0].mxu0
    %v619 = vpop.f32.mrb[0].mxu0
    %v620 = vadd.f32 %v216, %v619
    %v621 = vpop.f32.mrb[0].mxu0
    %622 = vmatprep.mubr.bf16.mxu0 0
    %623 = vmatmul.mubr.bf16.gmra.mrb[0].mxu0 %v434
    %v624 = vpop.f32.mrb[0].mxu0
    %v625 = vadd.f32 %v216, %v624
    %v626 = vpop.f32.mrb[0].mxu0
    %v627 = vpop.f32.mrb[0].mxu0
    %v628 = vadd.f32 %v216, %v627
    %v629 = vpop.f32.mrb[0].mxu0
    %630 = vmatprep.mubr.bf16.mxu0 0
    %631 = vmatmul.mubr.bf16.gmra.mrb[0].mxu0 %v437
    %v632 = vpop.f32.mrb[0].mxu0
    %v633 = vadd.f32 %v216, %v632
    %v634 = vpop.f32.mrb[0].mxu0
    %v635 = vpop.f32.mrb[0].mxu0
    %v636 = vadd.f32 %v216, %v635
    %v637 = vpop.f32.mrb[0].mxu0
    %638 = vmatprep.mubr.bf16.mxu0 0
    %639 = vmatmul.mubr.bf16.gmra.mrb[0].mxu0 %v440
    %v640 = vpop.f32.mrb[0].mxu0
    %v641 = vadd.f32 %v216, %v640
    %v642 = vpop.f32.mrb[0].mxu0
    %v643 = vpop.f32.mrb[0].mxu0
    %v644 = vadd.f32 %v216, %v643
    %v645 = vpop.f32.mrb[0].mxu0
    %646 = vmatprep.mubr.bf16.mxu0 0
    %647 = vmatmul.mubr.bf16.gmra.mrb[0].mxu0 %v443
    %v648 = vpop.f32.mrb[0].mxu0
    %v649 = vadd.f32 %v216, %v648
    %v650 = vpop.f32.mrb[0].mxu0
    %v651 = vpop.f32.mrb[0].mxu0
    %v652 = vadd.f32 %v216, %v651
    %v653 = vpop.f32.mrb[0].mxu0
    %654 = vmatprep.mubr.bf16.mxu0 0
    %655 = vmatmul.mubr.bf16.gmra.mrb[0].mxu0 %v446
    %v656 = vpop.f32.mrb[0].mxu0
    %v657 = vadd.f32 %v216, %v656
    %v658 = vpop.f32.mrb[0].mxu0
    %v659 = vpop.f32.mrb[0].mxu0
    %v660 = vadd.f32 %v216, %v659
    %v661 = vpop.f32.mrb[0].mxu0
    %662 = vmatprep.mubr.bf16.mxu0 0
    %663 = vmatmul.mubr.bf16.gmra.mrb[0].mxu0 %v449
    %v664 = vpop.f32.mrb[0].mxu0
    %v665 = vadd.f32 %v216, %v664
    %v666 = vpop.f32.mrb[0].mxu0
    %v667 = vpop.f32.mrb[0].mxu0
    %v668 = vadd.f32 %v216, %v667
    %v669 = vpop.f32.mrb[0].mxu0
    %670 = vmatprep.mubr.bf16.mxu0 0
    %671 = vmatmul.mubr.bf16.gmra.mrb[0].mxu0 %v452
    %v672 = vpop.f32.mrb[0].mxu0
    %v673 = vadd.f32 %v216, %v672
    %v674 = vpop.f32.mrb[0].mxu0
    %v675 = vpop.f32.mrb[0].mxu0
    %v676 = vadd.f32 %v216, %v675
    %v677 = vpop.f32.mrb[0].mxu0
    %678 = vmatprep.mubr.bf16.mxu0 0
    %679 = vmatmul.mubr.bf16.gmra.mrb[0].mxu0 %v455
    %v680 = vpop.f32.mrb[0].mxu0
    %v681 = vadd.f32 %v216, %v680
    %v682 = vpop.f32.mrb[0].mxu0
    %v683 = vpop.f32.mrb[0].mxu0
    %v684 = vadd.f32 %v216, %v683
    %v685 = vpop.f32.mrb[0].mxu0
    %686 = vmatprep.mubr.bf16.mxu0 0
    %687 = vmatmul.mubr.bf16.gmra.mrb[0].mxu0 %v458
    %v688 = vpop.f32.mrb[0].mxu0
    %v689 = vadd.f32 %v216, %v688
    %v690 = vpop.f32.mrb[0].mxu0
    %v691 = vpop.f32.mrb[0].mxu0
    %v692 = vadd.f32 %v216, %v691
    %v693 = vpop.f32.mrb[0].mxu0
    %694 = vmatprep.mubr.bf16.mxu0 0
    %695 = vmatmul.mubr.bf16.gmra.mrb[0].mxu0 %v461
    %v696 = vpop.f32.mrb[0].mxu0
    %v697 = vadd.f32 %v216, %v696
    %v698 = vpop.f32.mrb[0].mxu0
    %v699 = vpop.f32.mrb[0].mxu0
    %v700 = vadd.f32 %v216, %v699
    %v701 = vpop.f32.mrb[0].mxu0
    %702 = vmatprep.mubr.bf16.mxu0 0
    %703 = vmatmul.mubr.bf16.gmra.mrb[0].mxu0 %v464
    %v704 = vpop.f32.mrb[0].mxu0
    %v705 = vadd.f32 %v216, %v704
    %v706 = vpop.f32.mrb[0].mxu0
    %v707 = vpop.f32.mrb[0].mxu0
    %v708 = vadd.f32 %v216, %v707
    %v709 = vpop.f32.mrb[0].mxu0
    %710 = vmatprep.mubr.bf16.mxu0 0
    %711 = vmatmul.mubr.bf16.gmra.mrb[0].mxu0 %v467
    %v712 = vpop.f32.mrb[0].mxu0
    %v713 = vadd.f32 %v216, %v712
    %v714 = vpop.f32.mrb[0].mxu0
    %v715 = vpop.f32.mrb[0].mxu0
    %v716 = vadd.f32 %v216, %v715
    %v717 = vpop.f32.mrb[0].mxu0
    %718 = vmatprep.mubr.bf16.mxu0 0
    %719 = vmatmul.mubr.bf16.gmra.mrb[0].mxu0 %v470
    %v720 = vpop.f32.mrb[0].mxu0
    %v721 = vadd.f32 %v216, %v720
    %v722 = vpop.f32.mrb[0].mxu0
    %v723 = vpop.f32.mrb[0].mxu0
    %v724 = vadd.f32 %v216, %v723
    %v725 = vpop.f32.mrb[0].mxu0
    %726 = vmatprep.mubr.bf16.mxu0 0
    %727 = vmatmul.mubr.bf16.gmra.mrb[0].mxu0 %v473
    %v728 = vpop.f32.mrb[0].mxu0
    %v729 = vadd.f32 %v216, %v728
    %v730 = vpop.f32.mrb[0].mxu0
    %v731 = vpop.f32.mrb[0].mxu0
    %v732 = vadd.f32 %v216, %v731
    %v733 = vpop.f32.mrb[0].mxu0
    %734 = vmatprep.mubr.bf16.mxu0 0
    %735 = vmatmul.mubr.bf16.gmra.mrb[0].mxu0 %v476
    %v736 = vpop.f32.mrb[0].mxu0
    %v737 = vadd.f32 %v216, %v736
    %v738 = vpop.f32.mrb[0].mxu0
    %v739 = vpop.f32.mrb[0].mxu0
    %v740 = vadd.f32 %v216, %v739
    %v741 = vpop.f32.mrb[0].mxu0
    %742 = vmatprep.mubr.bf16.mxu0 0
    %743 = vmatmul.mubr.bf16.gmra.mrb[0].mxu0 %v479
    %v744 = vpop.f32.mrb[0].mxu0
    %v745 = vadd.f32 %v216, %v744
    %v746 = vpop.f32.mrb[0].mxu0
    %v747 = vpop.f32.mrb[0].mxu0
    %v748 = vadd.f32 %v216, %v747
    %v749 = vpop.f32.mrb[0].mxu0
    %750 = vmatprep.mubr.bf16.mxu0 0
    %751 = vmatmul.mubr.bf16.gmra.mrb[0].mxu0 %v482
    %v752 = vpop.f32.mrb[0].mxu0
    %v753 = vadd.f32 %v216, %v752
    %v754 = vpop.f32.mrb[0].mxu0
    %v755 = vpop.f32.mrb[0].mxu0
    %v756 = vadd.f32 %v216, %v755
    %v757 = vpop.f32.mrb[0].mxu0
    %758 = vmatprep.mubr.bf16.mxu0 0
    %759 = vmatmul.mubr.bf16.gmra.mrb[0].mxu0 %v485
    %v760 = vpop.f32.mrb[0].mxu0
    %v761 = vadd.f32 %v216, %v760
    %v762 = vpop.f32.mrb[0].mxu0
    %v763 = vpop.f32.mrb[0].mxu0
    %v764 = vadd.f32 %v216, %v763
    %v765 = vpop.f32.mrb[0].mxu0
    %766 = vmatprep.mubr.bf16.mxu0 0
    %767 = vmatmul.mubr.bf16.gmra.mrb[0].mxu0 %v488
    %v768 = vpop.f32.mrb[0].mxu0
    %v769 = vadd.f32 %v216, %v768
    %v770 = vpop.f32.mrb[0].mxu0
    %v771 = vpop.f32.mrb[0].mxu0
    %v772 = vadd.f32 %v216, %v771
    %v773 = vpop.f32.mrb[0].mxu0
    %774 = vmatprep.mubr.bf16.mxu0 0
    %775 = vmatmul.mubr.bf16.gmra.mrb[0].mxu0 %v491
    %v776 = vpop.f32.mrb[0].mxu0
    %v777 = vadd.f32 %v216, %v776
    %v778 = vpop.f32.mrb[0].mxu0
    %v779 = vpop.f32.mrb[0].mxu0
    %v780 = vadd.f32 %v216, %v779
    %v781 = vpop.f32.mrb[0].mxu0
    %782 = vmatprep.mubr.bf16.mxu0 0
    %783 = vmatmul.mubr.bf16.gmra.mrb[0].mxu0 %v494
    %v784 = vpop.f32.mrb[0].mxu0
    %v785 = vadd.f32 %v216, %v784
    %v786 = vpop.f32.mrb[0].mxu0
    %v787 = vpop.f32.mrb[0].mxu0
    %v788 = vadd.f32 %v216, %v787
    %v789 = vpop.f32.mrb[0].mxu0
    %790 = vdwg.mxu0
    %v791 = vmax.f32 %v537, 0.0
    %v792 = vmax.f32 %v540, 0.0
    %v793 = vmax.f32 %v545, 0.0
    %v794 = vmax.f32 %v548, 0.0
    %v795 = vmax.f32 %v553, 0.0
    %v796 = vmax.f32 %v556, 0.0
    %v797 = vmax.f32 %v561, 0.0
    %v798 = vmax.f32 %v564, 0.0
    %v799 = vmax.f32 %v569, 0.0
    %v800 = vmax.f32 %v572, 0.0
    %v801 = vmax.f32 %v577, 0.0
    %v802 = vmax.f32 %v580, 0.0
    %v803 = vmax.f32 %v585, 0.0
    %v804 = vmax.f32 %v588, 0.0
    %v805 = vmax.f32 %v593, 0.0
    %v806 = vmax.f32 %v596, 0.0
    %v807 = vmax.f32 %v601, 0.0
    %v808 = vmax.f32 %v604, 0.0
    %v809 = vmax.f32 %v609, 0.0
    %v810 = vmax.f32 %v612, 0.0
    %v811 = vmax.f32 %v617, 0.0
    %v812 = vmax.f32 %v620, 0.0
    %v813 = vmax.f32 %v625, 0.0
    %v814 = vmax.f32 %v628, 0.0
    %v815 = vmax.f32 %v633, 0.0
    %v816 = vmax.f32 %v636, 0.0
    %v817 = vmax.f32 %v641, 0.0
    %v818 = vmax.f32 %v644, 0.0
    %v819 = vmax.f32 %v649, 0.0
    %v820 = vmax.f32 %v652, 0.0
    %v821 = vmax.f32 %v657, 0.0
    %v822 = vmax.f32 %v660, 0.0
    %v823 = vmax.f32 %v665, 0.0
    %v824 = vmax.f32 %v668, 0.0
    %v825 = vmax.f32 %v673, 0.0
    %v826 = vmax.f32 %v676, 0.0
    %v827 = vmax.f32 %v681, 0.0
    %v828 = vmax.f32 %v684, 0.0
    %v829 = vmax.f32 %v689, 0.0
    %v830 = vmax.f32 %v692, 0.0
    %v831 = vmax.f32 %v697, 0.0
    %v832 = vmax.f32 %v700, 0.0
    %v833 = vmax.f32 %v705, 0.0
    %v834 = vmax.f32 %v708, 0.0
    %v835 = vmax.f32 %v713, 0.0
    %v836 = vmax.f32 %v716, 0.0
    %v837 = vmax.f32 %v721, 0.0
    %v838 = vmax.f32 %v724, 0.0
    %v839 = vmax.f32 %v729, 0.0
    %v840 = vmax.f32 %v732, 0.0
    %v841 = vmax.f32 %v737, 0.0
    %v842 = vmax.f32 %v740, 0.0
    %v843 = vmax.f32 %v745, 0.0
    %v844 = vmax.f32 %v748, 0.0
    %v845 = vmax.f32 %v753, 0.0
    %v846 = vmax.f32 %v756, 0.0
    %v847 = vmax.f32 %v761, 0.0
    %v848 = vmax.f32 %v764, 0.0
    %v849 = vmax.f32 %v769, 0.0
    %v850 = vmax.f32 %v772, 0.0
    %v851 = vmax.f32 %v777, 0.0
    %v852 = vmax.f32 %v780, 0.0
    %v853 = vmax.f32 %v785, 0.0
    %v854 = vmax.f32 %v788, 0.0
    %855 = vst.msk [vmem:[#allocation2] sm:$0xff] %vm52, %v791
    %856 = vst.msk [vmem:[#allocation2 + $0x8] sm:$0xff] %vm52, %v792
    %857 = vst.msk [vmem:[#allocation2 + $0x10] sm:$0xff] %vm52, %v793
    %858 = vst.msk [vmem:[#allocation2 + $0x18] sm:$0xff] %vm52, %v794
    %859 = vst.msk [vmem:[#allocation2 + $0x20] sm:$0xff] %vm52, %v795
    %860 = vst.msk [vmem:[#allocation2 + $0x28] sm:$0xff] %vm52, %v796
    %861 = vst.msk [vmem:[#allocation2 + $0x30] sm:$0xff] %vm52, %v797
    %862 = vst.msk [vmem:[#allocation2 + $0x38] sm:$0xff] %vm52, %v798
    %863 = vst.msk [vmem:[#allocation2 + $0x40] sm:$0xff] %vm52, %v799
    %864 = vst.msk [vmem:[#allocation2 + $0x48] sm:$0xff] %vm52, %v800
    %865 = vst.msk [vmem:[#allocation2 + $0x50] sm:$0xff] %vm52, %v801
    %866 = vst.msk [vmem:[#allocation2 + $0x58] sm:$0xff] %vm52, %v802
    %867 = vst.msk [vmem:[#allocation2 + $0x60] sm:$0xff] %vm52, %v803
    %868 = vst.msk [vmem:[#allocation2 + $0x68] sm:$0xff] %vm52, %v804
    %869 = vst.msk [vmem:[#allocation2 + $0x70] sm:$0xff] %vm52, %v805
    %870 = vst.msk [vmem:[#allocation2 + $0x78] sm:$0xff] %vm52, %v806
    %871 = vst.msk [vmem:[#allocation2 + $0x80] sm:$0xff] %vm52, %v807
    %872 = vst.msk [vmem:[#allocation2 + $0x88] sm:$0xff] %vm52, %v808
    %873 = vst.msk [vmem:[#allocation2 + $0x90] sm:$0xff] %vm52, %v809
    %874 = vst.msk [vmem:[#allocation2 + $0x98] sm:$0xff] %vm52, %v810
    %875 = vst.msk [vmem:[#allocation2 + $0xa0] sm:$0xff] %vm52, %v811
    %876 = vst.msk [vmem:[#allocation2 + $0xa8] sm:$0xff] %vm52, %v812
    %877 = vst.msk [vmem:[#allocation2 + $0xb0] sm:$0xff] %vm52, %v813
    %878 = vst.msk [vmem:[#allocation2 + $0xb8] sm:$0xff] %vm52, %v814
    %879 = vst.msk [vmem:[#allocation2 + $0xc0] sm:$0xff] %vm52, %v815
    %880 = vst.msk [vmem:[#allocation2 + $0xc8] sm:$0xff] %vm52, %v816
    %881 = vst.msk [vmem:[#allocation2 + $0xd0] sm:$0xff] %vm52, %v817
    %882 = vst.msk [vmem:[#allocation2 + $0xd8] sm:$0xff] %vm52, %v818
    %883 = vst.msk [vmem:[#allocation2 + $0xe0] sm:$0xff] %vm52, %v819
    %884 = vst.msk [vmem:[#allocation2 + $0xe8] sm:$0xff] %vm52, %v820
    %885 = vst.msk [vmem:[#allocation2 + $0xf0] sm:$0xff] %vm52, %v821
    %886 = vst.msk [vmem:[#allocation2 + $0xf8] sm:$0xff] %vm52, %v822
    %887 = vst.msk [vmem:[#allocation2 + $0x100] sm:$0xff] %vm52, %v823
    %888 = vst.msk [vmem:[#allocation2 + $0x108] sm:$0xff] %vm52, %v824
    %889 = vst.msk [vmem:[#allocation2 + $0x110] sm:$0xff] %vm52, %v825
    %890 = vst.msk [vmem:[#allocation2 + $0x118] sm:$0xff] %vm52, %v826
    %891 = vst.msk [vmem:[#allocation2 + $0x120] sm:$0xff] %vm52, %v827
    %892 = vst.msk [vmem:[#allocation2 + $0x128] sm:$0xff] %vm52, %v828
    %893 = vst.msk [vmem:[#allocation2 + $0x130] sm:$0xff] %vm52, %v829
    %894 = vst.msk [vmem:[#allocation2 + $0x138] sm:$0xff] %vm52, %v830
    %895 = vst.msk [vmem:[#allocation2 + $0x140] sm:$0xff] %vm52, %v831
    %896 = vst.msk [vmem:[#allocation2 + $0x148] sm:$0xff] %vm52, %v832
    %897 = vst.msk [vmem:[#allocation2 + $0x150] sm:$0xff] %vm52, %v833
    %898 = vst.msk [vmem:[#allocation2 + $0x158] sm:$0xff] %vm52, %v834
    %899 = vst.msk [vmem:[#allocation2 + $0x160] sm:$0xff] %vm52, %v835
    %900 = vst.msk [vmem:[#allocation2 + $0x168] sm:$0xff] %vm52, %v836
    %901 = vst.msk [vmem:[#allocation2 + $0x170] sm:$0xff] %vm52, %v837
    %902 = vst.msk [vmem:[#allocation2 + $0x178] sm:$0xff] %vm52, %v838
    %903 = vst.msk [vmem:[#allocation2 + $0x180] sm:$0xff] %vm52, %v839
    %904 = vst.msk [vmem:[#allocation2 + $0x188] sm:$0xff] %vm52, %v840
    %905 = vst.msk [vmem:[#allocation2 + $0x190] sm:$0xff] %vm52, %v841
    %906 = vst.msk [vmem:[#allocation2 + $0x198] sm:$0xff] %vm52, %v842
    %907 = vst.msk [vmem:[#allocation2 + $0x1a0] sm:$0xff] %vm52, %v843
    %908 = vst.msk [vmem:[#allocation2 + $0x1a8] sm:$0xff] %vm52, %v844
    %909 = vst.msk [vmem:[#allocation2 + $0x1b0] sm:$0xff] %vm52, %v845
    %910 = vst.msk [vmem:[#allocation2 + $0x1b8] sm:$0xff] %vm52, %v846
    %911 = vst.msk [vmem:[#allocation2 + $0x1c0] sm:$0xff] %vm52, %v847
    %912 = vst.msk [vmem:[#allocation2 + $0x1c8] sm:$0xff] %vm52, %v848
    %913 = vst.msk [vmem:[#allocation2 + $0x1d0] sm:$0xff] %vm52, %v849
    %914 = vst.msk [vmem:[#allocation2 + $0x1d8] sm:$0xff] %vm52, %v850
    %915 = vst.msk [vmem:[#allocation2 + $0x1e0] sm:$0xff] %vm52, %v851
    %916 = vst.msk [vmem:[#allocation2 + $0x1e8] sm:$0xff] %vm52, %v852
    %917 = vst.msk [vmem:[#allocation2 + $0x1f0] sm:$0xff] %vm52, %v853
    %918 = vst.msk [vmem:[#allocation2 + $0x1f8] sm:$0xff] %vm52, %v854
    loop: start=0, step=1, limit=2
    $region62: #{resnet_block_dyn.1} parent=1 // loop_pre_header
      _
    $region63: #{resnet_block_dyn.1} parent=1 // loop_header
      %s920 = sphi 0, %s924
      %p921 = scmp.ge.s32.totalorder %s920, 2
    $region64: #{resnet_block_dyn.1} parent=1 // loop_header_branch
      %923 = sbr.rel (%p921) target = $region68
    $region65: #{resnet_block_dyn.1} parent=1 // loop_body
      %s925 = smul.u32 %s920, 256
      %s926 = scalar_lea.vmem [#allocation2], %s925
      %v927 = vld [vmem:[%s926] sm:$0xff]
      %v928 = vld [vmem:[%s926 + $0x8] sm:$0xff]
      %s929 = sadd.s32 %s925, 16
      %s930 = scalar_lea.vmem [#allocation2], %s929
      %v931 = vld [vmem:[%s930] sm:$0xff]
      %v932 = vld [vmem:[%s930 + $0x8] sm:$0xff]
      %v933 = vmax.f32 %v927, %v931
      %v934 = vmax.f32 %v928, %v932
      %s935 = sadd.s32 %s925, 32
      %s936 = scalar_lea.vmem [#allocation2], %s935
      %v937 = vld [vmem:[%s936] sm:$0xff]
      %v938 = vld [vmem:[%s936 + $0x8] sm:$0xff]
      %v939 = vmax.f32 %v933, %v937
      %v940 = vmax.f32 %v934, %v938
      %s941 = sadd.s32 %s925, 48
      %s942 = scalar_lea.vmem [#allocation2], %s941
      %v943 = vld [vmem:[%s942] sm:$0xff]
      %v944 = vld [vmem:[%s942 + $0x8] sm:$0xff]
      %v945 = vmax.f32 %v939, %v943
      %v946 = vmax.f32 %v940, %v944
      %s947 = sadd.s32 %s925, 64
      %s948 = scalar_lea.vmem [#allocation2], %s947
      %v949 = vld [vmem:[%s948] sm:$0xff]
      %v950 = vld [vmem:[%s948 + $0x8] sm:$0xff]
      %v951 = vmax.f32 %v945, %v949
      %v952 = vmax.f32 %v946, %v950
      %s953 = sadd.s32 %s925, 80
      %s954 = scalar_lea.vmem [#allocation2], %s953
      %v955 = vld [vmem:[%s954] sm:$0xff]
      %v956 = vld [vmem:[%s954 + $0x8] sm:$0xff]
      %v957 = vmax.f32 %v951, %v955
      %v958 = vmax.f32 %v952, %v956
      %s959 = sadd.s32 %s925, 96
      %s960 = scalar_lea.vmem [#allocation2], %s959
      %v961 = vld [vmem:[%s960] sm:$0xff]
      %v962 = vld [vmem:[%s960 + $0x8] sm:$0xff]
      %v963 = vmax.f32 %v957, %v961
      %v964 = vmax.f32 %v958, %v962
      %965 = vst.msk [vmem:[#allocation3] sm:$0xff] %vm52, %v963
      %966 = vst.msk [vmem:[#allocation3 + $0x8] sm:$0xff] %vm52, %v964
      %v967 = vld [vmem:[#allocation3] ss:$2 sm:$0x1f]
      %s968 = scalar_lea.vmem [#allocation3], 1
      %v969 = vld [vmem:[%s968] ss:$2 sm:$0x1f]
      %v970 = vmax.f32 %v967, %v969
      %s971 = scalar_lea.vmem [#allocation3], 2
      %v972 = vld [vmem:[%s971] ss:$2 sm:$0x1f]
      %v973 = vmax.f32 %v970, %v972
      %s974 = scalar_lea.vmem [#allocation3], 3
      %v975 = vld [vmem:[%s974] ss:$2 sm:$0x1f]
      %v976 = vmax.f32 %v973, %v975
      %s977 = scalar_lea.vmem [#allocation3], 4
      %v978 = vld [vmem:[%s977] ss:$2 sm:$0x1f]
      %v979 = vmax.f32 %v976, %v978
      %s980 = scalar_lea.vmem [#allocation3], 5
      %v981 = vld [vmem:[%s980] ss:$2 sm:$0x1f]
      %v982 = vmax.f32 %v979, %v981
      %s983 = scalar_lea.vmem [#allocation3], 6
      %v984 = vld [vmem:[%s983] ss:$2 sm:$0x1f]
      %v985 = vmax.f32 %v982, %v984
      %vm986 = vcmask 520192
      %987 = vst.msk [vmem:[#allocation4 + $0x9] sm:$0x1f] %vm986, %v985
      %v988 = vld [vmem:[%s936] sm:$0xff]
      %v989 = vld [vmem:[%s936 + $0x8] sm:$0xff]
      %v990 = vld [vmem:[%s942] sm:$0xff]
      %v991 = vld [vmem:[%s942 + $0x8] sm:$0xff]
      %v992 = vmax.f32 %v988, %v990
      %v993 = vmax.f32 %v989, %v991
      %v994 = vld [vmem:[%s948] sm:$0xff]
      %v995 = vld [vmem:[%s948 + $0x8] sm:$0xff]
      %v996 = vmax.f32 %v992, %v994
      %v997 = vmax.f32 %v993, %v995
      %v998 = vld [vmem:[%s954] sm:$0xff]
      %v999 = vld [vmem:[%s954 + $0x8] sm:$0xff]
      %v1000 = vmax.f32 %v996, %v998
      %v1001 = vmax.f32 %v997, %v999
      %v1002 = vld [vmem:[%s960] sm:$0xff]
      %v1003 = vld [vmem:[%s960 + $0x8] sm:$0xff]
      %v1004 = vmax.f32 %v1000, %v1002
      %v1005 = vmax.f32 %v1001, %v1003
      %s1006 = sadd.s32 %s925, 112
      %s1007 = scalar_lea.vmem [#allocation2], %s1006
      %v1008 = vld [vmem:[%s1007] sm:$0xff]
      %v1009 = vld [vmem:[%s1007 + $0x8] sm:$0xff]
      %v1010 = vmax.f32 %v1004, %v1008
      %v1011 = vmax.f32 %v1005, %v1009
      %s1012 = sadd.s32 %s925, 128
      %s1013 = scalar_lea.vmem [#allocation2], %s1012
      %v1014 = vld [vmem:[%s1013] sm:$0xff]
      %v1015 = vld [vmem:[%s1013 + $0x8] sm:$0xff]
      %v1016 = vmax.f32 %v1010, %v1014
      %v1017 = vmax.f32 %v1011, %v1015
      %1018 = vst.msk [vmem:[#allocation3] sm:$0xff] %vm52, %v1016
      %1019 = vst.msk [vmem:[#allocation3 + $0x8] sm:$0xff] %vm52, %v1017
      %v1020 = vld [vmem:[#allocation3] ss:$2 sm:$0x1f]
      %v1021 = vld [vmem:[%s968] ss:$2 sm:$0x1f]
      %v1022 = vmax.f32 %v1020, %v1021
      %v1023 = vld [vmem:[%s971] ss:$2 sm:$0x1f]
      %v1024 = vmax.f32 %v1022, %v1023
      %v1025 = vld [vmem:[%s974] ss:$2 sm:$0x1f]
      %v1026 = vmax.f32 %v1024, %v1025
      %v1027 = vld [vmem:[%s977] ss:$2 sm:$0x1f]
      %v1028 = vmax.f32 %v1026, %v1027
      %v1029 = vld [vmem:[%s980] ss:$2 sm:$0x1f]
      %v1030 = vmax.f32 %v1028, %v1029
      %v1031 = vld [vmem:[%s983] ss:$2 sm:$0x1f]
      %v1032 = vmax.f32 %v1030, %v1031
      %1033 = vst.msk [vmem:[#allocation4 + $0x11] sm:$0x1f] %vm986, %v1032
      %v1034 = vld [vmem:[%s948] sm:$0xff]
      %v1035 = vld [vmem:[%s948 + $0x8] sm:$0xff]
      %v1036 = vld [vmem:[%s954] sm:$0xff]
      %v1037 = vld [vmem:[%s954 + $0x8] sm:$0xff]
      %v1038 = vmax.f32 %v1034, %v1036
      %v1039 = vmax.f32 %v1035, %v1037
      %v1040 = vld [vmem:[%s960] sm:$0xff]
      %v1041 = vld [vmem:[%s960 + $0x8] sm:$0xff]
      %v1042 = vmax.f32 %v1038, %v1040
      %v1043 = vmax.f32 %v1039, %v1041
      %v1044 = vld [vmem:[%s1007] sm:$0xff]
      %v1045 = vld [vmem:[%s1007 + $0x8] sm:$0xff]
      %v1046 = vmax.f32 %v1042, %v1044
      %v1047 = vmax.f32 %v1043, %v1045
      %v1048 = vld [vmem:[%s1013] sm:$0xff]
      %v1049 = vld [vmem:[%s1013 + $0x8] sm:$0xff]
      %v1050 = vmax.f32 %v1046, %v1048
      %v1051 = vmax.f32 %v1047, %v1049
      %s1052 = sadd.s32 %s925, 144
      %s1053 = scalar_lea.vmem [#allocation2], %s1052
      %v1054 = vld [vmem:[%s1053] sm:$0xff]
      %v1055 = vld [vmem:[%s1053 + $0x8] sm:$0xff]
      %v1056 = vmax.f32 %v1050, %v1054
      %v1057 = vmax.f32 %v1051, %v1055
      %s1058 = sadd.s32 %s925, 160
      %s1059 = scalar_lea.vmem [#allocation2], %s1058
      %v1060 = vld [vmem:[%s1059] sm:$0xff]
      %v1061 = vld [vmem:[%s1059 + $0x8] sm:$0xff]
      %v1062 = vmax.f32 %v1056, %v1060
      %v1063 = vmax.f32 %v1057, %v1061
      %1064 = vst.msk [vmem:[#allocation3] sm:$0xff] %vm52, %v1062
      %1065 = vst.msk [vmem:[#allocation3 + $0x8] sm:$0xff] %vm52, %v1063
      %v1066 = vld [vmem:[#allocation3] ss:$2 sm:$0x1f]
      %v1067 = vld [vmem:[%s968] ss:$2 sm:$0x1f]
      %v1068 = vmax.f32 %v1066, %v1067
      %v1069 = vld [vmem:[%s971] ss:$2 sm:$0x1f]
      %v1070 = vmax.f32 %v1068, %v1069
      %v1071 = vld [vmem:[%s974] ss:$2 sm:$0x1f]
      %v1072 = vmax.f32 %v1070, %v1071
      %v1073 = vld [vmem:[%s977] ss:$2 sm:$0x1f]
      %v1074 = vmax.f32 %v1072, %v1073
      %v1075 = vld [vmem:[%s980] ss:$2 sm:$0x1f]
      %v1076 = vmax.f32 %v1074, %v1075
      %v1077 = vld [vmem:[%s983] ss:$2 sm:$0x1f]
      %v1078 = vmax.f32 %v1076, %v1077
      %1079 = vst.msk [vmem:[#allocation4 + $0x19] sm:$0x1f] %vm986, %v1078
      %v1080 = vld [vmem:[%s960] sm:$0xff]
      %v1081 = vld [vmem:[%s960 + $0x8] sm:$0xff]
      %v1082 = vld [vmem:[%s1007] sm:$0xff]
      %v1083 = vld [vmem:[%s1007 + $0x8] sm:$0xff]
      %v1084 = vmax.f32 %v1080, %v1082
      %v1085 = vmax.f32 %v1081, %v1083
      %v1086 = vld [vmem:[%s1013] sm:$0xff]
      %v1087 = vld [vmem:[%s1013 + $0x8] sm:$0xff]
      %v1088 = vmax.f32 %v1084, %v1086
      %v1089 = vmax.f32 %v1085, %v1087
      %v1090 = vld [vmem:[%s1053] sm:$0xff]
      %v1091 = vld [vmem:[%s1053 + $0x8] sm:$0xff]
      %v1092 = vmax.f32 %v1088, %v1090
      %v1093 = vmax.f32 %v1089, %v1091
      %v1094 = vld [vmem:[%s1059] sm:$0xff]
      %v1095 = vld [vmem:[%s1059 + $0x8] sm:$0xff]
      %v1096 = vmax.f32 %v1092, %v1094
      %v1097 = vmax.f32 %v1093, %v1095
      %s1098 = sadd.s32 %s925, 176
      %s1099 = scalar_lea.vmem [#allocation2], %s1098
      %v1100 = vld [vmem:[%s1099] sm:$0xff]
      %v1101 = vld [vmem:[%s1099 + $0x8] sm:$0xff]
      %v1102 = vmax.f32 %v1096, %v1100
      %v1103 = vmax.f32 %v1097, %v1101
      %s1104 = sadd.s32 %s925, 192
      %s1105 = scalar_lea.vmem [#allocation2], %s1104
      %v1106 = vld [vmem:[%s1105] sm:$0xff]
      %v1107 = vld [vmem:[%s1105 + $0x8] sm:$0xff]
      %v1108 = vmax.f32 %v1102, %v1106
      %v1109 = vmax.f32 %v1103, %v1107
      %1110 = vst.msk [vmem:[#allocation3] sm:$0xff] %vm52, %v1108
      %1111 = vst.msk [vmem:[#allocation3 + $0x8] sm:$0xff] %vm52, %v1109
      %v1112 = vld [vmem:[#allocation3] ss:$2 sm:$0x1f]
      %v1113 = vld [vmem:[%s968] ss:$2 sm:$0x1f]
      %v1114 = vmax.f32 %v1112, %v1113
      %v1115 = vld [vmem:[%s971] ss:$2 sm:$0x1f]
      %v1116 = vmax.f32 %v1114, %v1115
      %v1117 = vld [vmem:[%s974] ss:$2 sm:$0x1f]
      %v1118 = vmax.f32 %v1116, %v1117
      %v1119 = vld [vmem:[%s977] ss:$2 sm:$0x1f]
      %v1120 = vmax.f32 %v1118, %v1119
      %v1121 = vld [vmem:[%s980] ss:$2 sm:$0x1f]
      %v1122 = vmax.f32 %v1120, %v1121
      %v1123 = vld [vmem:[%s983] ss:$2 sm:$0x1f]
      %v1124 = vmax.f32 %v1122, %v1123
      %1125 = vst.msk [vmem:[#allocation4 + $0x21] sm:$0x1f] %vm986, %v1124
      %v1126 = vld [vmem:[%s1013] sm:$0xff]
      %v1127 = vld [vmem:[%s1013 + $0x8] sm:$0xff]
      %v1128 = vld [vmem:[%s1053] sm:$0xff]
      %v1129 = vld [vmem:[%s1053 + $0x8] sm:$0xff]
      %v1130 = vmax.f32 %v1126, %v1128
      %v1131 = vmax.f32 %v1127, %v1129
      %v1132 = vld [vmem:[%s1059] sm:$0xff]
      %v1133 = vld [vmem:[%s1059 + $0x8] sm:$0xff]
      %v1134 = vmax.f32 %v1130, %v1132
      %v1135 = vmax.f32 %v1131, %v1133
      %v1136 = vld [vmem:[%s1099] sm:$0xff]
      %v1137 = vld [vmem:[%s1099 + $0x8] sm:$0xff]
      %v1138 = vmax.f32 %v1134, %v1136
      %v1139 = vmax.f32 %v1135, %v1137
      %v1140 = vld [vmem:[%s1105] sm:$0xff]
      %v1141 = vld [vmem:[%s1105 + $0x8] sm:$0xff]
      %v1142 = vmax.f32 %v1138, %v1140
      %v1143 = vmax.f32 %v1139, %v1141
      %s1144 = sadd.s32 %s925, 208
      %s1145 = scalar_lea.vmem [#allocation2], %s1144
      %v1146 = vld [vmem:[%s1145] sm:$0xff]
      %v1147 = vld [vmem:[%s1145 + $0x8] sm:$0xff]
      %v1148 = vmax.f32 %v1142, %v1146
      %v1149 = vmax.f32 %v1143, %v1147
      %s1150 = sadd.s32 %s925, 224
      %s1151 = scalar_lea.vmem [#allocation2], %s1150
      %v1152 = vld [vmem:[%s1151] sm:$0xff]
      %v1153 = vld [vmem:[%s1151 + $0x8] sm:$0xff]
      %v1154 = vmax.f32 %v1148, %v1152
      %v1155 = vmax.f32 %v1149, %v1153
      %1156 = vst.msk [vmem:[#allocation3] sm:$0xff] %vm52, %v1154
      %1157 = vst.msk [vmem:[#allocation3 + $0x8] sm:$0xff] %vm52, %v1155
      %v1158 = vld [vmem:[#allocation3] ss:$2 sm:$0x1f]
      %v1159 = vld [vmem:[%s968] ss:$2 sm:$0x1f]
      %v1160 = vmax.f32 %v1158, %v1159
      %v1161 = vld [vmem:[%s971] ss:$2 sm:$0x1f]
      %v1162 = vmax.f32 %v1160, %v1161
      %v1163 = vld [vmem:[%s974] ss:$2 sm:$0x1f]
      %v1164 = vmax.f32 %v1162, %v1163
      %v1165 = vld [vmem:[%s977] ss:$2 sm:$0x1f]
      %v1166 = vmax.f32 %v1164, %v1165
      %v1167 = vld [vmem:[%s980] ss:$2 sm:$0x1f]
      %v1168 = vmax.f32 %v1166, %v1167
      %v1169 = vld [vmem:[%s983] ss:$2 sm:$0x1f]
      %v1170 = vmax.f32 %v1168, %v1169
      %1171 = vst.msk [vmem:[#allocation4 + $0x29] sm:$0x1f] %vm986, %v1170
      %v1172 = vld [vmem:[#allocation4] sm:$0xff]
      %v1173 = vld [vmem:[#allocation4 + $0x8] sm:$0xff]
      %v1174 = vld [vmem:[#allocation4 + $0x10] sm:$0xff]
      %v1175 = vld [vmem:[#allocation4 + $0x18] sm:$0xff]
      %v1176 = vld [vmem:[#allocation4 + $0x20] sm:$0xff]
      %v1177 = vpack.c.bf16 %v1173, %v1172
      %v1178 = vpack.c.bf16 %v1175, %v1174
      %v1179 = vpack.c.bf16 %v1176, %v1176
      %v1180 = vld [vmem:[%s4] sm:$0xf]
      %v1181 = vld [vmem:[%s4 + $0x4] sm:$0xf]
      %v1182 = vld [vmem:[%s4 + $0x8] sm:$0xf]
      %v1183 = vld [vmem:[%s4 + $0xc] sm:$0xf]
      %v1184 = vld [vmem:[%s4 + $0x10] sm:$0xf]
      %v1185 = vld [vmem:[%s4 + $0x14] sm:$0xf]
      %v1186 = vld [vmem:[%s4 + $0x18] sm:$0xf]
      %v1187 = vld [vmem:[%s4 + $0x1c] sm:$0xf]
      %v1188 = vld [vmem:[#allocation4 + $0x1] sm:$0xff]
      %v1189 = vld [vmem:[#allocation4 + $0x9] sm:$0xff]
      %v1190 = vld [vmem:[#allocation4 + $0x11] sm:$0xff]
      %v1191 = vld [vmem:[#allocation4 + $0x19] sm:$0xff]
      %v1192 = vld [vmem:[#allocation4 + $0x21] sm:$0xff]
      %v1193 = vpack.c.bf16 %v1189, %v1188
      %v1194 = vpack.c.bf16 %v1191, %v1190
      %v1195 = vpack.c.bf16 %v1192, %v1192
      %s1196 = scalar_lea.vmem %s4, 32
      %v1197 = vld [vmem:[%s1196] sm:$0xf]
      %v1198 = vld [vmem:[%s1196 + $0x4] sm:$0xf]
      %v1199 = vld [vmem:[%s1196 + $0x8] sm:$0xf]
      %v1200 = vld [vmem:[%s1196 + $0xc] sm:$0xf]
      %v1201 = vld [vmem:[%s1196 + $0x10] sm:$0xf]
      %v1202 = vld [vmem:[%s1196 + $0x14] sm:$0xf]
      %v1203 = vld [vmem:[%s1196 + $0x18] sm:$0xf]
      %v1204 = vld [vmem:[%s1196 + $0x1c] sm:$0xf]
      %v1213 = vunpack.c.l.b16 %v1197
      %v1214 = vunpack.c.l.b16 %v1198
      %v1215 = vunpack.c.l.b16 %v1199
      %v1216 = vunpack.c.l.b16 %v1200
      %v1217 = vunpack.c.l.b16 %v1201
      %v1218 = vunpack.c.l.b16 %v1202
      %v1219 = vunpack.c.l.b16 %v1203
      %v1220 = vunpack.c.l.b16 %v1204
      %v1221 = vpack.c.b16 %v1214, %v1213
      %v1222 = vpack.c.b16 %v1216, %v1215
      %v1223 = vpack.c.b16 %v1218, %v1217
      %v1224 = vpack.c.b16 %v1220, %v1219
      %v1230 = vsel %vm52, %v1193, 0
      %v1233 = vsel %vm52, %v1194, 0
      %v1236 = vsel %vm52, %v1195, 0
      %1238 = vmatprep.subr.bf16.mxu0 0
      %1239 = vmatpush1.bf16.msra.mxu0 %v1221
      %1240 = vmatprep.subr.bf16.mxu0 0
      %1241 = vmatpush1.bf16.msra.mxu0 %v1222
      %1242 = vmatprep.subr.bf16.mxu0 0
      %1243 = vmatpush1.bf16.msra.mxu0 %v1223
      %1244 = vmatprep.subr.bf16.mxu0 0
      %1245 = vmatpush1.bf16.msra.mxu0 %v1224
      %1246 = vmatprep.subr.bf16.mxu0 0
      %1247 = vmatpush1.bf16.msra.mxu0 0
      %1248 = vmatprep.subr.bf16.mxu0 0
      %1249 = vmatpush1.bf16.msra.mxu0 0
      %1250 = vmatprep.subr.bf16.mxu0 0
      %1251 = vmatpush1.bf16.msra.mxu0 0
      %1252 = vmatprep.subr.bf16.mxu0 0
      %1253 = vmatpush1.bf16.msra.mxu0 0
      %1254 = vmatprep.subr.bf16.mxu0 0
      %1255 = vmatpush1.bf16.msra.mxu0 0
      %1256 = vmatprep.subr.bf16.mxu0 0
      %1257 = vmatpush1.bf16.msra.mxu0 0
      %1258 = vmatprep.subr.bf16.mxu0 0
      %1259 = vmatpush1.bf16.msra.mxu0 0
      %1260 = vmatprep.subr.bf16.mxu0 0
      %1261 = vmatpush1.bf16.msra.mxu0 0
      %1262 = vmatprep.subr.bf16.mxu0 0
      %1263 = vmatpush1.bf16.msra.mxu0 0
      %1264 = vmatprep.subr.bf16.mxu0 0
      %1265 = vmatpush1.bf16.msra.mxu0 0
      %1266 = vmatprep.subr.bf16.mxu0 0
      %1267 = vmatpush1.bf16.msra.mxu0 0
      %1268 = vmatprep.subr.bf16.mxu0 0
      %1269 = vmatpush1.bf16.msra.mxu0 0
      %1270 = vmatprep.mubr.bf16.mxu0 0
      %1271 = vmatmul.mubr.bf16.gmra.mrb[0].mxu0 %v1230
      %v1272 = vpop.f32.mrb[0].mxu0
      %v1273 = vadd.f32 0.0, %v1272
      %v1274 = vpop.f32.mrb[0].mxu0
      %v1275 = vpop.f32.mrb[0].mxu0
      %v1276 = vadd.f32 0.0, %v1275
      %v1277 = vpop.f32.mrb[0].mxu0
      %1278 = vmatprep.mubr.bf16.mxu0 0
      %1279 = vmatmul.mubr.bf16.gmra.mrb[0].mxu0 %v1233
      %v1280 = vpop.f32.mrb[0].mxu0
      %v1281 = vadd.f32 0.0, %v1280
      %v1282 = vpop.f32.mrb[0].mxu0
      %v1283 = vpop.f32.mrb[0].mxu0
      %v1284 = vadd.f32 0.0, %v1283
      %v1285 = vpop.f32.mrb[0].mxu0
      %1286 = vmatprep.mubr.bf16.mxu0 0
      %1287 = vmatmul.mubr.bf16.gmra.mrb[0].mxu0 %v1236
      %v1288 = vpop.f32.mrb[0].mxu0
      %v1289 = vadd.f32 0.0, %v1288
      %v1290 = vpop.f32.mrb[0].mxu0
      %v1291 = vpop.f32.mrb[0].mxu0
      %v1292 = vpop.f32.mrb[0].mxu0
      %1293 = vdwg.mxu0
      %v1302 = vunpack.c.l.b16 %v1180
      %v1303 = vunpack.c.l.b16 %v1181
      %v1304 = vunpack.c.l.b16 %v1182
      %v1305 = vunpack.c.l.b16 %v1183
      %v1306 = vunpack.c.l.b16 %v1184
      %v1307 = vunpack.c.l.b16 %v1185
      %v1308 = vunpack.c.l.b16 %v1186
      %v1309 = vunpack.c.l.b16 %v1187
      %v1310 = vpack.c.b16 %v1303, %v1302
      %v1311 = vpack.c.b16 %v1305, %v1304
      %v1312 = vpack.c.b16 %v1307, %v1306
      %v1313 = vpack.c.b16 %v1309, %v1308
      %v1319 = vsel %vm52, %v1177, 0
      %v1322 = vsel %vm52, %v1178, 0
      %v1325 = vsel %vm52, %v1179, 0
      %1327 = vmatprep.subr.bf16.mxu0 0
      %1328 = vmatpush1.bf16.msra.mxu0 %v1310
      %1329 = vmatprep.subr.bf16.mxu0 0
      %1330 = vmatpush1.bf16.msra.mxu0 %v1311
      %1331 = vmatprep.subr.bf16.mxu0 0
      %1332 = vmatpush1.bf16.msra.mxu0 %v1312
      %1333 = vmatprep.subr.bf16.mxu0 0
      %1334 = vmatpush1.bf16.msra.mxu0 %v1313
      %1335 = vmatprep.subr.bf16.mxu0 0
      %1336 = vmatpush1.bf16.msra.mxu0 0
      %1337 = vmatprep.subr.bf16.mxu0 0
      %1338 = vmatpush1.bf16.msra.mxu0 0
      %1339 = vmatprep.subr.bf16.mxu0 0
      %1340 = vmatpush1.bf16.msra.mxu0 0
      %1341 = vmatprep.subr.bf16.mxu0 0
      %1342 = vmatpush1.bf16.msra.mxu0 0
      %1343 = vmatprep.subr.bf16.mxu0 0
      %1344 = vmatpush1.bf16.msra.mxu0 0
      %1345 = vmatprep.subr.bf16.mxu0 0
      %1346 = vmatpush1.bf16.msra.mxu0 0
      %1347 = vmatprep.subr.bf16.mxu0 0
      %1348 = vmatpush1.bf16.msra.mxu0 0
      %1349 = vmatprep.subr.bf16.mxu0 0
      %1350 = vmatpush1.bf16.msra.mxu0 0
      %1351 = vmatprep.subr.bf16.mxu0 0
      %1352 = vmatpush1.bf16.msra.mxu0 0
      %1353 = vmatprep.subr.bf16.mxu0 0
      %1354 = vmatpush1.bf16.msra.mxu0 0
      %1355 = vmatprep.subr.bf16.mxu0 0
      %1356 = vmatpush1.bf16.msra.mxu0 0
      %1357 = vmatprep.subr.bf16.mxu0 0
      %1358 = vmatpush1.bf16.msra.mxu0 0
      %1359 = vmatprep.mubr.bf16.mxu0 0
      %1360 = vmatmul.mubr.bf16.gmra.mrb[0].mxu0 %v1319
      %v1361 = vpop.f32.mrb[0].mxu0
      %v1362 = vadd.f32 %v1273, %v1361
      %v1363 = vpop.f32.mrb[0].mxu0
      %v1364 = vpop.f32.mrb[0].mxu0
      %v1365 = vadd.f32 %v1276, %v1364
      %v1366 = vpop.f32.mrb[0].mxu0
      %1367 = vmatprep.mubr.bf16.mxu0 0
      %1368 = vmatmul.mubr.bf16.gmra.mrb[0].mxu0 %v1322
      %v1369 = vpop.f32.mrb[0].mxu0
      %v1370 = vadd.f32 %v1281, %v1369
      %v1371 = vpop.f32.mrb[0].mxu0
      %v1372 = vpop.f32.mrb[0].mxu0
      %v1373 = vadd.f32 %v1284, %v1372
      %v1374 = vpop.f32.mrb[0].mxu0
      %1375 = vmatprep.mubr.bf16.mxu0 0
      %1376 = vmatmul.mubr.bf16.gmra.mrb[0].mxu0 %v1325
      %v1377 = vpop.f32.mrb[0].mxu0
      %v1378 = vadd.f32 %v1289, %v1377
      %v1379 = vpop.f32.mrb[0].mxu0
      %v1380 = vpop.f32.mrb[0].mxu0
      %v1381 = vpop.f32.mrb[0].mxu0
      %1382 = vdwg.mxu0
      %v1383 = vld [vmem:[#allocation4 + $0x2] sm:$0xff]
      %v1384 = vld [vmem:[#allocation4 + $0xa] sm:$0xff]
      %v1385 = vld [vmem:[#allocation4 + $0x12] sm:$0xff]
      %v1386 = vld [vmem:[#allocation4 + $0x1a] sm:$0xff]
      %v1387 = vld [vmem:[#allocation4 + $0x22] sm:$0xff]
      %v1388 = vpack.c.bf16 %v1384, %v1383
      %v1389 = vpack.c.bf16 %v1386, %v1385
      %v1390 = vpack.c.bf16 %v1387, %v1387
      %s1391 = scalar_lea.vmem %s4, 64
      %v1392 = vld [vmem:[%s1391] sm:$0xf]
      %v1393 = vld [vmem:[%s1391 + $0x4] sm:$0xf]
      %v1394 = vld [vmem:[%s1391 + $0x8] sm:$0xf]
      %v1395 = vld [vmem:[%s1391 + $0xc] sm:$0xf]
      %v1396 = vld [vmem:[%s1391 + $0x10] sm:$0xf]
      %v1397 = vld [vmem:[%s1391 + $0x14] sm:$0xf]
      %v1398 = vld [vmem:[%s1391 + $0x18] sm:$0xf]
      %v1399 = vld [vmem:[%s1391 + $0x1c] sm:$0xf]
      %v1408 = vunpack.c.l.b16 %v1392
      %v1409 = vunpack.c.l.b16 %v1393
      %v1410 = vunpack.c.l.b16 %v1394
      %v1411 = vunpack.c.l.b16 %v1395
      %v1412 = vunpack.c.l.b16 %v1396
      %v1413 = vunpack.c.l.b16 %v1397
      %v1414 = vunpack.c.l.b16 %v1398
      %v1415 = vunpack.c.l.b16 %v1399
      %v1416 = vpack.c.b16 %v1409, %v1408
      %v1417 = vpack.c.b16 %v1411, %v1410
      %v1418 = vpack.c.b16 %v1413, %v1412
      %v1419 = vpack.c.b16 %v1415, %v1414
      %v1425 = vsel %vm52, %v1388, 0
      %v1428 = vsel %vm52, %v1389, 0
      %v1431 = vsel %vm52, %v1390, 0
      %1433 = vmatprep.subr.bf16.mxu0 0
      %1434 = vmatpush1.bf16.msra.mxu0 %v1416
      %1435 = vmatprep.subr.bf16.mxu0 0
      %1436 = vmatpush1.bf16.msra.mxu0 %v1417
      %1437 = vmatprep.subr.bf16.mxu0 0
      %1438 = vmatpush1.bf16.msra.mxu0 %v1418
      %1439 = vmatprep.subr.bf16.mxu0 0
      %1440 = vmatpush1.bf16.msra.mxu0 %v1419
      %1441 = vmatprep.subr.bf16.mxu0 0
      %1442 = vmatpush1.bf16.msra.mxu0 0
      %1443 = vmatprep.subr.bf16.mxu0 0
      %1444 = vmatpush1.bf16.msra.mxu0 0
      %1445 = vmatprep.subr.bf16.mxu0 0
      %1446 = vmatpush1.bf16.msra.mxu0 0
      %1447 = vmatprep.subr.bf16.mxu0 0
      %1448 = vmatpush1.bf16.msra.mxu0 0
      %1449 = vmatprep.subr.bf16.mxu0 0
      %1450 = vmatpush1.bf16.msra.mxu0 0
      %1451 = vmatprep.subr.bf16.mxu0 0
      %1452 = vmatpush1.bf16.msra.mxu0 0
      %1453 = vmatprep.subr.bf16.mxu0 0
      %1454 = vmatpush1.bf16.msra.mxu0 0
      %1455 = vmatprep.subr.bf16.mxu0 0
      %1456 = vmatpush1.bf16.msra.mxu0 0
      %1457 = vmatprep.subr.bf16.mxu0 0
      %1458 = vmatpush1.bf16.msra.mxu0 0
      %1459 = vmatprep.subr.bf16.mxu0 0
      %1460 = vmatpush1.bf16.msra.mxu0 0
      %1461 = vmatprep.subr.bf16.mxu0 0
      %1462 = vmatpush1.bf16.msra.mxu0 0
      %1463 = vmatprep.subr.bf16.mxu0 0
      %1464 = vmatpush1.bf16.msra.mxu0 0
      %1465 = vmatprep.mubr.bf16.mxu0 0
      %1466 = vmatmul.mubr.bf16.gmra.mrb[0].mxu0 %v1425
      %v1467 = vpop.f32.mrb[0].mxu0
      %v1468 = vadd.f32 0.0, %v1467
      %v1469 = vpop.f32.mrb[0].mxu0
      %v1470 = vpop.f32.mrb[0].mxu0
      %v1471 = vadd.f32 0.0, %v1470
      %v1472 = vpop.f32.mrb[0].mxu0
      %1473 = vmatprep.mubr.bf16.mxu0 0
      %1474 = vmatmul.mubr.bf16.gmra.mrb[0].mxu0 %v1428
      %v1475 = vpop.f32.mrb[0].mxu0
      %v1476 = vadd.f32 0.0, %v1475
      %v1477 = vpop.f32.mrb[0].mxu0
      %v1478 = vpop.f32.mrb[0].mxu0
      %v1479 = vadd.f32 0.0, %v1478
      %v1480 = vpop.f32.mrb[0].mxu0
      %1481 = vmatprep.mubr.bf16.mxu0 0
      %1482 = vmatmul.mubr.bf16.gmra.mrb[0].mxu0 %v1431
      %v1483 = vpop.f32.mrb[0].mxu0
      %v1484 = vadd.f32 0.0, %v1483
      %v1485 = vpop.f32.mrb[0].mxu0
      %v1486 = vpop.f32.mrb[0].mxu0
      %v1487 = vpop.f32.mrb[0].mxu0
      %1488 = vdwg.mxu0
      %v1489 = vadd.f32 %v1362, %v1468
      %v1490 = vadd.f32 %v1365, %v1471
      %v1491 = vadd.f32 %v1370, %v1476
      %v1492 = vadd.f32 %v1373, %v1479
      %v1493 = vadd.f32 %v1378, %v1484
      %v1494 = vld [vmem:[#allocation4 + $0x8] sm:$0xff]
      %v1495 = vld [vmem:[#allocation4 + $0x10] sm:$0xff]
      %v1496 = vld [vmem:[#allocation4 + $0x18] sm:$0xff]
      %v1497 = vld [vmem:[#allocation4 + $0x20] sm:$0xff]
      %v1498 = vld [vmem:[#allocation4 + $0x28] sm:$0xff]
      %v1499 = vpack.c.bf16 %v1495, %v1494
      %v1500 = vpack.c.bf16 %v1497, %v1496
      %v1501 = vpack.c.bf16 %v1498, %v1498
      %s1502 = scalar_lea.vmem %s4, 96
      %v1503 = vld [vmem:[%s1502] sm:$0xf]
      %v1504 = vld [vmem:[%s1502 + $0x4] sm:$0xf]
      %v1505 = vld [vmem:[%s1502 + $0x8] sm:$0xf]
      %v1506 = vld [vmem:[%s1502 + $0xc] sm:$0xf]
      %v1507 = vld [vmem:[%s1502 + $0x10] sm:$0xf]
      %v1508 = vld [vmem:[%s1502 + $0x14] sm:$0xf]
      %v1509 = vld [vmem:[%s1502 + $0x18] sm:$0xf]
      %v1510 = vld [vmem:[%s1502 + $0x1c] sm:$0xf]
      %v1519 = vunpack.c.l.b16 %v1503
      %v1520 = vunpack.c.l.b16 %v1504
      %v1521 = vunpack.c.l.b16 %v1505
      %v1522 = vunpack.c.l.b16 %v1506
      %v1523 = vunpack.c.l.b16 %v1507
      %v1524 = vunpack.c.l.b16 %v1508
      %v1525 = vunpack.c.l.b16 %v1509
      %v1526 = vunpack.c.l.b16 %v1510
      %v1527 = vpack.c.b16 %v1520, %v1519
      %v1528 = vpack.c.b16 %v1522, %v1521
      %v1529 = vpack.c.b16 %v1524, %v1523
      %v1530 = vpack.c.b16 %v1526, %v1525
      %v1536 = vsel %vm52, %v1499, 0
      %v1539 = vsel %vm52, %v1500, 0
      %v1542 = vsel %vm52, %v1501, 0
      %1544 = vmatprep.subr.bf16.mxu0 0
      %1545 = vmatpush1.bf16.msra.mxu0 %v1527
      %1546 = vmatprep.subr.bf16.mxu0 0
      %1547 = vmatpush1.bf16.msra.mxu0 %v1528
      %1548 = vmatprep.subr.bf16.mxu0 0
      %1549 = vmatpush1.bf16.msra.mxu0 %v1529
      %1550 = vmatprep.subr.bf16.mxu0 0
      %1551 = vmatpush1.bf16.msra.mxu0 %v1530
      %1552 = vmatprep.subr.bf16.mxu0 0
      %1553 = vmatpush1.bf16.msra.mxu0 0
      %1554 = vmatprep.subr.bf16.mxu0 0
      %1555 = vmatpush1.bf16.msra.mxu0 0
      %1556 = vmatprep.subr.bf16.mxu0 0
      %1557 = vmatpush1.bf16.msra.mxu0 0
      %1558 = vmatprep.subr.bf16.mxu0 0
      %1559 = vmatpush1.bf16.msra.mxu0 0
      %1560 = vmatprep.subr.bf16.mxu0 0
      %1561 = vmatpush1.bf16.msra.mxu0 0
      %1562 = vmatprep.subr.bf16.mxu0 0
      %1563 = vmatpush1.bf16.msra.mxu0 0
      %1564 = vmatprep.subr.bf16.mxu0 0
      %1565 = vmatpush1.bf16.msra.mxu0 0
      %1566 = vmatprep.subr.bf16.mxu0 0
      %1567 = vmatpush1.bf16.msra.mxu0 0
      %1568 = vmatprep.subr.bf16.mxu0 0
      %1569 = vmatpush1.bf16.msra.mxu0 0
      %1570 = vmatprep.subr.bf16.mxu0 0
      %1571 = vmatpush1.bf16.msra.mxu0 0
      %1572 = vmatprep.subr.bf16.mxu0 0
      %1573 = vmatpush1.bf16.msra.mxu0 0
      %1574 = vmatprep.subr.bf16.mxu0 0
      %1575 = vmatpush1.bf16.msra.mxu0 0
      %1576 = vmatprep.mubr.bf16.mxu0 0
      %1577 = vmatmul.mubr.bf16.gmra.mrb[0].mxu0 %v1536
      %v1578 = vpop.f32.mrb[0].mxu0
      %v1579 = vadd.f32 0.0, %v1578
      %v1580 = vpop.f32.mrb[0].mxu0
      %v1581 = vpop.f32.mrb[0].mxu0
      %v1582 = vadd.f32 0.0, %v1581
      %v1583 = vpop.f32.mrb[0].mxu0
      %1584 = vmatprep.mubr.bf16.mxu0 0
      %1585 = vmatmul.mubr.bf16.gmra.mrb[0].mxu0 %v1539
      %v1586 = vpop.f32.mrb[0].mxu0
      %v1587 = vadd.f32 0.0, %v1586
      %v1588 = vpop.f32.mrb[0].mxu0
      %v1589 = vpop.f32.mrb[0].mxu0
      %v1590 = vadd.f32 0.0, %v1589
      %v1591 = vpop.f32.mrb[0].mxu0
      %1592 = vmatprep.mubr.bf16.mxu0 0
      %1593 = vmatmul.mubr.bf16.gmra.mrb[0].mxu0 %v1542
      %v1594 = vpop.f32.mrb[0].mxu0
      %v1595 = vadd.f32 0.0, %v1594
      %v1596 = vpop.f32.mrb[0].mxu0
      %v1597 = vpop.f32.mrb[0].mxu0
      %v1598 = vpop.f32.mrb[0].mxu0
      %1599 = vdwg.mxu0
      %v1600 = vadd.f32 %v1489, %v1579
      %v1601 = vadd.f32 %v1490, %v1582
      %v1602 = vadd.f32 %v1491, %v1587
      %v1603 = vadd.f32 %v1492, %v1590
      %v1604 = vadd.f32 %v1493, %v1595
      %v1605 = vld [vmem:[#allocation4 + $0x9] sm:$0xff]
      %v1606 = vld [vmem:[#allocation4 + $0x11] sm:$0xff]
      %v1607 = vld [vmem:[#allocation4 + $0x19] sm:$0xff]
      %v1608 = vld [vmem:[#allocation4 + $0x21] sm:$0xff]
      %v1609 = vld [vmem:[#allocation4 + $0x29] sm:$0xff]
      %v1610 = vpack.c.bf16 %v1606, %v1605
      %v1611 = vpack.c.bf16 %v1608, %v1607
      %v1612 = vpack.c.bf16 %v1609, %v1609
      %s1613 = scalar_lea.vmem %s4, 128
      %v1614 = vld [vmem:[%s1613] sm:$0xf]
      %v1615 = vld [vmem:[%s1613 + $0x4] sm:$0xf]
      %v1616 = vld [vmem:[%s1613 + $0x8] sm:$0xf]
      %v1617 = vld [vmem:[%s1613 + $0xc] sm:$0xf]
      %v1618 = vld [vmem:[%s1613 + $0x10] sm:$0xf]
      %v1619 = vld [vmem:[%s1613 + $0x14] sm:$0xf]
      %v1620 = vld [vmem:[%s1613 + $0x18] sm:$0xf]
      %v1621 = vld [vmem:[%s1613 + $0x1c] sm:$0xf]
      %v1630 = vunpack.c.l.b16 %v1614
      %v1631 = vunpack.c.l.b16 %v1615
      %v1632 = vunpack.c.l.b16 %v1616
      %v1633 = vunpack.c.l.b16 %v1617
      %v1634 = vunpack.c.l.b16 %v1618
      %v1635 = vunpack.c.l.b16 %v1619
      %v1636 = vunpack.c.l.b16 %v1620
      %v1637 = vunpack.c.l.b16 %v1621
      %v1638 = vpack.c.b16 %v1631, %v1630
      %v1639 = vpack.c.b16 %v1633, %v1632
      %v1640 = vpack.c.b16 %v1635, %v1634
      %v1641 = vpack.c.b16 %v1637, %v1636
      %v1647 = vsel %vm52, %v1610, 0
      %v1650 = vsel %vm52, %v1611, 0
      %v1653 = vsel %vm52, %v1612, 0
      %1655 = vmatprep.subr.bf16.mxu0 0
      %1656 = vmatpush1.bf16.msra.mxu0 %v1638
      %1657 = vmatprep.subr.bf16.mxu0 0
      %1658 = vmatpush1.bf16.msra.mxu0 %v1639
      %1659 = vmatprep.subr.bf16.mxu0 0
      %1660 = vmatpush1.bf16.msra.mxu0 %v1640
      %1661 = vmatprep.subr.bf16.mxu0 0
      %1662 = vmatpush1.bf16.msra.mxu0 %v1641
      %1663 = vmatprep.subr.bf16.mxu0 0
      %1664 = vmatpush1.bf16.msra.mxu0 0
      %1665 = vmatprep.subr.bf16.mxu0 0
      %1666 = vmatpush1.bf16.msra.mxu0 0
      %1667 = vmatprep.subr.bf16.mxu0 0
      %1668 = vmatpush1.bf16.msra.mxu0 0
      %1669 = vmatprep.subr.bf16.mxu0 0
      %1670 = vmatpush1.bf16.msra.mxu0 0
      %1671 = vmatprep.subr.bf16.mxu0 0
      %1672 = vmatpush1.bf16.msra.mxu0 0
      %1673 = vmatprep.subr.bf16.mxu0 0
      %1674 = vmatpush1.bf16.msra.mxu0 0
      %1675 = vmatprep.subr.bf16.mxu0 0
      %1676 = vmatpush1.bf16.msra.mxu0 0
      %1677 = vmatprep.subr.bf16.mxu0 0
      %1678 = vmatpush1.bf16.msra.mxu0 0
      %1679 = vmatprep.subr.bf16.mxu0 0
      %1680 = vmatpush1.bf16.msra.mxu0 0
      %1681 = vmatprep.subr.bf16.mxu0 0
      %1682 = vmatpush1.bf16.msra.mxu0 0
      %1683 = vmatprep.subr.bf16.mxu0 0
      %1684 = vmatpush1.bf16.msra.mxu0 0
      %1685 = vmatprep.subr.bf16.mxu0 0
      %1686 = vmatpush1.bf16.msra.mxu0 0
      %1687 = vmatprep.mubr.bf16.mxu0 0
      %1688 = vmatmul.mubr.bf16.gmra.mrb[0].mxu0 %v1647
      %v1689 = vpop.f32.mrb[0].mxu0
      %v1690 = vadd.f32 0.0, %v1689
      %v1691 = vpop.f32.mrb[0].mxu0
      %v1692 = vpop.f32.mrb[0].mxu0
      %v1693 = vadd.f32 0.0, %v1692
      %v1694 = vpop.f32.mrb[0].mxu0
      %1695 = vmatprep.mubr.bf16.mxu0 0
      %1696 = vmatmul.mubr.bf16.gmra.mrb[0].mxu0 %v1650
      %v1697 = vpop.f32.mrb[0].mxu0
      %v1698 = vadd.f32 0.0, %v1697
      %v1699 = vpop.f32.mrb[0].mxu0
      %v1700 = vpop.f32.mrb[0].mxu0
      %v1701 = vadd.f32 0.0, %v1700
      %v1702 = vpop.f32.mrb[0].mxu0
      %1703 = vmatprep.mubr.bf16.mxu0 0
      %1704 = vmatmul.mubr.bf16.gmra.mrb[0].mxu0 %v1653
      %v1705 = vpop.f32.mrb[0].mxu0
      %v1706 = vadd.f32 0.0, %v1705
      %v1707 = vpop.f32.mrb[0].mxu0
      %v1708 = vpop.f32.mrb[0].mxu0
      %v1709 = vpop.f32.mrb[0].mxu0
      %1710 = vdwg.mxu0
      %v1711 = vadd.f32 %v1600, %v1690
      %v1712 = vadd.f32 %v1601, %v1693
      %v1713 = vadd.f32 %v1602, %v1698
      %v1714 = vadd.f32 %v1603, %v1701
      %v1715 = vadd.f32 %v1604, %v1706
      %v1716 = vld [vmem:[#allocation4 + $0xa] sm:$0xff]
      %v1717 = vld [vmem:[#allocation4 + $0x12] sm:$0xff]
      %v1718 = vld [vmem:[#allocation4 + $0x1a] sm:$0xff]
      %v1719 = vld [vmem:[#allocation4 + $0x22] sm:$0xff]
      %v1720 = vld [vmem:[#allocation4 + $0x2a] sm:$0xff]
      %v1721 = vpack.c.bf16 %v1717, %v1716
      %v1722 = vpack.c.bf16 %v1719, %v1718
      %v1723 = vpack.c.bf16 %v1720, %v1720
      %s1724 = scalar_lea.vmem %s4, 160
      %v1725 = vld [vmem:[%s1724] sm:$0xf]
      %v1726 = vld [vmem:[%s1724 + $0x4] sm:$0xf]
      %v1727 = vld [vmem:[%s1724 + $0x8] sm:$0xf]
      %v1728 = vld [vmem:[%s1724 + $0xc] sm:$0xf]
      %v1729 = vld [vmem:[%s1724 + $0x10] sm:$0xf]
      %v1730 = vld [vmem:[%s1724 + $0x14] sm:$0xf]
      %v1731 = vld [vmem:[%s1724 + $0x18] sm:$0xf]
      %v1732 = vld [vmem:[%s1724 + $0x1c] sm:$0xf]
      %v1741 = vunpack.c.l.b16 %v1725
      %v1742 = vunpack.c.l.b16 %v1726
      %v1743 = vunpack.c.l.b16 %v1727
      %v1744 = vunpack.c.l.b16 %v1728
      %v1745 = vunpack.c.l.b16 %v1729
      %v1746 = vunpack.c.l.b16 %v1730
      %v1747 = vunpack.c.l.b16 %v1731
      %v1748 = vunpack.c.l.b16 %v1732
      %v1749 = vpack.c.b16 %v1742, %v1741
      %v1750 = vpack.c.b16 %v1744, %v1743
      %v1751 = vpack.c.b16 %v1746, %v1745
      %v1752 = vpack.c.b16 %v1748, %v1747
      %v1758 = vsel %vm52, %v1721, 0
      %v1761 = vsel %vm52, %v1722, 0
      %v1764 = vsel %vm52, %v1723, 0
      %1766 = vmatprep.subr.bf16.mxu0 0
      %1767 = vmatpush1.bf16.msra.mxu0 %v1749
      %1768 = vmatprep.subr.bf16.mxu0 0
      %1769 = vmatpush1.bf16.msra.mxu0 %v1750
      %1770 = vmatprep.subr.bf16.mxu0 0
      %1771 = vmatpush1.bf16.msra.mxu0 %v1751
      %1772 = vmatprep.subr.bf16.mxu0 0
      %1773 = vmatpush1.bf16.msra.mxu0 %v1752
      %1774 = vmatprep.subr.bf16.mxu0 0
      %1775 = vmatpush1.bf16.msra.mxu0 0
      %1776 = vmatprep.subr.bf16.mxu0 0
      %1777 = vmatpush1.bf16.msra.mxu0 0
      %1778 = vmatprep.subr.bf16.mxu0 0
      %1779 = vmatpush1.bf16.msra.mxu0 0
      %1780 = vmatprep.subr.bf16.mxu0 0
      %1781 = vmatpush1.bf16.msra.mxu0 0
      %1782 = vmatprep.subr.bf16.mxu0 0
      %1783 = vmatpush1.bf16.msra.mxu0 0
      %1784 = vmatprep.subr.bf16.mxu0 0
      %1785 = vmatpush1.bf16.msra.mxu0 0
      %1786 = vmatprep.subr.bf16.mxu0 0
      %1787 = vmatpush1.bf16.msra.mxu0 0
      %1788 = vmatprep.subr.bf16.mxu0 0
      %1789 = vmatpush1.bf16.msra.mxu0 0
      %1790 = vmatprep.subr.bf16.mxu0 0
      %1791 = vmatpush1.bf16.msra.mxu0 0
      %1792 = vmatprep.subr.bf16.mxu0 0
      %1793 = vmatpush1.bf16.msra.mxu0 0
      %1794 = vmatprep.subr.bf16.mxu0 0
      %1795 = vmatpush1.bf16.msra.mxu0 0
      %1796 = vmatprep.subr.bf16.mxu0 0
      %1797 = vmatpush1.bf16.msra.mxu0 0
      %1798 = vmatprep.mubr.bf16.mxu0 0
      %1799 = vmatmul.mubr.bf16.gmra.mrb[0].mxu0 %v1758
      %v1800 = vpop.f32.mrb[0].mxu0
      %v1801 = vadd.f32 0.0, %v1800
      %v1802 = vpop.f32.mrb[0].mxu0
      %v1803 = vpop.f32.mrb[0].mxu0
      %v1804 = vadd.f32 0.0, %v1803
      %v1805 = vpop.f32.mrb[0].mxu0
      %1806 = vmatprep.mubr.bf16.mxu0 0
      %1807 = vmatmul.mubr.bf16.gmra.mrb[0].mxu0 %v1761
      %v1808 = vpop.f32.mrb[0].mxu0
      %v1809 = vadd.f32 0.0, %v1808
      %v1810 = vpop.f32.mrb[0].mxu0
      %v1811 = vpop.f32.mrb[0].mxu0
      %v1812 = vadd.f32 0.0, %v1811
      %v1813 = vpop.f32.mrb[0].mxu0
      %1814 = vmatprep.mubr.bf16.mxu0 0
      %1815 = vmatmul.mubr.bf16.gmra.mrb[0].mxu0 %v1764
      %v1816 = vpop.f32.mrb[0].mxu0
      %v1817 = vadd.f32 0.0, %v1816
      %v1818 = vpop.f32.mrb[0].mxu0
      %v1819 = vpop.f32.mrb[0].mxu0
      %v1820 = vpop.f32.mrb[0].mxu0
      %1821 = vdwg.mxu0
      %v1822 = vadd.f32 %v1711, %v1801
      %v1823 = vadd.f32 %v1712, %v1804
      %v1824 = vadd.f32 %v1713, %v1809
      %v1825 = vadd.f32 %v1714, %v1812
      %v1826 = vadd.f32 %v1715, %v1817
      %v1827 = vld [vmem:[#allocation4 + $0x10] sm:$0xff]
      %v1828 = vld [vmem:[#allocation4 + $0x18] sm:$0xff]
      %v1829 = vld [vmem:[#allocation4 + $0x20] sm:$0xff]
      %v1830 = vld [vmem:[#allocation4 + $0x28] sm:$0xff]
      %v1831 = vld [vmem:[#allocation4 + $0x30] sm:$0xff]
      %v1832 = vpack.c.bf16 %v1828, %v1827
      %v1833 = vpack.c.bf16 %v1830, %v1829
      %v1834 = vpack.c.bf16 %v1831, %v1831
      %s1835 = scalar_lea.vmem %s4, 192
      %v1836 = vld [vmem:[%s1835] sm:$0xf]
      %v1837 = vld [vmem:[%s1835 + $0x4] sm:$0xf]
      %v1838 = vld [vmem:[%s1835 + $0x8] sm:$0xf]
      %v1839 = vld [vmem:[%s1835 + $0xc] sm:$0xf]
      %v1840 = vld [vmem:[%s1835 + $0x10] sm:$0xf]
      %v1841 = vld [vmem:[%s1835 + $0x14] sm:$0xf]
      %v1842 = vld [vmem:[%s1835 + $0x18] sm:$0xf]
      %v1843 = vld [vmem:[%s1835 + $0x1c] sm:$0xf]
      %v1852 = vunpack.c.l.b16 %v1836
      %v1853 = vunpack.c.l.b16 %v1837
      %v1854 = vunpack.c.l.b16 %v1838
      %v1855 = vunpack.c.l.b16 %v1839
      %v1856 = vunpack.c.l.b16 %v1840
      %v1857 = vunpack.c.l.b16 %v1841
      %v1858 = vunpack.c.l.b16 %v1842
      %v1859 = vunpack.c.l.b16 %v1843
      %v1860 = vpack.c.b16 %v1853, %v1852
      %v1861 = vpack.c.b16 %v1855, %v1854
      %v1862 = vpack.c.b16 %v1857, %v1856
      %v1863 = vpack.c.b16 %v1859, %v1858
      %v1869 = vsel %vm52, %v1832, 0
      %v1872 = vsel %vm52, %v1833, 0
      %v1875 = vsel %vm52, %v1834, 0
      %1877 = vmatprep.subr.bf16.mxu0 0
      %1878 = vmatpush1.bf16.msra.mxu0 %v1860
      %1879 = vmatprep.subr.bf16.mxu0 0
      %1880 = vmatpush1.bf16.msra.mxu0 %v1861
      %1881 = vmatprep.subr.bf16.mxu0 0
      %1882 = vmatpush1.bf16.msra.mxu0 %v1862
      %1883 = vmatprep.subr.bf16.mxu0 0
      %1884 = vmatpush1.bf16.msra.mxu0 %v1863
      %1885 = vmatprep.subr.bf16.mxu0 0
      %1886 = vmatpush1.bf16.msra.mxu0 0
      %1887 = vmatprep.subr.bf16.mxu0 0
      %1888 = vmatpush1.bf16.msra.mxu0 0
      %1889 = vmatprep.subr.bf16.mxu0 0
      %1890 = vmatpush1.bf16.msra.mxu0 0
      %1891 = vmatprep.subr.bf16.mxu0 0
      %1892 = vmatpush1.bf16.msra.mxu0 0
      %1893 = vmatprep.subr.bf16.mxu0 0
      %1894 = vmatpush1.bf16.msra.mxu0 0
      %1895 = vmatprep.subr.bf16.mxu0 0
      %1896 = vmatpush1.bf16.msra.mxu0 0
      %1897 = vmatprep.subr.bf16.mxu0 0
      %1898 = vmatpush1.bf16.msra.mxu0 0
      %1899 = vmatprep.subr.bf16.mxu0 0
      %1900 = vmatpush1.bf16.msra.mxu0 0
      %1901 = vmatprep.subr.bf16.mxu0 0
      %1902 = vmatpush1.bf16.msra.mxu0 0
      %1903 = vmatprep.subr.bf16.mxu0 0
      %1904 = vmatpush1.bf16.msra.mxu0 0
      %1905 = vmatprep.subr.bf16.mxu0 0
      %1906 = vmatpush1.bf16.msra.mxu0 0
      %1907 = vmatprep.subr.bf16.mxu0 0
      %1908 = vmatpush1.bf16.msra.mxu0 0
      %1909 = vmatprep.mubr.bf16.mxu0 0
      %1910 = vmatmul.mubr.bf16.gmra.mrb[0].mxu0 %v1869
      %v1911 = vpop.f32.mrb[0].mxu0
      %v1912 = vadd.f32 0.0, %v1911
      %v1913 = vpop.f32.mrb[0].mxu0
      %v1914 = vpop.f32.mrb[0].mxu0
      %v1915 = vadd.f32 0.0, %v1914
      %v1916 = vpop.f32.mrb[0].mxu0
      %1917 = vmatprep.mubr.bf16.mxu0 0
      %1918 = vmatmul.mubr.bf16.gmra.mrb[0].mxu0 %v1872
      %v1919 = vpop.f32.mrb[0].mxu0
      %v1920 = vadd.f32 0.0, %v1919
      %v1921 = vpop.f32.mrb[0].mxu0
      %v1922 = vpop.f32.mrb[0].mxu0
      %v1923 = vadd.f32 0.0, %v1922
      %v1924 = vpop.f32.mrb[0].mxu0
      %1925 = vmatprep.mubr.bf16.mxu0 0
      %1926 = vmatmul.mubr.bf16.gmra.mrb[0].mxu0 %v1875
      %v1927 = vpop.f32.mrb[0].mxu0
      %v1928 = vadd.f32 0.0, %v1927
      %v1929 = vpop.f32.mrb[0].mxu0
      %v1930 = vpop.f32.mrb[0].mxu0
      %v1931 = vpop.f32.mrb[0].mxu0
      %1932 = vdwg.mxu0
      %v1933 = vadd.f32 %v1822, %v1912
      %v1934 = vadd.f32 %v1823, %v1915
      %v1935 = vadd.f32 %v1824, %v1920
      %v1936 = vadd.f32 %v1825, %v1923
      %v1937 = vadd.f32 %v1826, %v1928
      %v1938 = vld [vmem:[#allocation4 + $0x11] sm:$0xff]
      %v1939 = vld [vmem:[#allocation4 + $0x19] sm:$0xff]
      %v1940 = vld [vmem:[#allocation4 + $0x21] sm:$0xff]
      %v1941 = vld [vmem:[#allocation4 + $0x29] sm:$0xff]
      %v1942 = vld [vmem:[#allocation4 + $0x31] sm:$0xff]
      %v1943 = vpack.c.bf16 %v1939, %v1938
      %v1944 = vpack.c.bf16 %v1941, %v1940
      %v1945 = vpack.c.bf16 %v1942, %v1942
      %s1946 = scalar_lea.vmem %s4, 224
      %v1947 = vld [vmem:[%s1946] sm:$0xf]
      %v1948 = vld [vmem:[%s1946 + $0x4] sm:$0xf]
      %v1949 = vld [vmem:[%s1946 + $0x8] sm:$0xf]
      %v1950 = vld [vmem:[%s1946 + $0xc] sm:$0xf]
      %v1951 = vld [vmem:[%s1946 + $0x10] sm:$0xf]
      %v1952 = vld [vmem:[%s1946 + $0x14] sm:$0xf]
      %v1953 = vld [vmem:[%s1946 + $0x18] sm:$0xf]
      %v1954 = vld [vmem:[%s1946 + $0x1c] sm:$0xf]
      %v1963 = vunpack.c.l.b16 %v1947
      %v1964 = vunpack.c.l.b16 %v1948
      %v1965 = vunpack.c.l.b16 %v1949
      %v1966 = vunpack.c.l.b16 %v1950
      %v1967 = vunpack.c.l.b16 %v1951
      %v1968 = vunpack.c.l.b16 %v1952
      %v1969 = vunpack.c.l.b16 %v1953
      %v1970 = vunpack.c.l.b16 %v1954
      %v1971 = vpack.c.b16 %v1964, %v1963
      %v1972 = vpack.c.b16 %v1966, %v1965
      %v1973 = vpack.c.b16 %v1968, %v1967
      %v1974 = vpack.c.b16 %v1970, %v1969
      %v1980 = vsel %vm52, %v1943, 0
      %v1983 = vsel %vm52, %v1944, 0
      %v1986 = vsel %vm52, %v1945, 0
      %1988 = vmatprep.subr.bf16.mxu0 0
      %1989 = vmatpush1.bf16.msra.mxu0 %v1971
      %1990 = vmatprep.subr.bf16.mxu0 0
      %1991 = vmatpush1.bf16.msra.mxu0 %v1972
      %1992 = vmatprep.subr.bf16.mxu0 0
      %1993 = vmatpush1.bf16.msra.mxu0 %v1973
      %1994 = vmatprep.subr.bf16.mxu0 0
      %1995 = vmatpush1.bf16.msra.mxu0 %v1974
      %1996 = vmatprep.subr.bf16.mxu0 0
      %1997 = vmatpush1.bf16.msra.mxu0 0
      %1998 = vmatprep.subr.bf16.mxu0 0
      %1999 = vmatpush1.bf16.msra.mxu0 0
      %2000 = vmatprep.subr.bf16.mxu0 0
      %2001 = vmatpush1.bf16.msra.mxu0 0
      %2002 = vmatprep.subr.bf16.mxu0 0
      %2003 = vmatpush1.bf16.msra.mxu0 0
      %2004 = vmatprep.subr.bf16.mxu0 0
      %2005 = vmatpush1.bf16.msra.mxu0 0
      %2006 = vmatprep.subr.bf16.mxu0 0
      %2007 = vmatpush1.bf16.msra.mxu0 0
      %2008 = vmatprep.subr.bf16.mxu0 0
      %2009 = vmatpush1.bf16.msra.mxu0 0
      %2010 = vmatprep.subr.bf16.mxu0 0
      %2011 = vmatpush1.bf16.msra.mxu0 0
      %2012 = vmatprep.subr.bf16.mxu0 0
      %2013 = vmatpush1.bf16.msra.mxu0 0
      %2014 = vmatprep.subr.bf16.mxu0 0
      %2015 = vmatpush1.bf16.msra.mxu0 0
      %2016 = vmatprep.subr.bf16.mxu0 0
      %2017 = vmatpush1.bf16.msra.mxu0 0
      %2018 = vmatprep.subr.bf16.mxu0 0
      %2019 = vmatpush1.bf16.msra.mxu0 0
      %2020 = vmatprep.mubr.bf16.mxu0 0
      %2021 = vmatmul.mubr.bf16.gmra.mrb[0].mxu0 %v1980
      %v2022 = vpop.f32.mrb[0].mxu0
      %v2023 = vadd.f32 0.0, %v2022
      %v2024 = vpop.f32.mrb[0].mxu0
      %v2025 = vpop.f32.mrb[0].mxu0
      %v2026 = vadd.f32 0.0, %v2025
      %v2027 = vpop.f32.mrb[0].mxu0
      %2028 = vmatprep.mubr.bf16.mxu0 0
      %2029 = vmatmul.mubr.bf16.gmra.mrb[0].mxu0 %v1983
      %v2030 = vpop.f32.mrb[0].mxu0
      %v2031 = vadd.f32 0.0, %v2030
      %v2032 = vpop.f32.mrb[0].mxu0
      %v2033 = vpop.f32.mrb[0].mxu0
      %v2034 = vadd.f32 0.0, %v2033
      %v2035 = vpop.f32.mrb[0].mxu0
      %2036 = vmatprep.mubr.bf16.mxu0 0
      %2037 = vmatmul.mubr.bf16.gmra.mrb[0].mxu0 %v1986
      %v2038 = vpop.f32.mrb[0].mxu0
      %v2039 = vadd.f32 0.0, %v2038
      %v2040 = vpop.f32.mrb[0].mxu0
      %v2041 = vpop.f32.mrb[0].mxu0
      %v2042 = vpop.f32.mrb[0].mxu0
      %2043 = vdwg.mxu0
      %v2044 = vadd.f32 %v1933, %v2023
      %v2045 = vadd.f32 %v1934, %v2026
      %v2046 = vadd.f32 %v1935, %v2031
      %v2047 = vadd.f32 %v1936, %v2034
      %v2048 = vadd.f32 %v1937, %v2039
      %v2049 = vld [vmem:[#allocation4 + $0x12] sm:$0xff]
      %v2050 = vld [vmem:[#allocation4 + $0x1a] sm:$0xff]
      %v2051 = vld [vmem:[#allocation4 + $0x22] sm:$0xff]
      %v2052 = vld [vmem:[#allocation4 + $0x2a] sm:$0xff]
      %v2053 = vld [vmem:[#allocation4 + $0x32] sm:$0xff]
      %v2054 = vpack.c.bf16 %v2050, %v2049
      %v2055 = vpack.c.bf16 %v2052, %v2051
      %v2056 = vpack.c.bf16 %v2053, %v2053
      %s2057 = scalar_lea.vmem %s4, 256
      %v2058 = vld [vmem:[%s2057] sm:$0xf]
      %v2059 = vld [vmem:[%s2057 + $0x4] sm:$0xf]
      %v2060 = vld [vmem:[%s2057 + $0x8] sm:$0xf]
      %v2061 = vld [vmem:[%s2057 + $0xc] sm:$0xf]
      %v2062 = vld [vmem:[%s2057 + $0x10] sm:$0xf]
      %v2063 = vld [vmem:[%s2057 + $0x14] sm:$0xf]
      %v2064 = vld [vmem:[%s2057 + $0x18] sm:$0xf]
      %v2065 = vld [vmem:[%s2057 + $0x1c] sm:$0xf]
      %v2074 = vunpack.c.l.b16 %v2058
      %v2075 = vunpack.c.l.b16 %v2059
      %v2076 = vunpack.c.l.b16 %v2060
      %v2077 = vunpack.c.l.b16 %v2061
      %v2078 = vunpack.c.l.b16 %v2062
      %v2079 = vunpack.c.l.b16 %v2063
      %v2080 = vunpack.c.l.b16 %v2064
      %v2081 = vunpack.c.l.b16 %v2065
      %v2082 = vpack.c.b16 %v2075, %v2074
      %v2083 = vpack.c.b16 %v2077, %v2076
      %v2084 = vpack.c.b16 %v2079, %v2078
      %v2085 = vpack.c.b16 %v2081, %v2080
      %v2091 = vsel %vm52, %v2054, 0
      %v2094 = vsel %vm52, %v2055, 0
      %v2097 = vsel %vm52, %v2056, 0
      %2099 = vmatprep.subr.bf16.mxu0 0
      %2100 = vmatpush1.bf16.msra.mxu0 %v2082
      %2101 = vmatprep.subr.bf16.mxu0 0
      %2102 = vmatpush1.bf16.msra.mxu0 %v2083
      %2103 = vmatprep.subr.bf16.mxu0 0
      %2104 = vmatpush1.bf16.msra.mxu0 %v2084
      %2105 = vmatprep.subr.bf16.mxu0 0
      %2106 = vmatpush1.bf16.msra.mxu0 %v2085
      %2107 = vmatprep.subr.bf16.mxu0 0
      %2108 = vmatpush1.bf16.msra.mxu0 0
      %2109 = vmatprep.subr.bf16.mxu0 0
      %2110 = vmatpush1.bf16.msra.mxu0 0
      %2111 = vmatprep.subr.bf16.mxu0 0
      %2112 = vmatpush1.bf16.msra.mxu0 0
      %2113 = vmatprep.subr.bf16.mxu0 0
      %2114 = vmatpush1.bf16.msra.mxu0 0
      %2115 = vmatprep.subr.bf16.mxu0 0
      %2116 = vmatpush1.bf16.msra.mxu0 0
      %2117 = vmatprep.subr.bf16.mxu0 0
      %2118 = vmatpush1.bf16.msra.mxu0 0
      %2119 = vmatprep.subr.bf16.mxu0 0
      %2120 = vmatpush1.bf16.msra.mxu0 0
      %2121 = vmatprep.subr.bf16.mxu0 0
      %2122 = vmatpush1.bf16.msra.mxu0 0
      %2123 = vmatprep.subr.bf16.mxu0 0
      %2124 = vmatpush1.bf16.msra.mxu0 0
      %2125 = vmatprep.subr.bf16.mxu0 0
      %2126 = vmatpush1.bf16.msra.mxu0 0
      %2127 = vmatprep.subr.bf16.mxu0 0
      %2128 = vmatpush1.bf16.msra.mxu0 0
      %2129 = vmatprep.subr.bf16.mxu0 0
      %2130 = vmatpush1.bf16.msra.mxu0 0
      %2131 = vmatprep.mubr.bf16.mxu0 0
      %2132 = vmatmul.mubr.bf16.gmra.mrb[0].mxu0 %v2091
      %v2133 = vpop.f32.mrb[0].mxu0
      %v2134 = vadd.f32 0.0, %v2133
      %v2135 = vpop.f32.mrb[0].mxu0
      %v2136 = vpop.f32.mrb[0].mxu0
      %v2137 = vadd.f32 0.0, %v2136
      %v2138 = vpop.f32.mrb[0].mxu0
      %2139 = vmatprep.mubr.bf16.mxu0 0
      %2140 = vmatmul.mubr.bf16.gmra.mrb[0].mxu0 %v2094
      %v2141 = vpop.f32.mrb[0].mxu0
      %v2142 = vadd.f32 0.0, %v2141
      %v2143 = vpop.f32.mrb[0].mxu0
      %v2144 = vpop.f32.mrb[0].mxu0
      %v2145 = vadd.f32 0.0, %v2144
      %v2146 = vpop.f32.mrb[0].mxu0
      %2147 = vmatprep.mubr.bf16.mxu0 0
      %2148 = vmatmul.mubr.bf16.gmra.mrb[0].mxu0 %v2097
      %v2149 = vpop.f32.mrb[0].mxu0
      %v2150 = vadd.f32 0.0, %v2149
      %v2151 = vpop.f32.mrb[0].mxu0
      %v2152 = vpop.f32.mrb[0].mxu0
      %v2153 = vpop.f32.mrb[0].mxu0
      %2154 = vdwg.mxu0
      %v2155 = vadd.f32 %v2044, %v2134
      %v2156 = vadd.f32 %v2045, %v2137
      %v2157 = vadd.f32 %v2046, %v2142
      %v2158 = vadd.f32 %v2047, %v2145
      %v2159 = vadd.f32 %v2048, %v2150
      %v2160 = vld [vmem:[%s5] sm:$0x1]
      %v2162 = vlaneseq
      %v2163 = vshrl.u32 %v2162, 7
      %v2164 = vsub.s32 0, %v2163
      %v2165 = vrot.slane %v2160, %v2164
      %v2167 = vadd.f32 %v2155, %v2165
      %v2168 = vadd.f32 %v2156, %v2165
      %v2169 = vadd.f32 %v2157, %v2165
      %v2170 = vadd.f32 %v2158, %v2165
      %v2171 = vadd.f32 %v2159, %v2165
      %v2172 = vmax.f32 %v2167, 0.0
      %v2173 = vmax.f32 %v2168, 0.0
      %v2174 = vmax.f32 %v2169, 0.0
      %v2175 = vmax.f32 %v2170, 0.0
      %v2176 = vmax.f32 %v2171, 0.0
      %v2177 = vsel %vm135, 1, 0
      %v2178 = vsel %vm136, 1, 0
      %v2179 = vsel %vm137, 1, 0
      %v2180 = vsel %vm138, 1, 0
      %v2181 = vsel %vm139, 1, 0
      %vm2182 = vcmp.eq.s32.totalorder %v2177, 1
      %vm2183 = vcmp.eq.s32.totalorder %v2178, 1
      %vm2184 = vcmp.eq.s32.totalorder %v2179, 1
      %vm2185 = vcmp.eq.s32.totalorder %v2180, 1
      %vm2186 = vcmp.eq.s32.totalorder %v2181, 1
      %v2187 = vsel %vm2182, %v2172, 0.0
      %v2188 = vsel %vm2183, %v2173, 0.0
      %v2189 = vsel %vm2184, %v2174, 0.0
      %v2190 = vsel %vm2185, %v2175, 0.0
      %v2191 = vsel %vm2186, %v2176, 0.0
      %2192 = vst.msk [vmem:[#allocation5 + $0x9] sm:$0xff] %vm52, %v2187
      %2193 = vst.msk [vmem:[#allocation5 + $0x11] sm:$0xff] %vm52, %v2188
      %2194 = vst.msk [vmem:[#allocation5 + $0x19] sm:$0xff] %vm52, %v2189
      %2195 = vst.msk [vmem:[#allocation5 + $0x21] sm:$0xff] %vm52, %v2190
      %2196 = vst.msk [vmem:[#allocation5 + $0x29] sm:$0xff] %vm52, %v2191
      %v2197 = vld [vmem:[#allocation5] sm:$0xff]
      %v2198 = vld [vmem:[#allocation5 + $0x8] sm:$0xff]
      %v2199 = vld [vmem:[#allocation5 + $0x10] sm:$0xff]
      %v2200 = vld [vmem:[#allocation5 + $0x18] sm:$0xff]
      %v2201 = vld [vmem:[#allocation5 + $0x20] sm:$0xff]
      %v2202 = vpack.c.bf16 %v2198, %v2197
      %v2203 = vpack.c.bf16 %v2200, %v2199
      %v2204 = vpack.c.bf16 %v2201, %v2201
      %v2205 = vld [vmem:[%s6] sm:$0xf]
      %v2206 = vld [vmem:[%s6 + $0x4] sm:$0xf]
      %v2207 = vld [vmem:[%s6 + $0x8] sm:$0xf]
      %v2208 = vld [vmem:[%s6 + $0xc] sm:$0xf]
      %v2209 = vld [vmem:[%s6 + $0x10] sm:$0xf]
      %v2210 = vld [vmem:[%s6 + $0x14] sm:$0xf]
      %v2211 = vld [vmem:[%s6 + $0x18] sm:$0xf]
      %v2212 = vld [vmem:[%s6 + $0x1c] sm:$0xf]
      %v2213 = vld [vmem:[#allocation5 + $0x1] sm:$0xff]
      %v2214 = vld [vmem:[#allocation5 + $0x9] sm:$0xff]
      %v2215 = vld [vmem:[#allocation5 + $0x11] sm:$0xff]
      %v2216 = vld [vmem:[#allocation5 + $0x19] sm:$0xff]
      %v2217 = vld [vmem:[#allocation5 + $0x21] sm:$0xff]
      %v2218 = vpack.c.bf16 %v2214, %v2213
      %v2219 = vpack.c.bf16 %v2216, %v2215
      %v2220 = vpack.c.bf16 %v2217, %v2217
      %s2221 = scalar_lea.vmem %s6, 32
      %v2222 = vld [vmem:[%s2221] sm:$0xf]
      %v2223 = vld [vmem:[%s2221 + $0x4] sm:$0xf]
      %v2224 = vld [vmem:[%s2221 + $0x8] sm:$0xf]
      %v2225 = vld [vmem:[%s2221 + $0xc] sm:$0xf]
      %v2226 = vld [vmem:[%s2221 + $0x10] sm:$0xf]
      %v2227 = vld [vmem:[%s2221 + $0x14] sm:$0xf]
      %v2228 = vld [vmem:[%s2221 + $0x18] sm:$0xf]
      %v2229 = vld [vmem:[%s2221 + $0x1c] sm:$0xf]
      %v2238 = vunpack.c.l.b16 %v2222
      %v2239 = vunpack.c.l.b16 %v2223
      %v2240 = vunpack.c.l.b16 %v2224
      %v2241 = vunpack.c.l.b16 %v2225
      %v2242 = vunpack.c.l.b16 %v2226
      %v2243 = vunpack.c.l.b16 %v2227
      %v2244 = vunpack.c.l.b16 %v2228
      %v2245 = vunpack.c.l.b16 %v2229
      %v2246 = vpack.c.b16 %v2239, %v2238
      %v2247 = vpack.c.b16 %v2241, %v2240
      %v2248 = vpack.c.b16 %v2243, %v2242
      %v2249 = vpack.c.b16 %v2245, %v2244
      %v2255 = vsel %vm52, %v2218, 0
      %v2258 = vsel %vm52, %v2219, 0
      %v2261 = vsel %vm52, %v2220, 0
      %2263 = vmatprep.subr.bf16.mxu0 0
      %2264 = vmatpush1.bf16.msra.mxu0 %v2246
      %2265 = vmatprep.subr.bf16.mxu0 0
      %2266 = vmatpush1.bf16.msra.mxu0 %v2247
      %2267 = vmatprep.subr.bf16.mxu0 0
      %2268 = vmatpush1.bf16.msra.mxu0 %v2248
      %2269 = vmatprep.subr.bf16.mxu0 0
      %2270 = vmatpush1.bf16.msra.mxu0 %v2249
      %2271 = vmatprep.subr.bf16.mxu0 0
      %2272 = vmatpush1.bf16.msra.mxu0 0
      %2273 = vmatprep.subr.bf16.mxu0 0
      %2274 = vmatpush1.bf16.msra.mxu0 0
      %2275 = vmatprep.subr.bf16.mxu0 0
      %2276 = vmatpush1.bf16.msra.mxu0 0
      %2277 = vmatprep.subr.bf16.mxu0 0
      %2278 = vmatpush1.bf16.msra.mxu0 0
      %2279 = vmatprep.subr.bf16.mxu0 0
      %2280 = vmatpush1.bf16.msra.mxu0 0
      %2281 = vmatprep.subr.bf16.mxu0 0
      %2282 = vmatpush1.bf16.msra.mxu0 0
      %2283 = vmatprep.subr.bf16.mxu0 0
      %2284 = vmatpush1.bf16.msra.mxu0 0
      %2285 = vmatprep.subr.bf16.mxu0 0
      %2286 = vmatpush1.bf16.msra.mxu0 0
      %2287 = vmatprep.subr.bf16.mxu0 0
      %2288 = vmatpush1.bf16.msra.mxu0 0
      %2289 = vmatprep.subr.bf16.mxu0 0
      %2290 = vmatpush1.bf16.msra.mxu0 0
      %2291 = vmatprep.subr.bf16.mxu0 0
      %2292 = vmatpush1.bf16.msra.mxu0 0
      %2293 = vmatprep.subr.bf16.mxu0 0
      %2294 = vmatpush1.bf16.msra.mxu0 0
      %2295 = vmatprep.mubr.bf16.mxu0 0
      %2296 = vmatmul.mubr.bf16.gmra.mrb[0].mxu0 %v2255
      %v2297 = vpop.f32.mrb[0].mxu0
      %v2298 = vadd.f32 0.0, %v2297
      %v2299 = vpop.f32.mrb[0].mxu0
      %v2300 = vpop.f32.mrb[0].mxu0
      %v2301 = vadd.f32 0.0, %v2300
      %v2302 = vpop.f32.mrb[0].mxu0
      %2303 = vmatprep.mubr.bf16.mxu0 0
      %2304 = vmatmul.mubr.bf16.gmra.mrb[0].mxu0 %v2258
      %v2305 = vpop.f32.mrb[0].mxu0
      %v2306 = vadd.f32 0.0, %v2305
      %v2307 = vpop.f32.mrb[0].mxu0
      %v2308 = vpop.f32.mrb[0].mxu0
      %v2309 = vadd.f32 0.0, %v2308
      %v2310 = vpop.f32.mrb[0].mxu0
      %2311 = vmatprep.mubr.bf16.mxu0 0
      %2312 = vmatmul.mubr.bf16.gmra.mrb[0].mxu0 %v2261
      %v2313 = vpop.f32.mrb[0].mxu0
      %v2314 = vadd.f32 0.0, %v2313
      %v2315 = vpop.f32.mrb[0].mxu0
      %v2316 = vpop.f32.mrb[0].mxu0
      %v2317 = vpop.f32.mrb[0].mxu0
      %2318 = vdwg.mxu0
      %v2327 = vunpack.c.l.b16 %v2205
      %v2328 = vunpack.c.l.b16 %v2206
      %v2329 = vunpack.c.l.b16 %v2207
      %v2330 = vunpack.c.l.b16 %v2208
      %v2331 = vunpack.c.l.b16 %v2209
      %v2332 = vunpack.c.l.b16 %v2210
      %v2333 = vunpack.c.l.b16 %v2211
      %v2334 = vunpack.c.l.b16 %v2212
      %v2335 = vpack.c.b16 %v2328, %v2327
      %v2336 = vpack.c.b16 %v2330, %v2329
      %v2337 = vpack.c.b16 %v2332, %v2331
      %v2338 = vpack.c.b16 %v2334, %v2333
      %v2344 = vsel %vm52, %v2202, 0
      %v2347 = vsel %vm52, %v2203, 0
      %v2350 = vsel %vm52, %v2204, 0
      %2352 = vmatprep.subr.bf16.mxu0 0
      %2353 = vmatpush1.bf16.msra.mxu0 %v2335
      %2354 = vmatprep.subr.bf16.mxu0 0
      %2355 = vmatpush1.bf16.msra.mxu0 %v2336
      %2356 = vmatprep.subr.bf16.mxu0 0
      %2357 = vmatpush1.bf16.msra.mxu0 %v2337
      %2358 = vmatprep.subr.bf16.mxu0 0
      %2359 = vmatpush1.bf16.msra.mxu0 %v2338
      %2360 = vmatprep.subr.bf16.mxu0 0
      %2361 = vmatpush1.bf16.msra.mxu0 0
      %2362 = vmatprep.subr.bf16.mxu0 0
      %2363 = vmatpush1.bf16.msra.mxu0 0
      %2364 = vmatprep.subr.bf16.mxu0 0
      %2365 = vmatpush1.bf16.msra.mxu0 0
      %2366 = vmatprep.subr.bf16.mxu0 0
      %2367 = vmatpush1.bf16.msra.mxu0 0
      %2368 = vmatprep.subr.bf16.mxu0 0
      %2369 = vmatpush1.bf16.msra.mxu0 0
      %2370 = vmatprep.subr.bf16.mxu0 0
      %2371 = vmatpush1.bf16.msra.mxu0 0
      %2372 = vmatprep.subr.bf16.mxu0 0
      %2373 = vmatpush1.bf16.msra.mxu0 0
      %2374 = vmatprep.subr.bf16.mxu0 0
      %2375 = vmatpush1.bf16.msra.mxu0 0
      %2376 = vmatprep.subr.bf16.mxu0 0
      %2377 = vmatpush1.bf16.msra.mxu0 0
      %2378 = vmatprep.subr.bf16.mxu0 0
      %2379 = vmatpush1.bf16.msra.mxu0 0
      %2380 = vmatprep.subr.bf16.mxu0 0
      %2381 = vmatpush1.bf16.msra.mxu0 0
      %2382 = vmatprep.subr.bf16.mxu0 0
      %2383 = vmatpush1.bf16.msra.mxu0 0
      %2384 = vmatprep.mubr.bf16.mxu0 0
      %2385 = vmatmul.mubr.bf16.gmra.mrb[0].mxu0 %v2344
      %v2386 = vpop.f32.mrb[0].mxu0
      %v2387 = vadd.f32 %v2298, %v2386
      %v2388 = vpop.f32.mrb[0].mxu0
      %v2389 = vpop.f32.mrb[0].mxu0
      %v2390 = vadd.f32 %v2301, %v2389
      %v2391 = vpop.f32.mrb[0].mxu0
      %2392 = vmatprep.mubr.bf16.mxu0 0
      %2393 = vmatmul.mubr.bf16.gmra.mrb[0].mxu0 %v2347
      %v2394 = vpop.f32.mrb[0].mxu0
      %v2395 = vadd.f32 %v2306, %v2394
      %v2396 = vpop.f32.mrb[0].mxu0
      %v2397 = vpop.f32.mrb[0].mxu0
      %v2398 = vadd.f32 %v2309, %v2397
      %v2399 = vpop.f32.mrb[0].mxu0
      %2400 = vmatprep.mubr.bf16.mxu0 0
      %2401 = vmatmul.mubr.bf16.gmra.mrb[0].mxu0 %v2350
      %v2402 = vpop.f32.mrb[0].mxu0
      %v2403 = vadd.f32 %v2314, %v2402
      %v2404 = vpop.f32.mrb[0].mxu0
      %v2405 = vpop.f32.mrb[0].mxu0
      %v2406 = vpop.f32.mrb[0].mxu0
      %2407 = vdwg.mxu0
      %v2408 = vld [vmem:[#allocation5 + $0x2] sm:$0xff]
      %v2409 = vld [vmem:[#allocation5 + $0xa] sm:$0xff]
      %v2410 = vld [vmem:[#allocation5 + $0x12] sm:$0xff]
      %v2411 = vld [vmem:[#allocation5 + $0x1a] sm:$0xff]
      %v2412 = vld [vmem:[#allocation5 + $0x22] sm:$0xff]
      %v2413 = vpack.c.bf16 %v2409, %v2408
      %v2414 = vpack.c.bf16 %v2411, %v2410
      %v2415 = vpack.c.bf16 %v2412, %v2412
      %s2416 = scalar_lea.vmem %s6, 64
      %v2417 = vld [vmem:[%s2416] sm:$0xf]
      %v2418 = vld [vmem:[%s2416 + $0x4] sm:$0xf]
      %v2419 = vld [vmem:[%s2416 + $0x8] sm:$0xf]
      %v2420 = vld [vmem:[%s2416 + $0xc] sm:$0xf]
      %v2421 = vld [vmem:[%s2416 + $0x10] sm:$0xf]
      %v2422 = vld [vmem:[%s2416 + $0x14] sm:$0xf]
      %v2423 = vld [vmem:[%s2416 + $0x18] sm:$0xf]
      %v2424 = vld [vmem:[%s2416 + $0x1c] sm:$0xf]
      %v2433 = vunpack.c.l.b16 %v2417
      %v2434 = vunpack.c.l.b16 %v2418
      %v2435 = vunpack.c.l.b16 %v2419
      %v2436 = vunpack.c.l.b16 %v2420
      %v2437 = vunpack.c.l.b16 %v2421
      %v2438 = vunpack.c.l.b16 %v2422
      %v2439 = vunpack.c.l.b16 %v2423
      %v2440 = vunpack.c.l.b16 %v2424
      %v2441 = vpack.c.b16 %v2434, %v2433
      %v2442 = vpack.c.b16 %v2436, %v2435
      %v2443 = vpack.c.b16 %v2438, %v2437
      %v2444 = vpack.c.b16 %v2440, %v2439
      %v2450 = vsel %vm52, %v2413, 0
      %v2453 = vsel %vm52, %v2414, 0
      %v2456 = vsel %vm52, %v2415, 0
      %2458 = vmatprep.subr.bf16.mxu0 0
      %2459 = vmatpush1.bf16.msra.mxu0 %v2441
      %2460 = vmatprep.subr.bf16.mxu0 0
      %2461 = vmatpush1.bf16.msra.mxu0 %v2442
      %2462 = vmatprep.subr.bf16.mxu0 0
      %2463 = vmatpush1.bf16.msra.mxu0 %v2443
      %2464 = vmatprep.subr.bf16.mxu0 0
      %2465 = vmatpush1.bf16.msra.mxu0 %v2444
      %2466 = vmatprep.subr.bf16.mxu0 0
      %2467 = vmatpush1.bf16.msra.mxu0 0
      %2468 = vmatprep.subr.bf16.mxu0 0
      %2469 = vmatpush1.bf16.msra.mxu0 0
      %2470 = vmatprep.subr.bf16.mxu0 0
      %2471 = vmatpush1.bf16.msra.mxu0 0
      %2472 = vmatprep.subr.bf16.mxu0 0
      %2473 = vmatpush1.bf16.msra.mxu0 0
      %2474 = vmatprep.subr.bf16.mxu0 0
      %2475 = vmatpush1.bf16.msra.mxu0 0
      %2476 = vmatprep.subr.bf16.mxu0 0
      %2477 = vmatpush1.bf16.msra.mxu0 0
      %2478 = vmatprep.subr.bf16.mxu0 0
      %2479 = vmatpush1.bf16.msra.mxu0 0
      %2480 = vmatprep.subr.bf16.mxu0 0
      %2481 = vmatpush1.bf16.msra.mxu0 0
      %2482 = vmatprep.subr.bf16.mxu0 0
      %2483 = vmatpush1.bf16.msra.mxu0 0
      %2484 = vmatprep.subr.bf16.mxu0 0
      %2485 = vmatpush1.bf16.msra.mxu0 0
      %2486 = vmatprep.subr.bf16.mxu0 0
      %2487 = vmatpush1.bf16.msra.mxu0 0
      %2488 = vmatprep.subr.bf16.mxu0 0
      %2489 = vmatpush1.bf16.msra.mxu0 0
      %2490 = vmatprep.mubr.bf16.mxu0 0
      %2491 = vmatmul.mubr.bf16.gmra.mrb[0].mxu0 %v2450
      %v2492 = vpop.f32.mrb[0].mxu0
      %v2493 = vadd.f32 0.0, %v2492
      %v2494 = vpop.f32.mrb[0].mxu0
      %v2495 = vpop.f32.mrb[0].mxu0
      %v2496 = vadd.f32 0.0, %v2495
      %v2497 = vpop.f32.mrb[0].mxu0
      %2498 = vmatprep.mubr.bf16.mxu0 0
      %2499 = vmatmul.mubr.bf16.gmra.mrb[0].mxu0 %v2453
      %v2500 = vpop.f32.mrb[0].mxu0
      %v2501 = vadd.f32 0.0, %v2500
      %v2502 = vpop.f32.mrb[0].mxu0
      %v2503 = vpop.f32.mrb[0].mxu0
      %v2504 = vadd.f32 0.0, %v2503
      %v2505 = vpop.f32.mrb[0].mxu0
      %2506 = vmatprep.mubr.bf16.mxu0 0
      %2507 = vmatmul.mubr.bf16.gmra.mrb[0].mxu0 %v2456
      %v2508 = vpop.f32.mrb[0].mxu0
      %v2509 = vadd.f32 0.0, %v2508
      %v2510 = vpop.f32.mrb[0].mxu0
      %v2511 = vpop.f32.mrb[0].mxu0
      %v2512 = vpop.f32.mrb[0].mxu0
      %2513 = vdwg.mxu0
      %v2514 = vadd.f32 %v2387, %v2493
      %v2515 = vadd.f32 %v2390, %v2496
      %v2516 = vadd.f32 %v2395, %v2501
      %v2517 = vadd.f32 %v2398, %v2504
      %v2518 = vadd.f32 %v2403, %v2509
      %v2519 = vld [vmem:[#allocation5 + $0x8] sm:$0xff]
      %v2520 = vld [vmem:[#allocation5 + $0x10] sm:$0xff]
      %v2521 = vld [vmem:[#allocation5 + $0x18] sm:$0xff]
      %v2522 = vld [vmem:[#allocation5 + $0x20] sm:$0xff]
      %v2523 = vld [vmem:[#allocation5 + $0x28] sm:$0xff]
      %v2524 = vpack.c.bf16 %v2520, %v2519
      %v2525 = vpack.c.bf16 %v2522, %v2521
      %v2526 = vpack.c.bf16 %v2523, %v2523
      %s2527 = scalar_lea.vmem %s6, 96
      %v2528 = vld [vmem:[%s2527] sm:$0xf]
      %v2529 = vld [vmem:[%s2527 + $0x4] sm:$0xf]
      %v2530 = vld [vmem:[%s2527 + $0x8] sm:$0xf]
      %v2531 = vld [vmem:[%s2527 + $0xc] sm:$0xf]
      %v2532 = vld [vmem:[%s2527 + $0x10] sm:$0xf]
      %v2533 = vld [vmem:[%s2527 + $0x14] sm:$0xf]
      %v2534 = vld [vmem:[%s2527 + $0x18] sm:$0xf]
      %v2535 = vld [vmem:[%s2527 + $0x1c] sm:$0xf]
      %v2544 = vunpack.c.l.b16 %v2528
      %v2545 = vunpack.c.l.b16 %v2529
      %v2546 = vunpack.c.l.b16 %v2530
      %v2547 = vunpack.c.l.b16 %v2531
      %v2548 = vunpack.c.l.b16 %v2532
      %v2549 = vunpack.c.l.b16 %v2533
      %v2550 = vunpack.c.l.b16 %v2534
      %v2551 = vunpack.c.l.b16 %v2535
      %v2552 = vpack.c.b16 %v2545, %v2544
      %v2553 = vpack.c.b16 %v2547, %v2546
      %v2554 = vpack.c.b16 %v2549, %v2548
      %v2555 = vpack.c.b16 %v2551, %v2550
      %v2561 = vsel %vm52, %v2524, 0
      %v2564 = vsel %vm52, %v2525, 0
      %v2567 = vsel %vm52, %v2526, 0
      %2569 = vmatprep.subr.bf16.mxu0 0
      %2570 = vmatpush1.bf16.msra.mxu0 %v2552
      %2571 = vmatprep.subr.bf16.mxu0 0
      %2572 = vmatpush1.bf16.msra.mxu0 %v2553
      %2573 = vmatprep.subr.bf16.mxu0 0
      %2574 = vmatpush1.bf16.msra.mxu0 %v2554
      %2575 = vmatprep.subr.bf16.mxu0 0
      %2576 = vmatpush1.bf16.msra.mxu0 %v2555
      %2577 = vmatprep.subr.bf16.mxu0 0
      %2578 = vmatpush1.bf16.msra.mxu0 0
      %2579 = vmatprep.subr.bf16.mxu0 0
      %2580 = vmatpush1.bf16.msra.mxu0 0
      %2581 = vmatprep.subr.bf16.mxu0 0
      %2582 = vmatpush1.bf16.msra.mxu0 0
      %2583 = vmatprep.subr.bf16.mxu0 0
      %2584 = vmatpush1.bf16.msra.mxu0 0
      %2585 = vmatprep.subr.bf16.mxu0 0
      %2586 = vmatpush1.bf16.msra.mxu0 0
      %2587 = vmatprep.subr.bf16.mxu0 0
      %2588 = vmatpush1.bf16.msra.mxu0 0
      %2589 = vmatprep.subr.bf16.mxu0 0
      %2590 = vmatpush1.bf16.msra.mxu0 0
      %2591 = vmatprep.subr.bf16.mxu0 0
      %2592 = vmatpush1.bf16.msra.mxu0 0
      %2593 = vmatprep.subr.bf16.mxu0 0
      %2594 = vmatpush1.bf16.msra.mxu0 0
      %2595 = vmatprep.subr.bf16.mxu0 0
      %2596 = vmatpush1.bf16.msra.mxu0 0
      %2597 = vmatprep.subr.bf16.mxu0 0
      %2598 = vmatpush1.bf16.msra.mxu0 0
      %2599 = vmatprep.subr.bf16.mxu0 0
      %2600 = vmatpush1.bf16.msra.mxu0 0
      %2601 = vmatprep.mubr.bf16.mxu0 0
      %2602 = vmatmul.mubr.bf16.gmra.mrb[0].mxu0 %v2561
      %v2603 = vpop.f32.mrb[0].mxu0
      %v2604 = vadd.f32 0.0, %v2603
      %v2605 = vpop.f32.mrb[0].mxu0
      %v2606 = vpop.f32.mrb[0].mxu0
      %v2607 = vadd.f32 0.0, %v2606
      %v2608 = vpop.f32.mrb[0].mxu0
      %2609 = vmatprep.mubr.bf16.mxu0 0
      %2610 = vmatmul.mubr.bf16.gmra.mrb[0].mxu0 %v2564
      %v2611 = vpop.f32.mrb[0].mxu0
      %v2612 = vadd.f32 0.0, %v2611
      %v2613 = vpop.f32.mrb[0].mxu0
      %v2614 = vpop.f32.mrb[0].mxu0
      %v2615 = vadd.f32 0.0, %v2614
      %v2616 = vpop.f32.mrb[0].mxu0
      %2617 = vmatprep.mubr.bf16.mxu0 0
      %2618 = vmatmul.mubr.bf16.gmra.mrb[0].mxu0 %v2567
      %v2619 = vpop.f32.mrb[0].mxu0
      %v2620 = vadd.f32 0.0, %v2619
      %v2621 = vpop.f32.mrb[0].mxu0
      %v2622 = vpop.f32.mrb[0].mxu0
      %v2623 = vpop.f32.mrb[0].mxu0
      %2624 = vdwg.mxu0
      %v2625 = vadd.f32 %v2514, %v2604
      %v2626 = vadd.f32 %v2515, %v2607
      %v2627 = vadd.f32 %v2516, %v2612
      %v2628 = vadd.f32 %v2517, %v2615
      %v2629 = vadd.f32 %v2518, %v2620
      %v2630 = vld [vmem:[#allocation5 + $0x9] sm:$0xff]
      %v2631 = vld [vmem:[#allocation5 + $0x11] sm:$0xff]
      %v2632 = vld [vmem:[#allocation5 + $0x19] sm:$0xff]
      %v2633 = vld [vmem:[#allocation5 + $0x21] sm:$0xff]
      %v2634 = vld [vmem:[#allocation5 + $0x29] sm:$0xff]
      %v2635 = vpack.c.bf16 %v2631, %v2630
      %v2636 = vpack.c.bf16 %v2633, %v2632
      %v2637 = vpack.c.bf16 %v2634, %v2634
      %s2638 = scalar_lea.vmem %s6, 128
      %v2639 = vld [vmem:[%s2638] sm:$0xf]
      %v2640 = vld [vmem:[%s2638 + $0x4] sm:$0xf]
      %v2641 = vld [vmem:[%s2638 + $0x8] sm:$0xf]
      %v2642 = vld [vmem:[%s2638 + $0xc] sm:$0xf]
      %v2643 = vld [vmem:[%s2638 + $0x10] sm:$0xf]
      %v2644 = vld [vmem:[%s2638 + $0x14] sm:$0xf]
      %v2645 = vld [vmem:[%s2638 + $0x18] sm:$0xf]
      %v2646 = vld [vmem:[%s2638 + $0x1c] sm:$0xf]
      %v2655 = vunpack.c.l.b16 %v2639
      %v2656 = vunpack.c.l.b16 %v2640
      %v2657 = vunpack.c.l.b16 %v2641
      %v2658 = vunpack.c.l.b16 %v2642
      %v2659 = vunpack.c.l.b16 %v2643
      %v2660 = vunpack.c.l.b16 %v2644
      %v2661 = vunpack.c.l.b16 %v2645
      %v2662 = vunpack.c.l.b16 %v2646
      %v2663 = vpack.c.b16 %v2656, %v2655
      %v2664 = vpack.c.b16 %v2658, %v2657
      %v2665 = vpack.c.b16 %v2660, %v2659
      %v2666 = vpack.c.b16 %v2662, %v2661
      %v2672 = vsel %vm52, %v2635, 0
      %v2675 = vsel %vm52, %v2636, 0
      %v2678 = vsel %vm52, %v2637, 0
      %2680 = vmatprep.subr.bf16.mxu0 0
      %2681 = vmatpush1.bf16.msra.mxu0 %v2663
      %2682 = vmatprep.subr.bf16.mxu0 0
      %2683 = vmatpush1.bf16.msra.mxu0 %v2664
      %2684 = vmatprep.subr.bf16.mxu0 0
      %2685 = vmatpush1.bf16.msra.mxu0 %v2665
      %2686 = vmatprep.subr.bf16.mxu0 0
      %2687 = vmatpush1.bf16.msra.mxu0 %v2666
      %2688 = vmatprep.subr.bf16.mxu0 0
      %2689 = vmatpush1.bf16.msra.mxu0 0
      %2690 = vmatprep.subr.bf16.mxu0 0
      %2691 = vmatpush1.bf16.msra.mxu0 0
      %2692 = vmatprep.subr.bf16.mxu0 0
      %2693 = vmatpush1.bf16.msra.mxu0 0
      %2694 = vmatprep.subr.bf16.mxu0 0
      %2695 = vmatpush1.bf16.msra.mxu0 0
      %2696 = vmatprep.subr.bf16.mxu0 0
      %2697 = vmatpush1.bf16.msra.mxu0 0
      %2698 = vmatprep.subr.bf16.mxu0 0
      %2699 = vmatpush1.bf16.msra.mxu0 0
      %2700 = vmatprep.subr.bf16.mxu0 0
      %2701 = vmatpush1.bf16.msra.mxu0 0
      %2702 = vmatprep.subr.bf16.mxu0 0
      %2703 = vmatpush1.bf16.msra.mxu0 0
      %2704 = vmatprep.subr.bf16.mxu0 0
      %2705 = vmatpush1.bf16.msra.mxu0 0
      %2706 = vmatprep.subr.bf16.mxu0 0
      %2707 = vmatpush1.bf16.msra.mxu0 0
      %2708 = vmatprep.subr.bf16.mxu0 0
      %2709 = vmatpush1.bf16.msra.mxu0 0
      %2710 = vmatprep.subr.bf16.mxu0 0
      %2711 = vmatpush1.bf16.msra.mxu0 0
      %2712 = vmatprep.mubr.bf16.mxu0 0
      %2713 = vmatmul.mubr.bf16.gmra.mrb[0].mxu0 %v2672
      %v2714 = vpop.f32.mrb[0].mxu0
      %v2715 = vadd.f32 0.0, %v2714
      %v2716 = vpop.f32.mrb[0].mxu0
      %v2717 = vpop.f32.mrb[0].mxu0
      %v2718 = vadd.f32 0.0, %v2717
      %v2719 = vpop.f32.mrb[0].mxu0
      %2720 = vmatprep.mubr.bf16.mxu0 0
      %2721 = vmatmul.mubr.bf16.gmra.mrb[0].mxu0 %v2675
      %v2722 = vpop.f32.mrb[0].mxu0
      %v2723 = vadd.f32 0.0, %v2722
      %v2724 = vpop.f32.mrb[0].mxu0
      %v2725 = vpop.f32.mrb[0].mxu0
      %v2726 = vadd.f32 0.0, %v2725
      %v2727 = vpop.f32.mrb[0].mxu0
      %2728 = vmatprep.mubr.bf16.mxu0 0
      %2729 = vmatmul.mubr.bf16.gmra.mrb[0].mxu0 %v2678
      %v2730 = vpop.f32.mrb[0].mxu0
      %v2731 = vadd.f32 0.0, %v2730
      %v2732 = vpop.f32.mrb[0].mxu0
      %v2733 = vpop.f32.mrb[0].mxu0
      %v2734 = vpop.f32.mrb[0].mxu0
      %2735 = vdwg.mxu0
      %v2736 = vadd.f32 %v2625, %v2715
      %v2737 = vadd.f32 %v2626, %v2718
      %v2738 = vadd.f32 %v2627, %v2723
      %v2739 = vadd.f32 %v2628, %v2726
      %v2740 = vadd.f32 %v2629, %v2731
      %v2741 = vld [vmem:[#allocation5 + $0xa] sm:$0xff]
      %v2742 = vld [vmem:[#allocation5 + $0x12] sm:$0xff]
      %v2743 = vld [vmem:[#allocation5 + $0x1a] sm:$0xff]
      %v2744 = vld [vmem:[#allocation5 + $0x22] sm:$0xff]
      %v2745 = vld [vmem:[#allocation5 + $0x2a] sm:$0xff]
      %v2746 = vpack.c.bf16 %v2742, %v2741
      %v2747 = vpack.c.bf16 %v2744, %v2743
      %v2748 = vpack.c.bf16 %v2745, %v2745
      %s2749 = scalar_lea.vmem %s6, 160
      %v2750 = vld [vmem:[%s2749] sm:$0xf]
      %v2751 = vld [vmem:[%s2749 + $0x4] sm:$0xf]
      %v2752 = vld [vmem:[%s2749 + $0x8] sm:$0xf]
      %v2753 = vld [vmem:[%s2749 + $0xc] sm:$0xf]
      %v2754 = vld [vmem:[%s2749 + $0x10] sm:$0xf]
      %v2755 = vld [vmem:[%s2749 + $0x14] sm:$0xf]
      %v2756 = vld [vmem:[%s2749 + $0x18] sm:$0xf]
      %v2757 = vld [vmem:[%s2749 + $0x1c] sm:$0xf]
      %v2766 = vunpack.c.l.b16 %v2750
      %v2767 = vunpack.c.l.b16 %v2751
      %v2768 = vunpack.c.l.b16 %v2752
      %v2769 = vunpack.c.l.b16 %v2753
      %v2770 = vunpack.c.l.b16 %v2754
      %v2771 = vunpack.c.l.b16 %v2755
      %v2772 = vunpack.c.l.b16 %v2756
      %v2773 = vunpack.c.l.b16 %v2757
      %v2774 = vpack.c.b16 %v2767, %v2766
      %v2775 = vpack.c.b16 %v2769, %v2768
      %v2776 = vpack.c.b16 %v2771, %v2770
      %v2777 = vpack.c.b16 %v2773, %v2772
      %v2783 = vsel %vm52, %v2746, 0
      %v2786 = vsel %vm52, %v2747, 0
      %v2789 = vsel %vm52, %v2748, 0
      %2791 = vmatprep.subr.bf16.mxu0 0
      %2792 = vmatpush1.bf16.msra.mxu0 %v2774
      %2793 = vmatprep.subr.bf16.mxu0 0
      %2794 = vmatpush1.bf16.msra.mxu0 %v2775
      %2795 = vmatprep.subr.bf16.mxu0 0
      %2796 = vmatpush1.bf16.msra.mxu0 %v2776
      %2797 = vmatprep.subr.bf16.mxu0 0
      %2798 = vmatpush1.bf16.msra.mxu0 %v2777
      %2799 = vmatprep.subr.bf16.mxu0 0
      %2800 = vmatpush1.bf16.msra.mxu0 0
      %2801 = vmatprep.subr.bf16.mxu0 0
      %2802 = vmatpush1.bf16.msra.mxu0 0
      %2803 = vmatprep.subr.bf16.mxu0 0
      %2804 = vmatpush1.bf16.msra.mxu0 0
      %2805 = vmatprep.subr.bf16.mxu0 0
      %2806 = vmatpush1.bf16.msra.mxu0 0
      %2807 = vmatprep.subr.bf16.mxu0 0
      %2808 = vmatpush1.bf16.msra.mxu0 0
      %2809 = vmatprep.subr.bf16.mxu0 0
      %2810 = vmatpush1.bf16.msra.mxu0 0
      %2811 = vmatprep.subr.bf16.mxu0 0
      %2812 = vmatpush1.bf16.msra.mxu0 0
      %2813 = vmatprep.subr.bf16.mxu0 0
      %2814 = vmatpush1.bf16.msra.mxu0 0
      %2815 = vmatprep.subr.bf16.mxu0 0
      %2816 = vmatpush1.bf16.msra.mxu0 0
      %2817 = vmatprep.subr.bf16.mxu0 0
      %2818 = vmatpush1.bf16.msra.mxu0 0
      %2819 = vmatprep.subr.bf16.mxu0 0
      %2820 = vmatpush1.bf16.msra.mxu0 0
      %2821 = vmatprep.subr.bf16.mxu0 0
      %2822 = vmatpush1.bf16.msra.mxu0 0
      %2823 = vmatprep.mubr.bf16.mxu0 0
      %2824 = vmatmul.mubr.bf16.gmra.mrb[0].mxu0 %v2783
      %v2825 = vpop.f32.mrb[0].mxu0
      %v2826 = vadd.f32 0.0, %v2825
      %v2827 = vpop.f32.mrb[0].mxu0
      %v2828 = vpop.f32.mrb[0].mxu0
      %v2829 = vadd.f32 0.0, %v2828
      %v2830 = vpop.f32.mrb[0].mxu0
      %2831 = vmatprep.mubr.bf16.mxu0 0
      %2832 = vmatmul.mubr.bf16.gmra.mrb[0].mxu0 %v2786
      %v2833 = vpop.f32.mrb[0].mxu0
      %v2834 = vadd.f32 0.0, %v2833
      %v2835 = vpop.f32.mrb[0].mxu0
      %v2836 = vpop.f32.mrb[0].mxu0
      %v2837 = vadd.f32 0.0, %v2836
      %v2838 = vpop.f32.mrb[0].mxu0
      %2839 = vmatprep.mubr.bf16.mxu0 0
      %2840 = vmatmul.mubr.bf16.gmra.mrb[0].mxu0 %v2789
      %v2841 = vpop.f32.mrb[0].mxu0
      %v2842 = vadd.f32 0.0, %v2841
      %v2843 = vpop.f32.mrb[0].mxu0
      %v2844 = vpop.f32.mrb[0].mxu0
      %v2845 = vpop.f32.mrb[0].mxu0
      %2846 = vdwg.mxu0
      %v2847 = vadd.f32 %v2736, %v2826
      %v2848 = vadd.f32 %v2737, %v2829
      %v2849 = vadd.f32 %v2738, %v2834
      %v2850 = vadd.f32 %v2739, %v2837
      %v2851 = vadd.f32 %v2740, %v2842
      %v2852 = vld [vmem:[#allocation5 + $0x10] sm:$0xff]
      %v2853 = vld [vmem:[#allocation5 + $0x18] sm:$0xff]
      %v2854 = vld [vmem:[#allocation5 + $0x20] sm:$0xff]
      %v2855 = vld [vmem:[#allocation5 + $0x28] sm:$0xff]
      %v2856 = vld [vmem:[#allocation5 + $0x30] sm:$0xff]
      %v2857 = vpack.c.bf16 %v2853, %v2852
      %v2858 = vpack.c.bf16 %v2855, %v2854
      %v2859 = vpack.c.bf16 %v2856, %v2856
      %s2860 = scalar_lea.vmem %s6, 192
      %v2861 = vld [vmem:[%s2860] sm:$0xf]
      %v2862 = vld [vmem:[%s2860 + $0x4] sm:$0xf]
      %v2863 = vld [vmem:[%s2860 + $0x8] sm:$0xf]
      %v2864 = vld [vmem:[%s2860 + $0xc] sm:$0xf]
      %v2865 = vld [vmem:[%s2860 + $0x10] sm:$0xf]
      %v2866 = vld [vmem:[%s2860 + $0x14] sm:$0xf]
      %v2867 = vld [vmem:[%s2860 + $0x18] sm:$0xf]
      %v2868 = vld [vmem:[%s2860 + $0x1c] sm:$0xf]
      %v2877 = vunpack.c.l.b16 %v2861
      %v2878 = vunpack.c.l.b16 %v2862
      %v2879 = vunpack.c.l.b16 %v2863
      %v2880 = vunpack.c.l.b16 %v2864
      %v2881 = vunpack.c.l.b16 %v2865
      %v2882 = vunpack.c.l.b16 %v2866
      %v2883 = vunpack.c.l.b16 %v2867
      %v2884 = vunpack.c.l.b16 %v2868
      %v2885 = vpack.c.b16 %v2878, %v2877
      %v2886 = vpack.c.b16 %v2880, %v2879
      %v2887 = vpack.c.b16 %v2882, %v2881
      %v2888 = vpack.c.b16 %v2884, %v2883
      %v2894 = vsel %vm52, %v2857, 0
      %v2897 = vsel %vm52, %v2858, 0
      %v2900 = vsel %vm52, %v2859, 0
      %2902 = vmatprep.subr.bf16.mxu0 0
      %2903 = vmatpush1.bf16.msra.mxu0 %v2885
      %2904 = vmatprep.subr.bf16.mxu0 0
      %2905 = vmatpush1.bf16.msra.mxu0 %v2886
      %2906 = vmatprep.subr.bf16.mxu0 0
      %2907 = vmatpush1.bf16.msra.mxu0 %v2887
      %2908 = vmatprep.subr.bf16.mxu0 0
      %2909 = vmatpush1.bf16.msra.mxu0 %v2888
      %2910 = vmatprep.subr.bf16.mxu0 0
      %2911 = vmatpush1.bf16.msra.mxu0 0
      %2912 = vmatprep.subr.bf16.mxu0 0
      %2913 = vmatpush1.bf16.msra.mxu0 0
      %2914 = vmatprep.subr.bf16.mxu0 0
      %2915 = vmatpush1.bf16.msra.mxu0 0
      %2916 = vmatprep.subr.bf16.mxu0 0
      %2917 = vmatpush1.bf16.msra.mxu0 0
      %2918 = vmatprep.subr.bf16.mxu0 0
      %2919 = vmatpush1.bf16.msra.mxu0 0
      %2920 = vmatprep.subr.bf16.mxu0 0
      %2921 = vmatpush1.bf16.msra.mxu0 0
      %2922 = vmatprep.subr.bf16.mxu0 0
      %2923 = vmatpush1.bf16.msra.mxu0 0
      %2924 = vmatprep.subr.bf16.mxu0 0
      %2925 = vmatpush1.bf16.msra.mxu0 0
      %2926 = vmatprep.subr.bf16.mxu0 0
      %2927 = vmatpush1.bf16.msra.mxu0 0
      %2928 = vmatprep.subr.bf16.mxu0 0
      %2929 = vmatpush1.bf16.msra.mxu0 0
      %2930 = vmatprep.subr.bf16.mxu0 0
      %2931 = vmatpush1.bf16.msra.mxu0 0
      %2932 = vmatprep.subr.bf16.mxu0 0
      %2933 = vmatpush1.bf16.msra.mxu0 0
      %2934 = vmatprep.mubr.bf16.mxu0 0
      %2935 = vmatmul.mubr.bf16.gmra.mrb[0].mxu0 %v2894
      %v2936 = vpop.f32.mrb[0].mxu0
      %v2937 = vadd.f32 0.0, %v2936
      %v2938 = vpop.f32.mrb[0].mxu0
      %v2939 = vpop.f32.mrb[0].mxu0
      %v2940 = vadd.f32 0.0, %v2939
      %v2941 = vpop.f32.mrb[0].mxu0
      %2942 = vmatprep.mubr.bf16.mxu0 0
      %2943 = vmatmul.mubr.bf16.gmra.mrb[0].mxu0 %v2897
      %v2944 = vpop.f32.mrb[0].mxu0
      %v2945 = vadd.f32 0.0, %v2944
      %v2946 = vpop.f32.mrb[0].mxu0
      %v2947 = vpop.f32.mrb[0].mxu0
      %v2948 = vadd.f32 0.0, %v2947
      %v2949 = vpop.f32.mrb[0].mxu0
      %2950 = vmatprep.mubr.bf16.mxu0 0
      %2951 = vmatmul.mubr.bf16.gmra.mrb[0].mxu0 %v2900
      %v2952 = vpop.f32.mrb[0].mxu0
      %v2953 = vadd.f32 0.0, %v2952
      %v2954 = vpop.f32.mrb[0].mxu0
      %v2955 = vpop.f32.mrb[0].mxu0
      %v2956 = vpop.f32.mrb[0].mxu0
      %2957 = vdwg.mxu0
      %v2958 = vadd.f32 %v2847, %v2937
      %v2959 = vadd.f32 %v2848, %v2940
      %v2960 = vadd.f32 %v2849, %v2945
      %v2961 = vadd.f32 %v2850, %v2948
      %v2962 = vadd.f32 %v2851, %v2953
      %v2963 = vld [vmem:[#allocation5 + $0x11] sm:$0xff]
      %v2964 = vld [vmem:[#allocation5 + $0x19] sm:$0xff]
      %v2965 = vld [vmem:[#allocation5 + $0x21] sm:$0xff]
      %v2966 = vld [vmem:[#allocation5 + $0x29] sm:$0xff]
      %v2967 = vld [vmem:[#allocation5 + $0x31] sm:$0xff]
      %v2968 = vpack.c.bf16 %v2964, %v2963
      %v2969 = vpack.c.bf16 %v2966, %v2965
      %v2970 = vpack.c.bf16 %v2967, %v2967
      %s2971 = scalar_lea.vmem %s6, 224
      %v2972 = vld [vmem:[%s2971] sm:$0xf]
      %v2973 = vld [vmem:[%s2971 + $0x4] sm:$0xf]
      %v2974 = vld [vmem:[%s2971 + $0x8] sm:$0xf]
      %v2975 = vld [vmem:[%s2971 + $0xc] sm:$0xf]
      %v2976 = vld [vmem:[%s2971 + $0x10] sm:$0xf]
      %v2977 = vld [vmem:[%s2971 + $0x14] sm:$0xf]
      %v2978 = vld [vmem:[%s2971 + $0x18] sm:$0xf]
      %v2979 = vld [vmem:[%s2971 + $0x1c] sm:$0xf]
      %v2988 = vunpack.c.l.b16 %v2972
      %v2989 = vunpack.c.l.b16 %v2973
      %v2990 = vunpack.c.l.b16 %v2974
      %v2991 = vunpack.c.l.b16 %v2975
      %v2992 = vunpack.c.l.b16 %v2976
      %v2993 = vunpack.c.l.b16 %v2977
      %v2994 = vunpack.c.l.b16 %v2978
      %v2995 = vunpack.c.l.b16 %v2979
      %v2996 = vpack.c.b16 %v2989, %v2988
      %v2997 = vpack.c.b16 %v2991, %v2990
      %v2998 = vpack.c.b16 %v2993, %v2992
      %v2999 = vpack.c.b16 %v2995, %v2994
      %v3005 = vsel %vm52, %v2968, 0
      %v3008 = vsel %vm52, %v2969, 0
      %v3011 = vsel %vm52, %v2970, 0
      %3013 = vmatprep.subr.bf16.mxu0 0
      %3014 = vmatpush1.bf16.msra.mxu0 %v2996
      %3015 = vmatprep.subr.bf16.mxu0 0
      %3016 = vmatpush1.bf16.msra.mxu0 %v2997
      %3017 = vmatprep.subr.bf16.mxu0 0
      %3018 = vmatpush1.bf16.msra.mxu0 %v2998
      %3019 = vmatprep.subr.bf16.mxu0 0
      %3020 = vmatpush1.bf16.msra.mxu0 %v2999
      %3021 = vmatprep.subr.bf16.mxu0 0
      %3022 = vmatpush1.bf16.msra.mxu0 0
      %3023 = vmatprep.subr.bf16.mxu0 0
      %3024 = vmatpush1.bf16.msra.mxu0 0
      %3025 = vmatprep.subr.bf16.mxu0 0
      %3026 = vmatpush1.bf16.msra.mxu0 0
      %3027 = vmatprep.subr.bf16.mxu0 0
      %3028 = vmatpush1.bf16.msra.mxu0 0
      %3029 = vmatprep.subr.bf16.mxu0 0
      %3030 = vmatpush1.bf16.msra.mxu0 0
      %3031 = vmatprep.subr.bf16.mxu0 0
      %3032 = vmatpush1.bf16.msra.mxu0 0
      %3033 = vmatprep.subr.bf16.mxu0 0
      %3034 = vmatpush1.bf16.msra.mxu0 0
      %3035 = vmatprep.subr.bf16.mxu0 0
      %3036 = vmatpush1.bf16.msra.mxu0 0
      %3037 = vmatprep.subr.bf16.mxu0 0
      %3038 = vmatpush1.bf16.msra.mxu0 0
      %3039 = vmatprep.subr.bf16.mxu0 0
      %3040 = vmatpush1.bf16.msra.mxu0 0
      %3041 = vmatprep.subr.bf16.mxu0 0
      %3042 = vmatpush1.bf16.msra.mxu0 0
      %3043 = vmatprep.subr.bf16.mxu0 0
      %3044 = vmatpush1.bf16.msra.mxu0 0
      %3045 = vmatprep.mubr.bf16.mxu0 0
      %3046 = vmatmul.mubr.bf16.gmra.mrb[0].mxu0 %v3005
      %v3047 = vpop.f32.mrb[0].mxu0
      %v3048 = vadd.f32 0.0, %v3047
      %v3049 = vpop.f32.mrb[0].mxu0
      %v3050 = vpop.f32.mrb[0].mxu0
      %v3051 = vadd.f32 0.0, %v3050
      %v3052 = vpop.f32.mrb[0].mxu0
      %3053 = vmatprep.mubr.bf16.mxu0 0
      %3054 = vmatmul.mubr.bf16.gmra.mrb[0].mxu0 %v3008
      %v3055 = vpop.f32.mrb[0].mxu0
      %v3056 = vadd.f32 0.0, %v3055
      %v3057 = vpop.f32.mrb[0].mxu0
      %v3058 = vpop.f32.mrb[0].mxu0
      %v3059 = vadd.f32 0.0, %v3058
      %v3060 = vpop.f32.mrb[0].mxu0
      %3061 = vmatprep.mubr.bf16.mxu0 0
      %3062 = vmatmul.mubr.bf16.gmra.mrb[0].mxu0 %v3011
      %v3063 = vpop.f32.mrb[0].mxu0
      %v3064 = vadd.f32 0.0, %v3063
      %v3065 = vpop.f32.mrb[0].mxu0
      %v3066 = vpop.f32.mrb[0].mxu0
      %v3067 = vpop.f32.mrb[0].mxu0
      %3068 = vdwg.mxu0
      %v3069 = vadd.f32 %v2958, %v3048
      %v3070 = vadd.f32 %v2959, %v3051
      %v3071 = vadd.f32 %v2960, %v3056
      %v3072 = vadd.f32 %v2961, %v3059
      %v3073 = vadd.f32 %v2962, %v3064
      %v3074 = vld [vmem:[#allocation5 + $0x12] sm:$0xff]
      %v3075 = vld [vmem:[#allocation5 + $0x1a] sm:$0xff]
      %v3076 = vld [vmem:[#allocation5 + $0x22] sm:$0xff]
      %v3077 = vld [vmem:[#allocation5 + $0x2a] sm:$0xff]
      %v3078 = vld [vmem:[#allocation5 + $0x32] sm:$0xff]
      %v3079 = vpack.c.bf16 %v3075, %v3074
      %v3080 = vpack.c.bf16 %v3077, %v3076
      %v3081 = vpack.c.bf16 %v3078, %v3078
      %s3082 = scalar_lea.vmem %s6, 256
      %v3083 = vld [vmem:[%s3082] sm:$0xf]
      %v3084 = vld [vmem:[%s3082 + $0x4] sm:$0xf]
      %v3085 = vld [vmem:[%s3082 + $0x8] sm:$0xf]
      %v3086 = vld [vmem:[%s3082 + $0xc] sm:$0xf]
      %v3087 = vld [vmem:[%s3082 + $0x10] sm:$0xf]
      %v3088 = vld [vmem:[%s3082 + $0x14] sm:$0xf]
      %v3089 = vld [vmem:[%s3082 + $0x18] sm:$0xf]
      %v3090 = vld [vmem:[%s3082 + $0x1c] sm:$0xf]
      %v3099 = vunpack.c.l.b16 %v3083
      %v3100 = vunpack.c.l.b16 %v3084
      %v3101 = vunpack.c.l.b16 %v3085
      %v3102 = vunpack.c.l.b16 %v3086
      %v3103 = vunpack.c.l.b16 %v3087
      %v3104 = vunpack.c.l.b16 %v3088
      %v3105 = vunpack.c.l.b16 %v3089
      %v3106 = vunpack.c.l.b16 %v3090
      %v3107 = vpack.c.b16 %v3100, %v3099
      %v3108 = vpack.c.b16 %v3102, %v3101
      %v3109 = vpack.c.b16 %v3104, %v3103
      %v3110 = vpack.c.b16 %v3106, %v3105
      %v3116 = vsel %vm52, %v3079, 0
      %v3119 = vsel %vm52, %v3080, 0
      %v3122 = vsel %vm52, %v3081, 0
      %3124 = vmatprep.subr.bf16.mxu0 0
      %3125 = vmatpush1.bf16.msra.mxu0 %v3107
      %3126 = vmatprep.subr.bf16.mxu0 0
      %3127 = vmatpush1.bf16.msra.mxu0 %v3108
      %3128 = vmatprep.subr.bf16.mxu0 0
      %3129 = vmatpush1.bf16.msra.mxu0 %v3109
      %3130 = vmatprep.subr.bf16.mxu0 0
      %3131 = vmatpush1.bf16.msra.mxu0 %v3110
      %3132 = vmatprep.subr.bf16.mxu0 0
      %3133 = vmatpush1.bf16.msra.mxu0 0
      %3134 = vmatprep.subr.bf16.mxu0 0
      %3135 = vmatpush1.bf16.msra.mxu0 0
      %3136 = vmatprep.subr.bf16.mxu0 0
      %3137 = vmatpush1.bf16.msra.mxu0 0
      %3138 = vmatprep.subr.bf16.mxu0 0
      %3139 = vmatpush1.bf16.msra.mxu0 0
      %3140 = vmatprep.subr.bf16.mxu0 0
      %3141 = vmatpush1.bf16.msra.mxu0 0
      %3142 = vmatprep.subr.bf16.mxu0 0
      %3143 = vmatpush1.bf16.msra.mxu0 0
      %3144 = vmatprep.subr.bf16.mxu0 0
      %3145 = vmatpush1.bf16.msra.mxu0 0
      %3146 = vmatprep.subr.bf16.mxu0 0
      %3147 = vmatpush1.bf16.msra.mxu0 0
      %3148 = vmatprep.subr.bf16.mxu0 0
      %3149 = vmatpush1.bf16.msra.mxu0 0
      %3150 = vmatprep.subr.bf16.mxu0 0
      %3151 = vmatpush1.bf16.msra.mxu0 0
      %3152 = vmatprep.subr.bf16.mxu0 0
      %3153 = vmatpush1.bf16.msra.mxu0 0
      %3154 = vmatprep.subr.bf16.mxu0 0
      %3155 = vmatpush1.bf16.msra.mxu0 0
      %3156 = vmatprep.mubr.bf16.mxu0 0
      %3157 = vmatmul.mubr.bf16.gmra.mrb[0].mxu0 %v3116
      %v3158 = vpop.f32.mrb[0].mxu0
      %v3159 = vadd.f32 0.0, %v3158
      %v3160 = vpop.f32.mrb[0].mxu0
      %v3161 = vpop.f32.mrb[0].mxu0
      %v3162 = vadd.f32 0.0, %v3161
      %v3163 = vpop.f32.mrb[0].mxu0
      %3164 = vmatprep.mubr.bf16.mxu0 0
      %3165 = vmatmul.mubr.bf16.gmra.mrb[0].mxu0 %v3119
      %v3166 = vpop.f32.mrb[0].mxu0
      %v3167 = vadd.f32 0.0, %v3166
      %v3168 = vpop.f32.mrb[0].mxu0
      %v3169 = vpop.f32.mrb[0].mxu0
      %v3170 = vadd.f32 0.0, %v3169
      %v3171 = vpop.f32.mrb[0].mxu0
      %3172 = vmatprep.mubr.bf16.mxu0 0
      %3173 = vmatmul.mubr.bf16.gmra.mrb[0].mxu0 %v3122
      %v3174 = vpop.f32.mrb[0].mxu0
      %v3175 = vadd.f32 0.0, %v3174
      %v3176 = vpop.f32.mrb[0].mxu0
      %v3177 = vpop.f32.mrb[0].mxu0
      %v3178 = vpop.f32.mrb[0].mxu0
      %3179 = vdwg.mxu0
      %v3180 = vadd.f32 %v3069, %v3159
      %v3181 = vadd.f32 %v3070, %v3162
      %v3182 = vadd.f32 %v3071, %v3167
      %v3183 = vadd.f32 %v3072, %v3170
      %v3184 = vadd.f32 %v3073, %v3175
      %v3185 = vld [vmem:[%s7] sm:$0x1]
      %v3187 = vlaneseq
      %v3188 = vshrl.u32 %v3187, 7
      %v3189 = vsub.s32 0, %v3188
      %v3190 = vrot.slane %v3185, %v3189
      %v3192 = vadd.f32 %v3180, %v3190
      %v3193 = vadd.f32 %v3181, %v3190
      %v3194 = vadd.f32 %v3182, %v3190
      %v3195 = vadd.f32 %v3183, %v3190
      %v3196 = vadd.f32 %v3184, %v3190
      %v3197 = vmax.f32 %v3192, 0.0
      %v3198 = vmax.f32 %v3193, 0.0
      %v3199 = vmax.f32 %v3194, 0.0
      %v3200 = vmax.f32 %v3195, 0.0
      %v3201 = vmax.f32 %v3196, 0.0
      %v3202 = vsel %vm2182, %v3197, 0.0
      %v3203 = vsel %vm2183, %v3198, 0.0
      %v3204 = vsel %vm2184, %v3199, 0.0
      %v3205 = vsel %vm2185, %v3200, 0.0
      %v3206 = vsel %vm2186, %v3201, 0.0
      %v3207 = vsel %vm52, %v3202, 0.0
      %v3208 = vsel %vm52, %v3203, 0.0
      %v3209 = vadd.f32 %v3207, %v3208
      %v3210 = vsel %vm52, %v3204, 0.0
      %v3211 = vadd.f32 %v3209, %v3210
      %v3212 = vsel %vm52, %v3205, 0.0
      %v3213 = vadd.f32 %v3211, %v3212
      %v3214 = vsel %vm52, %v3206, 0.0
      %v3215 = vadd.f32 %v3213, %v3214
      %v3216 = vrot.slane %v3215, 4
      %v3217 = vadd.f32 %v3215, %v3216
      %v3218 = vrot.slane %v3217, 2
      %v3219 = vadd.f32 %v3217, %v3218
      %v3220 = vrot.slane %v3219, 1
      %v3221 = vadd.f32 %v3219, %v3220
      %v3222 = vmul.f32 %v3221, 0.04
      %s3223 = scalar_lea.vmem [#allocation6], %s920
      %vm3224 = vcmask 516096
      %3225 = vst.msk [vmem:[%s3223] sm:$0x1] %vm3224, %v3222
    $region66: #{resnet_block_dyn.1} parent=1 // loop_footer
      %s924 = sadd.s32 1, %s920
    $region67: #{resnet_block_dyn.1} parent=1 // loop_footer_branch
      %919 = sbr.rel target = $region63
    $region68: #{resnet_block_dyn.1} parent=1 // loop_exit
      _
    %v3226 = vld [vmem:[#allocation6] sm:$0x3]
    %v3227 = vld [vmem:[%s8] sm:$0xff]
    %v3228 = vld [vmem:[%s8 + $0x8] sm:$0xff]
    %v3229 = vld [vmem:[%s8 + $0x10] sm:$0xff]
    %v3230 = vld [vmem:[%s8 + $0x18] sm:$0xff]
    %v3231 = vld [vmem:[%s8 + $0x20] sm:$0xff]
    %v3232 = vld [vmem:[%s8 + $0x28] sm:$0xff]
    %v3233 = vld [vmem:[%s8 + $0x30] sm:$0xff]
    %v3234 = vld [vmem:[%s8 + $0x38] sm:$0xff]
    %v3235 = vld [vmem:[%s1] sm:$0x3]
    %v3236 = vld [vmem:[%s9] sm:$0xff]
    %v3237 = vld [vmem:[%s9 + $0x8] sm:$0x3]
    %vm3238 = vcmask 80896
    %v3240 = vsel %vm3238, %v3235, 0
    %vm3242 = vcmask 1041408
    %v3244 = vsel %vm3242, %v3237, 0
    %3246 = vmatprep.subr.mxu0 0.0
    %3247 = vmatpush1.msra.mxu0 %v3236
    %3248 = vmatprep.subr.mxu0 0.0
    %3249 = vmatpush1.msra.mxu0 %v3244
    %3250 = vmatprep.subr.mxu0 0.0
    %3251 = vmatpush1.msra.mxu0 0.0
    %3252 = vmatprep.subr.mxu0 0.0
    %3253 = vmatpush1.msra.mxu0 0.0
    %3254 = vmatprep.subr.mxu0 0.0
    %3255 = vmatpush1.msra.mxu0 0.0
    %3256 = vmatprep.subr.mxu0 0.0
    %3257 = vmatpush1.msra.mxu0 0.0
    %3258 = vmatprep.subr.mxu0 0.0
    %3259 = vmatpush1.msra.mxu0 0.0
    %3260 = vmatprep.subr.mxu0 0.0
    %3261 = vmatpush1.msra.mxu0 0.0
    %3262 = vmatprep.subr.mxu0 0.0
    %3263 = vmatpush1.msra.mxu0 0.0
    %3264 = vmatprep.subr.mxu0 0.0
    %3265 = vmatpush1.msra.mxu0 0.0
    %3266 = vmatprep.subr.mxu0 0.0
    %3267 = vmatpush1.msra.mxu0 0.0
    %3268 = vmatprep.subr.mxu0 0.0
    %3269 = vmatpush1.msra.mxu0 0.0
    %3270 = vmatprep.subr.mxu0 0.0
    %3271 = vmatpush1.msra.mxu0 0.0
    %3272 = vmatprep.subr.mxu0 0.0
    %3273 = vmatpush1.msra.mxu0 0.0
    %3274 = vmatprep.subr.mxu0 0.0
    %3275 = vmatpush1.msra.mxu0 0.0
    %3276 = vmatprep.subr.mxu0 0.0
    %3277 = vmatpush1.msra.mxu0 0.0
    %3278 = vmatprep.subr.mxu0 0.0
    %3279 = vmatpush1.msra.mxu0 0.0
    %3280 = vmatprep.subr.mxu0 0.0
    %3281 = vmatpush1.msra.mxu0 0.0
    %3282 = vmatprep.subr.mxu0 0.0
    %3283 = vmatpush1.msra.mxu0 0.0
    %3284 = vmatprep.subr.mxu0 0.0
    %3285 = vmatpush1.msra.mxu0 0.0
    %3286 = vmatprep.subr.mxu0 0.0
    %3287 = vmatpush1.msra.mxu0 0.0
    %3288 = vmatprep.subr.mxu0 0.0
    %3289 = vmatpush1.msra.mxu0 0.0
    %3290 = vmatprep.subr.mxu0 0.0
    %3291 = vmatpush1.msra.mxu0 0.0
    %3292 = vmatprep.subr.mxu0 0.0
    %3293 = vmatpush1.msra.mxu0 0.0
    %3294 = vmatprep.subr.mxu0 0.0
    %3295 = vmatpush1.msra.mxu0 0.0
    %3296 = vmatprep.subr.mxu0 0.0
    %3297 = vmatpush1.msra.mxu0 0.0
    %3298 = vmatprep.subr.mxu0 0.0
    %3299 = vmatpush1.msra.mxu0 0.0
    %3300 = vmatprep.subr.mxu0 0.0
    %3301 = vmatpush1.msra.mxu0 0.0
    %3302 = vmatprep.subr.mxu0 0.0
    %3303 = vmatpush1.msra.mxu0 0.0
    %3304 = vmatprep.subr.mxu0 0.0
    %3305 = vmatpush1.msra.mxu0 0.0
    %3306 = vmatprep.subr.mxu0 0.0
    %3307 = vmatpush1.msra.mxu0 0.0
    %3308 = vmatprep.subr.mxu0 0.0
    %3309 = vmatpush1.msra.mxu0 0.0
    %3310 = vmatprep.mubr.f32.mxu0 0.0
    %3311 = vmatmul.mubr.f32.gmra.mrb[0].mxu0 %v3240
    %v3312 = vpop.f32.mrb[0].mxu0
    %v3313 = vadd.f32 0.0, %v3312
    %v3314 = vpop.f32.mrb[0].mxu0
    %3315 = vdwg.mxu0
    %v3317 = vsel %vm52, %v3226, 0
    %3319 = vmatprep.subr.mxu0 0.0
    %3320 = vmatpush1.msra.mxu0 %v3227
    %3321 = vmatprep.subr.mxu0 0.0
    %3322 = vmatpush1.msra.mxu0 %v3228
    %3323 = vmatprep.subr.mxu0 0.0
    %3324 = vmatpush1.msra.mxu0 %v3229
    %3325 = vmatprep.subr.mxu0 0.0
    %3326 = vmatpush1.msra.mxu0 %v3230
    %3327 = vmatprep.subr.mxu0 0.0
    %3328 = vmatpush1.msra.mxu0 %v3231
    %3329 = vmatprep.subr.mxu0 0.0
    %3330 = vmatpush1.msra.mxu0 %v3232
    %3331 = vmatprep.subr.mxu0 0.0
    %3332 = vmatpush1.msra.mxu0 %v3233
    %3333 = vmatprep.subr.mxu0 0.0
    %3334 = vmatpush1.msra.mxu0 %v3234
    %3335 = vmatprep.subr.mxu0 0.0
    %3336 = vmatpush1.msra.mxu0 0.0
    %3337 = vmatprep.subr.mxu0 0.0
    %3338 = vmatpush1.msra.mxu0 0.0
    %3339 = vmatprep.subr.mxu0 0.0
    %3340 = vmatpush1.msra.mxu0 0.0
    %3341 = vmatprep.subr.mxu0 0.0
    %3342 = vmatpush1.msra.mxu0 0.0
    %3343 = vmatprep.subr.mxu0 0.0
    %3344 = vmatpush1.msra.mxu0 0.0
    %3345 = vmatprep.subr.mxu0 0.0
    %3346 = vmatpush1.msra.mxu0 0.0
    %3347 = vmatprep.subr.mxu0 0.0
    %3348 = vmatpush1.msra.mxu0 0.0
    %3349 = vmatprep.subr.mxu0 0.0
    %3350 = vmatpush1.msra.mxu0 0.0
    %3351 = vmatprep.subr.mxu0 0.0
    %3352 = vmatpush1.msra.mxu0 0.0
    %3353 = vmatprep.subr.mxu0 0.0
    %3354 = vmatpush1.msra.mxu0 0.0
    %3355 = vmatprep.subr.mxu0 0.0
    %3356 = vmatpush1.msra.mxu0 0.0
    %3357 = vmatprep.subr.mxu0 0.0
    %3358 = vmatpush1.msra.mxu0 0.0
    %3359 = vmatprep.subr.mxu0 0.0
    %3360 = vmatpush1.msra.mxu0 0.0
    %3361 = vmatprep.subr.mxu0 0.0
    %3362 = vmatpush1.msra.mxu0 0.0
    %3363 = vmatprep.subr.mxu0 0.0
    %3364 = vmatpush1.msra.mxu0 0.0
    %3365 = vmatprep.subr.mxu0 0.0
    %3366 = vmatpush1.msra.mxu0 0.0
    %3367 = vmatprep.subr.mxu0 0.0
    %3368 = vmatpush1.msra.mxu0 0.0
    %3369 = vmatprep.subr.mxu0 0.0
    %3370 = vmatpush1.msra.mxu0 0.0
    %3371 = vmatprep.subr.mxu0 0.0
    %3372 = vmatpush1.msra.mxu0 0.0
    %3373 = vmatprep.subr.mxu0 0.0
    %3374 = vmatpush1.msra.mxu0 0.0
    %3375 = vmatprep.subr.mxu0 0.0
    %3376 = vmatpush1.msra.mxu0 0.0
    %3377 = vmatprep.subr.mxu0 0.0
    %3378 = vmatpush1.msra.mxu0 0.0
    %3379 = vmatprep.subr.mxu0 0.0
    %3380 = vmatpush1.msra.mxu0 0.0
    %3381 = vmatprep.subr.mxu0 0.0
    %3382 = vmatpush1.msra.mxu0 0.0
    %3383 = vmatprep.mubr.f32.mxu0 0.0
    %3384 = vmatmul.mubr.f32.gmra.mrb[0].mxu0 %v3317
    %v3385 = vpop.f32.mrb[0].mxu0
    %v3386 = vadd.f32 %v3313, %v3385
    %v3387 = vpop.f32.mrb[0].mxu0
    %3388 = vdwg.mxu0
    %v3389 = vld [vmem:[%s10] sm:$0x1]
    %v3391 = vlaneseq
    %v3392 = vshrl.u32 %v3391, 7
    %v3393 = vsub.s32 0, %v3392
    %v3394 = vrot.slane %v3389, %v3393
    %v3396 = vadd.f32 %v3386, %v3394
    %v3397 = vmul.f32 %v3396, 0.5
    %v3398 = vrcp.pop 1.4142135
    %v3399 = vmul.f32 %v3396, %v3398
    %v3400 = verf.f32.pop %v3399
    %v3401 = vadd.f32 %v3400, 1.0
    %v3402 = vmul.f32 %v3397, %v3401
    %v3403 = vld [vmem:[%s11] sm:$0xff]
    %v3404 = vld [vmem:[%s11 + $0x8] sm:$0xff]
    %v3405 = vld [vmem:[%s11 + $0x10] sm:$0xff]
    %v3406 = vld [vmem:[%s11 + $0x18] sm:$0xff]
    %v3407 = vld [vmem:[%s11 + $0x20] sm:$0xff]
    %v3408 = vld [vmem:[%s11 + $0x28] sm:$0xff]
    %v3409 = vld [vmem:[%s11 + $0x30] sm:$0xff]
    %v3410 = vld [vmem:[%s11 + $0x38] sm:$0xff]
    %v3411 = vld [vmem:[%s11 + $0x40] sm:$0xff]
    %v3412 = vld [vmem:[%s11 + $0x48] sm:$0xff]
    %v3413 = vld [vmem:[%s11 + $0x50] sm:$0xff]
    %v3414 = vld [vmem:[%s11 + $0x58] sm:$0xff]
    %v3415 = vld [vmem:[%s11 + $0x60] sm:$0xff]
    %v3416 = vld [vmem:[%s11 + $0x68] sm:$0xff]
    %v3417 = vld [vmem:[%s11 + $0x70] sm:$0xff]
    %v3418 = vld [vmem:[%s11 + $0x78] sm:$0xff]
    %v3419 = vld [vmem:[%s12] sm:$0x1]
    %v3421 = vlaneseq
    %v3422 = vshrl.u32 %v3421, 7
    %v3423 = vsub.s32 0, %v3422
    %v3424 = vrot.slane %v3419, %v3423
    %3426 = vmatprep.subr.mxu0 0.0
    %3427 = vmatpush1.msra.mxu0 %v3403
    %3428 = vmatprep.subr.mxu0 0.0
    %3429 = vmatpush1.msra.mxu0 %v3404
    %3430 = vmatprep.subr.mxu0 0.0
    %3431 = vmatpush1.msra.mxu0 %v3405
    %3432 = vmatprep.subr.mxu0 0.0
    %3433 = vmatpush1.msra.mxu0 %v3406
    %3434 = vmatprep.subr.mxu0 0.0
    %3435 = vmatpush1.msra.mxu0 %v3407
    %3436 = vmatprep.subr.mxu0 0.0
    %3437 = vmatpush1.msra.mxu0 %v3408
    %3438 = vmatprep.subr.mxu0 0.0
    %3439 = vmatpush1.msra.mxu0 %v3409
    %3440 = vmatprep.subr.mxu0 0.0
    %3441 = vmatpush1.msra.mxu0 %v3410
    %3442 = vmatprep.subr.mxu0 0.0
    %3443 = vmatpush1.msra.mxu0 %v3411
    %3444 = vmatprep.subr.mxu0 0.0
    %3445 = vmatpush1.msra.mxu0 %v3412
    %3446 = vmatprep.subr.mxu0 0.0
    %3447 = vmatpush1.msra.mxu0 %v3413
    %3448 = vmatprep.subr.mxu0 0.0
    %3449 = vmatpush1.msra.mxu0 %v3414
    %3450 = vmatprep.subr.mxu0 0.0
    %3451 = vmatpush1.msra.mxu0 %v3415
    %3452 = vmatprep.subr.mxu0 0.0
    %3453 = vmatpush1.msra.mxu0 %v3416
    %3454 = vmatprep.subr.mxu0 0.0
    %3455 = vmatpush1.msra.mxu0 %v3417
    %3456 = vmatprep.subr.mxu0 0.0
    %3457 = vmatpush1.msra.mxu0 %v3418
    %3458 = vmatprep.subr.mxu0 0.0
    %3459 = vmatpush1.msra.mxu0 0.0
    %3460 = vmatprep.subr.mxu0 0.0
    %3461 = vmatpush1.msra.mxu0 0.0
    %3462 = vmatprep.subr.mxu0 0.0
    %3463 = vmatpush1.msra.mxu0 0.0
    %3464 = vmatprep.subr.mxu0 0.0
    %3465 = vmatpush1.msra.mxu0 0.0
    %3466 = vmatprep.subr.mxu0 0.0
    %3467 = vmatpush1.msra.mxu0 0.0
    %3468 = vmatprep.subr.mxu0 0.0
    %3469 = vmatpush1.msra.mxu0 0.0
    %3470 = vmatprep.subr.mxu0 0.0
    %3471 = vmatpush1.msra.mxu0 0.0
    %3472 = vmatprep.subr.mxu0 0.0
    %3473 = vmatpush1.msra.mxu0 0.0
    %3474 = vmatprep.subr.mxu0 0.0
    %3475 = vmatpush1.msra.mxu0 0.0
    %3476 = vmatprep.subr.mxu0 0.0
    %3477 = vmatpush1.msra.mxu0 0.0
    %3478 = vmatprep.subr.mxu0 0.0
    %3479 = vmatpush1.msra.mxu0 0.0
    %3480 = vmatprep.subr.mxu0 0.0
    %3481 = vmatpush1.msra.mxu0 0.0
    %3482 = vmatprep.subr.mxu0 0.0
    %3483 = vmatpush1.msra.mxu0 0.0
    %3484 = vmatprep.subr.mxu0 0.0
    %3485 = vmatpush1.msra.mxu0 0.0
    %3486 = vmatprep.subr.mxu0 0.0
    %3487 = vmatpush1.msra.mxu0 0.0
    %3488 = vmatprep.subr.mxu0 0.0
    %3489 = vmatpush1.msra.mxu0 0.0
    %3490 = vmatprep.mubr.f32.mxu0 0.0
    %3491 = vmatmul.mubr.f32.gmra.mrb[0].mxu0 %v3402
    %v3492 = vpop.f32.mrb[0].mxu0
    %v3493 = vadd.f32 %v3424, %v3492
    %v3494 = vpop.f32.mrb[0].mxu0
    %3495 = vdwg.mxu0
    %v3496 = vmul.f32 %v3493, 0.5
    %v3497 = vmul.f32 %v3493, %v3398
    %v3498 = verf.f32.pop %v3497
    %v3499 = vadd.f32 %v3498, 1.0
    %v3500 = vmul.f32 %v3496, %v3499
    %v3501 = vld [vmem:[%s13] sm:$0xff]
    %v3502 = vld [vmem:[%s13 + $0x8] sm:$0xff]
    %v3503 = vld [vmem:[%s13 + $0x10] sm:$0xff]
    %v3504 = vld [vmem:[%s13 + $0x18] sm:$0xff]
    %v3505 = vld [vmem:[%s13 + $0x20] sm:$0xff]
    %v3506 = vld [vmem:[%s13 + $0x28] sm:$0xff]
    %v3507 = vld [vmem:[%s13 + $0x30] sm:$0xff]
    %v3508 = vld [vmem:[%s13 + $0x38] sm:$0xff]
    %v3509 = vld [vmem:[%s13 + $0x40] sm:$0xff]
    %v3510 = vld [vmem:[%s13 + $0x48] sm:$0xff]
    %v3511 = vld [vmem:[%s13 + $0x50] sm:$0xff]
    %v3512 = vld [vmem:[%s13 + $0x58] sm:$0xff]
    %v3513 = vld [vmem:[%s13 + $0x60] sm:$0xff]
    %v3514 = vld [vmem:[%s13 + $0x68] sm:$0xff]
    %v3515 = vld [vmem:[%s13 + $0x70] sm:$0xff]
    %v3516 = vld [vmem:[%s13 + $0x78] sm:$0xff]
    %v3517 = vld [vmem:[%s14] sm:$0x1]
    %v3519 = vlaneseq
    %v3520 = vshrl.u32 %v3519, 7
    %v3521 = vsub.s32 0, %v3520
    %v3522 = vrot.slane %v3517, %v3521
    %3524 = vmatprep.subr.mxu0 0.0
    %3525 = vmatpush1.msra.mxu0 %v3501
    %3526 = vmatprep.subr.mxu0 0.0
    %3527 = vmatpush1.msra.mxu0 %v3502
    %3528 = vmatprep.subr.mxu0 0.0
    %3529 = vmatpush1.msra.mxu0 %v3503
    %3530 = vmatprep.subr.mxu0 0.0
    %3531 = vmatpush1.msra.mxu0 %v3504
    %3532 = vmatprep.subr.mxu0 0.0
    %3533 = vmatpush1.msra.mxu0 %v3505
    %3534 = vmatprep.subr.mxu0 0.0
    %3535 = vmatpush1.msra.mxu0 %v3506
    %3536 = vmatprep.subr.mxu0 0.0
    %3537 = vmatpush1.msra.mxu0 %v3507
    %3538 = vmatprep.subr.mxu0 0.0
    %3539 = vmatpush1.msra.mxu0 %v3508
    %3540 = vmatprep.subr.mxu0 0.0
    %3541 = vmatpush1.msra.mxu0 %v3509
    %3542 = vmatprep.subr.mxu0 0.0
    %3543 = vmatpush1.msra.mxu0 %v3510
    %3544 = vmatprep.subr.mxu0 0.0
    %3545 = vmatpush1.msra.mxu0 %v3511
    %3546 = vmatprep.subr.mxu0 0.0
    %3547 = vmatpush1.msra.mxu0 %v3512
    %3548 = vmatprep.subr.mxu0 0.0
    %3549 = vmatpush1.msra.mxu0 %v3513
    %3550 = vmatprep.subr.mxu0 0.0
    %3551 = vmatpush1.msra.mxu0 %v3514
    %3552 = vmatprep.subr.mxu0 0.0
    %3553 = vmatpush1.msra.mxu0 %v3515
    %3554 = vmatprep.subr.mxu0 0.0
    %3555 = vmatpush1.msra.mxu0 %v3516
    %3556 = vmatprep.subr.mxu0 0.0
    %3557 = vmatpush1.msra.mxu0 0.0
    %3558 = vmatprep.subr.mxu0 0.0
    %3559 = vmatpush1.msra.mxu0 0.0
    %3560 = vmatprep.subr.mxu0 0.0
    %3561 = vmatpush1.msra.mxu0 0.0
    %3562 = vmatprep.subr.mxu0 0.0
    %3563 = vmatpush1.msra.mxu0 0.0
    %3564 = vmatprep.subr.mxu0 0.0
    %3565 = vmatpush1.msra.mxu0 0.0
    %3566 = vmatprep.subr.mxu0 0.0
    %3567 = vmatpush1.msra.mxu0 0.0
    %3568 = vmatprep.subr.mxu0 0.0
    %3569 = vmatpush1.msra.mxu0 0.0
    %3570 = vmatprep.subr.mxu0 0.0
    %3571 = vmatpush1.msra.mxu0 0.0
    %3572 = vmatprep.subr.mxu0 0.0
    %3573 = vmatpush1.msra.mxu0 0.0
    %3574 = vmatprep.subr.mxu0 0.0
    %3575 = vmatpush1.msra.mxu0 0.0
    %3576 = vmatprep.subr.mxu0 0.0
    %3577 = vmatpush1.msra.mxu0 0.0
    %3578 = vmatprep.subr.mxu0 0.0
    %3579 = vmatpush1.msra.mxu0 0.0
    %3580 = vmatprep.subr.mxu0 0.0
    %3581 = vmatpush1.msra.mxu0 0.0
    %3582 = vmatprep.subr.mxu0 0.0
    %3583 = vmatpush1.msra.mxu0 0.0
    %3584 = vmatprep.subr.mxu0 0.0
    %3585 = vmatpush1.msra.mxu0 0.0
    %3586 = vmatprep.subr.mxu0 0.0
    %3587 = vmatpush1.msra.mxu0 0.0
    %3588 = vmatprep.mubr.f32.mxu0 0.0
    %3589 = vmatmul.mubr.f32.gmra.mrb[0].mxu0 %v3500
    %v3590 = vpop.f32.mrb[0].mxu0
    %v3591 = vadd.f32 %v3522, %v3590
    %v3592 = vpop.f32.mrb[0].mxu0
    %3593 = vdwg.mxu0
    %vm3594 = vcmask 74752
    %3595 = vst.msk [vmem:[#allocation7] sm:$0x3] %vm3594, %v3591
    // Predicated region
    $region69: #{resnet_block_dyn.1} parent=1 // pred_check
      _
    $region70: #{resnet_block_dyn.1} parent=1 // pred_check_branch
      %3597 = sbr.rel (0) target = $region72
    $region71: #{resnet_block_dyn.1} parent=1 // pred_region
      %s3599 = ssub.s32 32, 32
      %3600 = vsyncadd [#allocation8], %s3599
      %s3602 = sshll.u32 [#allocation7], 4
      %s3603 = int_to_ptr.vmem [resolvable:$true] %s3602
      %3605 = dma.vmem_to_hbm [thread:$0]  %s3603, 32, %s15, [#allocation8]
    $region72: #{resnet_block_dyn.1} parent=1 // pred_fallthru
      _
    // Predicated region
    $region73: #{resnet_block_dyn.1} parent=1 // pred_check
      _
    $region74: #{resnet_block_dyn.1} parent=1 // pred_check_branch
      %3607 = sbr.rel (0) target = $region76
    $region75: #{resnet_block_dyn.1} parent=1 // pred_region
      %3608 = dma.done [#allocation8], 32
    $region76: #{resnet_block_dyn.1} parent=1 // pred_fallthru
      _
    %3609 = vsyncpa [#allocation8], 1

</llo_original>
